<compile_context>
chip_gen: v6e
topology: v6e:2x2x1
jax: 0.10.0
libtpu: 0.0.40
codegen_flags: <defaults>
</compile_context>

<pallas_src>
import jax
import jax.numpy as jnp
import numpy as np
from jax.experimental import pallas as pl
from jax.experimental.pallas import tpu as pltpu

BN_EPS = 1e-5
LRELU_SLOPE = 0.2
LANE = 128


def _round_up(n, m):
    return (n + m - 1) // m * m


def vae_kernel(
    x_ref, eps_ref, w1_ref, w2_ref, wmv_ref, vec_ref,   # inputs (vec = packed vectors)
    wd1_hbm, wd2_hbm, wd3_hbm,                           # decoder weights, left in HBM
    mlz_out, rec_out,                                    # outputs
    wd1_buf, wd2_buf, wd3_buf, sem,                      # scratch: VMEM bufs + DMA sems
):
    B = x_ref.shape[0]
    xp = x_ref.shape[1]
    zp = eps_ref.shape[1]
    d1 = w1_ref.shape[1]
    d2 = w2_ref.shape[1]
    inv_b = 1.0 / B

    # ---- Kick off decoder weight DMAs; they overlap the encoder compute ----
    cp1 = pltpu.make_async_copy(wd1_hbm, wd1_buf, sem.at[0])
    cp2 = pltpu.make_async_copy(wd2_hbm, wd2_buf, sem.at[1])
    cp3 = pltpu.make_async_copy(wd3_hbm, wd3_buf, sem.at[2])
    cp1.start()
    cp2.start()
    cp3.start()

    # ---- Static slices of the packed vector slab (see pad_params layout) ----
    g1, be1 = vec_ref[0:1, :d1], vec_ref[1:2, :d1]
    gd2, bed2 = vec_ref[2:3, :d1], vec_ref[3:4, :d1]
    g2, gd1 = vec_ref[4:5, :d2], vec_ref[4:5, d2:2 * d2]
    be2, bed1 = vec_ref[5:6, :d2], vec_ref[5:6, d2:2 * d2]
    bmv = vec_ref[6:7, :2 * zp]
    bd3 = vec_ref[7:8, :xp]

    def mm(a, w):
        # bf16 MXU operands, f32 accumulation.
        return jnp.dot(a.astype(jnp.bfloat16), w, preferred_element_type=jnp.float32)

    def bn_lrelu(h, g, beta):
        # Single-pass batch stats: the two reductions are independent.
        s = jnp.sum(h, axis=0, keepdims=True)
        ss = jnp.sum(h * h, axis=0, keepdims=True)
        mu = s * inv_b
        var = ss * inv_b - mu * mu
        hn = (h - mu) * jax.lax.rsqrt(var + BN_EPS) * g + beta
        return jnp.where(hn > 0, hn, LRELU_SLOPE * hn)

    # ---- Encoder (pre-BN biases dropped: BN mean-subtraction cancels them) ----
    h = bn_lrelu(mm(x_ref[...], w1_ref[...]), g1, be1)          # [B, d1]
    h = bn_lrelu(mm(h, w2_ref[...]), g2, be2)                   # [B, d2]

    # ---- Fused mean | log_var head (one matmul) ----
    mv = mm(h, wmv_ref[...]) + bmv                              # [B, 2*zp]
    mean = mv[:, :zp]
    log_var = mv[:, zp:]

    # ---- Reparameterization: Normal(mean, exp(log_var)).rsample() ----
    z = mean + jnp.exp(log_var) * eps_ref[...]

    # ---- Decoder (weights arrive via the overlapped DMAs) ----
    cp1.wait()
    d = bn_lrelu(mm(z, wd1_buf[...]), gd1, bed1)                # [B, d2]
    cp2.wait()
    d = bn_lrelu(mm(d, wd2_buf[...]), gd2, bed2)                # [B, d1]
    cp3.wait()
    rec = mm(d, wd3_buf[...]) + bd3                             # [B, xp]

    # ---- Single lane-dense stores ----
    mlz_out[...] = jnp.concatenate([mean, log_var, z], axis=-1)
    rec_out[...] = rec


def make_params(input_dim, z_dim, key):
    """Deterministic synthetic parameters (logical, unpadded).

    Weights [in, out] in bfloat16; biases / gamma / beta in f32 (non-zero so the
    pre-BN bias cancellation is actually exercised by the test).
    """
    ks = list(jax.random.split(key, 32))
    it = iter(ks)

    def w(i, o, scale=0.05):
        return (scale * jax.random.normal(next(it), (i, o), jnp.float32)).astype(jnp.bfloat16)

    def v(o, scale=0.05, shift=0.0):
        return shift + scale * jax.random.normal(next(it), (o,), jnp.float32)

    p = {}
    # Encoder
    p["w1"], p["b1"], p["g1"], p["be1"] = w(input_dim, 1000), v(1000), v(1000, shift=1.0), v(1000)
    p["w2"], p["b2"], p["g2"], p["be2"] = w(1000, 100), v(100), v(100, shift=1.0), v(100)
    p["wm"], p["bm"] = w(100, z_dim), v(z_dim)
    p["wv"], p["bv"] = w(100, z_dim), v(z_dim)
    # Decoder
    p["wd1"], p["bd1"], p["gd1"], p["bed1"] = w(z_dim, 100), v(100), v(100, shift=1.0), v(100)
    p["wd2"], p["bd2"], p["gd2"], p["bed2"] = w(100, 1000), v(1000), v(1000, shift=1.0), v(1000)
    p["wd3"], p["bd3"] = w(1000, input_dim), v(input_dim)
    return p


def pad_params(p, input_dim, z_dim):
    """Pad feature dims to 128-lane multiples, fuse wm|wv, pack small vectors.

    Zero-padded weight rows/cols + zero-padded gamma/beta keep padded lanes
    numerically inert through Linear + BatchNorm + LeakyReLU.
    Vector-slab layout ([8, W] f32, W = max(d1, 2*d2, 2*zp, xp)):
      row 0: g1   row 1: be1   row 2: gd2   row 3: bed2
      row 4: g2 | gd1 (offset d2)       row 5: be2 | bed1 (offset d2)
      row 6: bmv (mean bias | log_var bias at offset zp)
      row 7: bd3
    Pre-BN biases b1/b2/bd1/bd2 are intentionally omitted (cancelled by BN).
    """
    xp = _round_up(input_dim, LANE)
    zp = _round_up(z_dim, LANE)
    d1 = _round_up(1000, LANE)   # 1024
    d2 = _round_up(100, LANE)    # 128
    W = max(d1, 2 * d2, 2 * zp, xp)

    def pw(w, r, c):   # pad [in, out] bf16 weight
        return jnp.pad(w, ((0, r - w.shape[0]), (0, c - w.shape[1])))

    q = {}
    q["w1"] = pw(p["w1"], xp, d1)
    q["w2"] = pw(p["w2"], d1, d2)

    wmv = jnp.zeros((d2, 2 * zp), jnp.bfloat16)
    wmv = wmv.at[:p["wm"].shape[0], :z_dim].set(p["wm"])
    wmv = wmv.at[:p["wv"].shape[0], zp:zp + z_dim].set(p["wv"])
    q["wmv"] = wmv

    q["wd1"] = pw(p["wd1"], zp, d2)
    q["wd2"] = pw(p["wd2"], d2, d1)
    q["wd3"] = pw(p["wd3"], d1, xp)

    vec = np.zeros((8, W), np.float32)
    vec[0, :1000] = np.asarray(p["g1"], np.float32)
    vec[1, :1000] = np.asarray(p["be1"], np.float32)
    vec[2, :1000] = np.asarray(p["gd2"], np.float32)
    vec[3, :1000] = np.asarray(p["bed2"], np.float32)
    vec[4, :100] = np.asarray(p["g2"], np.float32)
    vec[4, d2:d2 + 100] = np.asarray(p["gd1"], np.float32)
    vec[5, :100] = np.asarray(p["be2"], np.float32)
    vec[5, d2:d2 + 100] = np.asarray(p["bed1"], np.float32)
    vec[6, :z_dim] = np.asarray(p["bm"], np.float32)
    vec[6, zp:zp + z_dim] = np.asarray(p["bv"], np.float32)
    vec[7, :input_dim] = np.asarray(p["bd3"], np.float32)
    q["vec"] = jnp.asarray(vec)
    return q


@jax.jit
def vae_forward(x, eps, padded_params):
    """x: [B, input_dim] f32, eps: [B, z_dim] f32, padded_params from pad_params."""
    B, input_dim = x.shape
    z_dim = eps.shape[1]
    xp = _round_up(input_dim, LANE)
    zp = _round_up(z_dim, LANE)

    pp = padded_params
    d1 = pp["w1"].shape[1]
    d2 = pp["w2"].shape[1]

    x_p = jnp.pad(x, ((0, 0), (0, xp - input_dim)))
    eps_p = jnp.pad(eps, ((0, 0), (0, zp - z_dim)))

    vmem = pl.BlockSpec(memory_space=pltpu.MemorySpace.VMEM)
    hbm = pl.BlockSpec(memory_space=pl.ANY)   # decoder weights: DMA'd inside kernel

    # Single grid point: full-batch BN statistics must see the whole batch, and
    # the whole working set (~2 MB) fits in VMEM on every generation (v7x's
    # 64 MiB included).  Megacore / B-tiling would change BN semantics, so it is
    # deliberately not used for a single batch.
    mlz, rec = pl.pallas_call(
        vae_kernel,
        out_shape=(
            jax.ShapeDtypeStruct((B, 3 * zp), jnp.float32),   # packed mean | log_var | z
            jax.ShapeDtypeStruct((B, xp), jnp.float32),       # reconstruction (padded)
        ),
        in_specs=[vmem, vmem, vmem, vmem, vmem, vmem, hbm, hbm, hbm],
        out_specs=(vmem, vmem),
        scratch_shapes=[
            pltpu.VMEM((zp, d2), jnp.bfloat16),   # wd1 buffer
            pltpu.VMEM((d2, d1), jnp.bfloat16),   # wd2 buffer
            pltpu.VMEM((d1, xp), jnp.bfloat16),   # wd3 buffer
            pltpu.SemaphoreType.DMA((3,)),
        ],
    )(x_p, eps_p, pp["w1"], pp["w2"], pp["wmv"], pp["vec"],
      pp["wd1"], pp["wd2"], pp["wd3"])

    mean = mlz[:, :z_dim]
    log_var = mlz[:, zp:zp + z_dim]
    z = mlz[:, 2 * zp:2 * zp + z_dim]
    return mean, log_var, z, rec[:, :input_dim]


def vae_forward_ref(x, eps, params):
    """Pure-JAX reference with identical (mixed bf16/f32) precision semantics.

    Keeps the pre-BN biases and two-pass BN statistics; the kernel's dropped
    biases / single-pass variance are mathematically equivalent.
    """
    def lin(h, w, b):
        return jnp.dot(h.astype(jnp.bfloat16), params[w],
                       preferred_element_type=jnp.float32) + params[b]

    def bn_lrelu(h, g, be):
        mu = jnp.mean(h, axis=0, keepdims=True)
        var = jnp.mean((h - mu) ** 2, axis=0, keepdims=True)
        hn = (h - mu) * jax.lax.rsqrt(var + BN_EPS) * params[g] + params[be]
        return jnp.where(hn > 0, hn, LRELU_SLOPE * hn)

    h = bn_lrelu(lin(x, "w1", "b1"), "g1", "be1")
    h = bn_lrelu(lin(h, "w2", "b2"), "g2", "be2")
    mean = lin(h, "wm", "bm")
    log_var = lin(h, "wv", "bv")
    z = mean + jnp.exp(log_var) * eps
    d = bn_lrelu(lin(z, "wd1", "bd1"), "gd1", "bed1")
    d = bn_lrelu(lin(d, "wd2", "bd2"), "gd2", "bed2")
    rec = lin(d, "wd3", "bd3")
    return mean, log_var, z, rec


if __name__ == "__main__":
    B, INPUT_DIM, Z_DIM = 8, 64, 8

    key = jax.random.PRNGKey(0)
    kx, keps, kp = jax.random.split(key, 3)

    x = jax.random.normal(kx, (B, INPUT_DIM), dtype=jnp.float32)
    eps = jax.random.normal(keps, (B, Z_DIM), dtype=jnp.float32)  # rsample noise
    params = make_params(INPUT_DIM, Z_DIM, kp)
    padded_params = pad_params(params, INPUT_DIM, Z_DIM)

    mean, log_var, z, rec = vae_forward(x, eps, padded_params)
    jax.block_until_ready(rec)

    # Check against the pure-JAX reference.
    r_mean, r_logvar, r_z, r_rec = vae_forward_ref(x, eps, params)
    for got, want in [(mean, r_mean), (log_var, r_logvar), (z, r_z), (rec, r_rec)]:
        np.testing.assert_allclose(np.asarray(got), np.asarray(want), rtol=2e-3, atol=2e-3)

    print("KERNEL_OK")
</pallas_src>

<mosaic_0001>
module attributes {stable_mosaic.version = 11 : i64} {
  func.func @vae_kernel(%arg0: memref<8x128xf32, #tpu.memory_space<vmem>>, %arg1: memref<8x128xf32, #tpu.memory_space<vmem>>, %arg2: memref<128x1024xbf16, #tpu.memory_space<vmem>>, %arg3: memref<1024x128xbf16, #tpu.memory_space<vmem>>, %arg4: memref<128x256xbf16, #tpu.memory_space<vmem>>, %arg5: memref<8x1024xf32, #tpu.memory_space<vmem>>, %arg6: memref<128x128xbf16, #tpu.memory_space<any>>, %arg7: memref<128x1024xbf16, #tpu.memory_space<any>>, %arg8: memref<1024x128xbf16, #tpu.memory_space<any>>, %arg9: memref<8x384xf32, #tpu.memory_space<vmem>>, %arg10: memref<8x128xf32, #tpu.memory_space<vmem>>, %arg11: memref<128x128xbf16, #tpu.memory_space<vmem>>, %arg12: memref<128x1024xbf16, #tpu.memory_space<vmem>>, %arg13: memref<1024x128xbf16, #tpu.memory_space<vmem>>, %arg14: memref<3x!tpu.dma_semaphore, #tpu.memory_space<semaphore_mem>>) attributes {dimension_semantics = [], scalar_prefetch = 0 : i64, scratch_operands = 4 : i64, tpu.core_type = #tpu.core_type<tc>} {
    %c0_i32 = arith.constant 0 : i32
    %0 = tpu.memref_slice %arg14[%c0_i32] : memref<3x!tpu.dma_semaphore, #tpu.memory_space<semaphore_mem>> -> memref<1x!tpu.dma_semaphore, #tpu.memory_space<semaphore_mem>>
    %1 = tpu.memref_squeeze %0 : memref<1x!tpu.dma_semaphore, #tpu.memory_space<semaphore_mem>> -> memref<!tpu.dma_semaphore, #tpu.memory_space<semaphore_mem>>
    tpu.enqueue_dma source(%arg6 : memref<128x128xbf16, #tpu.memory_space<any>>) target(%arg11 : memref<128x128xbf16, #tpu.memory_space<vmem>>) target_semaphore(%1 : memref<!tpu.dma_semaphore, #tpu.memory_space<semaphore_mem>>)
    %c1_i32 = arith.constant 1 : i32
    %2 = tpu.memref_slice %arg14[%c1_i32] : memref<3x!tpu.dma_semaphore, #tpu.memory_space<semaphore_mem>> -> memref<1x!tpu.dma_semaphore, #tpu.memory_space<semaphore_mem>>
    %3 = tpu.memref_squeeze %2 : memref<1x!tpu.dma_semaphore, #tpu.memory_space<semaphore_mem>> -> memref<!tpu.dma_semaphore, #tpu.memory_space<semaphore_mem>>
    tpu.enqueue_dma source(%arg7 : memref<128x1024xbf16, #tpu.memory_space<any>>) target(%arg12 : memref<128x1024xbf16, #tpu.memory_space<vmem>>) target_semaphore(%3 : memref<!tpu.dma_semaphore, #tpu.memory_space<semaphore_mem>>)
    %c2_i32 = arith.constant 2 : i32
    %4 = tpu.memref_slice %arg14[%c2_i32] : memref<3x!tpu.dma_semaphore, #tpu.memory_space<semaphore_mem>> -> memref<1x!tpu.dma_semaphore, #tpu.memory_space<semaphore_mem>>
    %5 = tpu.memref_squeeze %4 : memref<1x!tpu.dma_semaphore, #tpu.memory_space<semaphore_mem>> -> memref<!tpu.dma_semaphore, #tpu.memory_space<semaphore_mem>>
    tpu.enqueue_dma source(%arg8 : memref<1024x128xbf16, #tpu.memory_space<any>>) target(%arg13 : memref<1024x128xbf16, #tpu.memory_space<vmem>>) target_semaphore(%5 : memref<!tpu.dma_semaphore, #tpu.memory_space<semaphore_mem>>)
    %c0 = arith.constant 0 : index
    %c0_0 = arith.constant 0 : index
    %6 = vector.load %arg5[%c0, %c0_0] : memref<8x1024xf32, #tpu.memory_space<vmem>>, vector<1x1024xf32>
    %c1 = arith.constant 1 : index
    %c0_1 = arith.constant 0 : index
    %7 = vector.load %arg5[%c1, %c0_1] : memref<8x1024xf32, #tpu.memory_space<vmem>>, vector<1x1024xf32>
    %c2 = arith.constant 2 : index
    %c0_2 = arith.constant 0 : index
    %8 = vector.load %arg5[%c2, %c0_2] : memref<8x1024xf32, #tpu.memory_space<vmem>>, vector<1x1024xf32>
    %c3 = arith.constant 3 : index
    %c0_3 = arith.constant 0 : index
    %9 = vector.load %arg5[%c3, %c0_3] : memref<8x1024xf32, #tpu.memory_space<vmem>>, vector<1x1024xf32>
    %c4 = arith.constant 4 : index
    %c0_4 = arith.constant 0 : index
    %10 = vector.load %arg5[%c4, %c0_4] : memref<8x1024xf32, #tpu.memory_space<vmem>>, vector<1x128xf32>
    %c4_5 = arith.constant 4 : index
    %c128 = arith.constant 128 : index
    %11 = vector.load %arg5[%c4_5, %c128] : memref<8x1024xf32, #tpu.memory_space<vmem>>, vector<1x128xf32>
    %c5 = arith.constant 5 : index
    %c0_6 = arith.constant 0 : index
    %12 = vector.load %arg5[%c5, %c0_6] : memref<8x1024xf32, #tpu.memory_space<vmem>>, vector<1x128xf32>
    %c5_7 = arith.constant 5 : index
    %c128_8 = arith.constant 128 : index
    %13 = vector.load %arg5[%c5_7, %c128_8] : memref<8x1024xf32, #tpu.memory_space<vmem>>, vector<1x128xf32>
    %c6 = arith.constant 6 : index
    %c0_9 = arith.constant 0 : index
    %14 = vector.load %arg5[%c6, %c0_9] : memref<8x1024xf32, #tpu.memory_space<vmem>>, vector<1x256xf32>
    %c7 = arith.constant 7 : index
    %c0_10 = arith.constant 0 : index
    %15 = vector.load %arg5[%c7, %c0_10] : memref<8x1024xf32, #tpu.memory_space<vmem>>, vector<1x128xf32>
    %c0_11 = arith.constant 0 : index
    %c0_12 = arith.constant 0 : index
    %16 = vector.load %arg0[%c0_11, %c0_12] : memref<8x128xf32, #tpu.memory_space<vmem>>, vector<8x128xf32>
    %c0_13 = arith.constant 0 : index
    %c0_14 = arith.constant 0 : index
    %17 = vector.load %arg2[%c0_13, %c0_14] : memref<128x1024xbf16, #tpu.memory_space<vmem>>, vector<128x1024xbf16>
    %18 = arith.truncf %16 : vector<8x128xf32> to vector<8x128xbf16>
    %cst = arith.constant dense<0.000000e+00> : vector<8x1024xf32>
    %19 = tpu.matmul %18, %17, %cst {dimension_numbers = #tpu.dot_dimension_numbers<[1], [0], [0], [1], [0, 0, 1, 1], [], []>} : vector<8x128xbf16>, vector<128x1024xbf16>, vector<8x1024xf32> -> vector<8x1024xf32>
    %cst_15 = arith.constant dense<0.000000e+00> : vector<1024xf32>
    %20 = vector.multi_reduction <add>, %19, %cst_15 [0] : vector<8x1024xf32> to vector<1024xf32>
    %21 = vector.shape_cast %20 : vector<1024xf32> to vector<1x1024xf32>
    %22 = arith.mulf %19, %19 : vector<8x1024xf32>
    %cst_16 = arith.constant dense<0.000000e+00> : vector<1024xf32>
    %23 = vector.multi_reduction <add>, %22, %cst_16 [0] : vector<8x1024xf32> to vector<1024xf32>
    %24 = vector.shape_cast %23 : vector<1024xf32> to vector<1x1024xf32>
    %cst_17 = arith.constant 1.250000e-01 : f32
    %25 = vector.broadcast %cst_17 : f32 to vector<1x1024xf32>
    %26 = arith.mulf %21, %25 : vector<1x1024xf32>
    %cst_18 = arith.constant 1.250000e-01 : f32
    %27 = vector.broadcast %cst_18 : f32 to vector<1x1024xf32>
    %28 = arith.mulf %24, %27 : vector<1x1024xf32>
    %29 = arith.mulf %26, %26 : vector<1x1024xf32>
    %30 = arith.subf %28, %29 : vector<1x1024xf32>
    %31 = vector.broadcast %26 : vector<1x1024xf32> to vector<8x1024xf32>
    %32 = arith.subf %19, %31 : vector<8x1024xf32>
    %cst_19 = arith.constant 9.99999974E-6 : f32
    %33 = vector.broadcast %cst_19 : f32 to vector<1x1024xf32>
    %34 = arith.addf %30, %33 : vector<1x1024xf32>
    %35 = math.rsqrt %34 : vector<1x1024xf32>
    %36 = vector.broadcast %35 : vector<1x1024xf32> to vector<8x1024xf32>
    %37 = arith.mulf %32, %36 : vector<8x1024xf32>
    %38 = vector.broadcast %6 : vector<1x1024xf32> to vector<8x1024xf32>
    %39 = arith.mulf %37, %38 : vector<8x1024xf32>
    %40 = vector.broadcast %7 : vector<1x1024xf32> to vector<8x1024xf32>
    %41 = arith.addf %39, %40 : vector<8x1024xf32>
    %cst_20 = arith.constant 0.000000e+00 : f32
    %42 = vector.broadcast %cst_20 : f32 to vector<8x1024xf32>
    %43 = arith.cmpf ogt, %41, %42 : vector<8x1024xf32>
    %cst_21 = arith.constant 2.000000e-01 : f32
    %44 = vector.broadcast %cst_21 : f32 to vector<8x1024xf32>
    %45 = arith.mulf %44, %41 : vector<8x1024xf32>
    %46 = arith.select %43, %41, %45 : vector<8x1024xi1>, vector<8x1024xf32>
    %c0_22 = arith.constant 0 : index
    %c0_23 = arith.constant 0 : index
    %47 = vector.load %arg3[%c0_22, %c0_23] : memref<1024x128xbf16, #tpu.memory_space<vmem>>, vector<1024x128xbf16>
    %48 = arith.truncf %46 : vector<8x1024xf32> to vector<8x1024xbf16>
    %cst_24 = arith.constant dense<0.000000e+00> : vector<8x128xf32>
    %49 = tpu.matmul %48, %47, %cst_24 {dimension_numbers = #tpu.dot_dimension_numbers<[1], [0], [0], [1], [0, 0, 1, 1], [], []>} : vector<8x1024xbf16>, vector<1024x128xbf16>, vector<8x128xf32> -> vector<8x128xf32>
    %cst_25 = arith.constant dense<0.000000e+00> : vector<128xf32>
    %50 = vector.multi_reduction <add>, %49, %cst_25 [0] : vector<8x128xf32> to vector<128xf32>
    %51 = vector.shape_cast %50 : vector<128xf32> to vector<1x128xf32>
    %52 = arith.mulf %49, %49 : vector<8x128xf32>
    %cst_26 = arith.constant dense<0.000000e+00> : vector<128xf32>
    %53 = vector.multi_reduction <add>, %52, %cst_26 [0] : vector<8x128xf32> to vector<128xf32>
    %54 = vector.shape_cast %53 : vector<128xf32> to vector<1x128xf32>
    %cst_27 = arith.constant 1.250000e-01 : f32
    %55 = vector.broadcast %cst_27 : f32 to vector<1x128xf32>
    %56 = arith.mulf %51, %55 : vector<1x128xf32>
    %cst_28 = arith.constant 1.250000e-01 : f32
    %57 = vector.broadcast %cst_28 : f32 to vector<1x128xf32>
    %58 = arith.mulf %54, %57 : vector<1x128xf32>
    %59 = arith.mulf %56, %56 : vector<1x128xf32>
    %60 = arith.subf %58, %59 : vector<1x128xf32>
    %61 = vector.broadcast %56 : vector<1x128xf32> to vector<8x128xf32>
    %62 = arith.subf %49, %61 : vector<8x128xf32>
    %cst_29 = arith.constant 9.99999974E-6 : f32
    %63 = vector.broadcast %cst_29 : f32 to vector<1x128xf32>
    %64 = arith.addf %60, %63 : vector<1x128xf32>
    %65 = math.rsqrt %64 : vector<1x128xf32>
    %66 = vector.broadcast %65 : vector<1x128xf32> to vector<8x128xf32>
    %67 = arith.mulf %62, %66 : vector<8x128xf32>
    %68 = vector.broadcast %10 : vector<1x128xf32> to vector<8x128xf32>
    %69 = arith.mulf %67, %68 : vector<8x128xf32>
    %70 = vector.broadcast %12 : vector<1x128xf32> to vector<8x128xf32>
    %71 = arith.addf %69, %70 : vector<8x128xf32>
    %cst_30 = arith.constant 0.000000e+00 : f32
    %72 = vector.broadcast %cst_30 : f32 to vector<8x128xf32>
    %73 = arith.cmpf ogt, %71, %72 : vector<8x128xf32>
    %cst_31 = arith.constant 2.000000e-01 : f32
    %74 = vector.broadcast %cst_31 : f32 to vector<8x128xf32>
    %75 = arith.mulf %74, %71 : vector<8x128xf32>
    %76 = arith.select %73, %71, %75 : vector<8x128xi1>, vector<8x128xf32>
    %c0_32 = arith.constant 0 : index
    %c0_33 = arith.constant 0 : index
    %77 = vector.load %arg4[%c0_32, %c0_33] : memref<128x256xbf16, #tpu.memory_space<vmem>>, vector<128x256xbf16>
    %78 = arith.truncf %76 : vector<8x128xf32> to vector<8x128xbf16>
    %cst_34 = arith.constant dense<0.000000e+00> : vector<8x256xf32>
    %79 = tpu.matmul %78, %77, %cst_34 {dimension_numbers = #tpu.dot_dimension_numbers<[1], [0], [0], [1], [0, 0, 1, 1], [], []>} : vector<8x128xbf16>, vector<128x256xbf16>, vector<8x256xf32> -> vector<8x256xf32>
    %80 = vector.broadcast %14 : vector<1x256xf32> to vector<8x256xf32>
    %81 = arith.addf %79, %80 : vector<8x256xf32>
    %82 = vector.extract_strided_slice %81 {offsets = [0, 0], sizes = [8, 128], strides = [1, 1]} : vector<8x256xf32> to vector<8x128xf32>
    %83 = vector.extract_strided_slice %81 {offsets = [0, 128], sizes = [8, 128], strides = [1, 1]} : vector<8x256xf32> to vector<8x128xf32>
    %84 = math.exp %83 : vector<8x128xf32>
    %c0_35 = arith.constant 0 : index
    %c0_36 = arith.constant 0 : index
    %85 = vector.load %arg1[%c0_35, %c0_36] : memref<8x128xf32, #tpu.memory_space<vmem>>, vector<8x128xf32>
    %86 = arith.mulf %84, %85 : vector<8x128xf32>
    %87 = arith.addf %82, %86 : vector<8x128xf32>
    %c0_i32_37 = arith.constant 0 : i32
    %88 = tpu.memref_slice %arg14[%c0_i32_37] : memref<3x!tpu.dma_semaphore, #tpu.memory_space<semaphore_mem>> -> memref<1x!tpu.dma_semaphore, #tpu.memory_space<semaphore_mem>>
    %89 = tpu.memref_squeeze %88 : memref<1x!tpu.dma_semaphore, #tpu.memory_space<semaphore_mem>> -> memref<!tpu.dma_semaphore, #tpu.memory_space<semaphore_mem>>
    tpu.wait_dma2 semaphore(%89 : memref<!tpu.dma_semaphore, #tpu.memory_space<semaphore_mem>>) src(%arg6 : memref<128x128xbf16, #tpu.memory_space<any>>) dst(%arg11 : memref<128x128xbf16, #tpu.memory_space<vmem>>)
    %c0_38 = arith.constant 0 : index
    %c0_39 = arith.constant 0 : index
    %90 = vector.load %arg11[%c0_38, %c0_39] : memref<128x128xbf16, #tpu.memory_space<vmem>>, vector<128x128xbf16>
    %91 = arith.truncf %87 : vector<8x128xf32> to vector<8x128xbf16>
    %cst_40 = arith.constant dense<0.000000e+00> : vector<8x128xf32>
    %92 = tpu.matmul %91, %90, %cst_40 {dimension_numbers = #tpu.dot_dimension_numbers<[1], [0], [0], [1], [0, 0, 1, 1], [], []>} : vector<8x128xbf16>, vector<128x128xbf16>, vector<8x128xf32> -> vector<8x128xf32>
    %cst_41 = arith.constant dense<0.000000e+00> : vector<128xf32>
    %93 = vector.multi_reduction <add>, %92, %cst_41 [0] : vector<8x128xf32> to vector<128xf32>
    %94 = vector.shape_cast %93 : vector<128xf32> to vector<1x128xf32>
    %95 = arith.mulf %92, %92 : vector<8x128xf32>
    %cst_42 = arith.constant dense<0.000000e+00> : vector<128xf32>
    %96 = vector.multi_reduction <add>, %95, %cst_42 [0] : vector<8x128xf32> to vector<128xf32>
    %97 = vector.shape_cast %96 : vector<128xf32> to vector<1x128xf32>
    %cst_43 = arith.constant 1.250000e-01 : f32
    %98 = vector.broadcast %cst_43 : f32 to vector<1x128xf32>
    %99 = arith.mulf %94, %98 : vector<1x128xf32>
    %cst_44 = arith.constant 1.250000e-01 : f32
    %100 = vector.broadcast %cst_44 : f32 to vector<1x128xf32>
    %101 = arith.mulf %97, %100 : vector<1x128xf32>
    %102 = arith.mulf %99, %99 : vector<1x128xf32>
    %103 = arith.subf %101, %102 : vector<1x128xf32>
    %104 = vector.broadcast %99 : vector<1x128xf32> to vector<8x128xf32>
    %105 = arith.subf %92, %104 : vector<8x128xf32>
    %cst_45 = arith.constant 9.99999974E-6 : f32
    %106 = vector.broadcast %cst_45 : f32 to vector<1x128xf32>
    %107 = arith.addf %103, %106 : vector<1x128xf32>
    %108 = math.rsqrt %107 : vector<1x128xf32>
    %109 = vector.broadcast %108 : vector<1x128xf32> to vector<8x128xf32>
    %110 = arith.mulf %105, %109 : vector<8x128xf32>
    %111 = vector.broadcast %11 : vector<1x128xf32> to vector<8x128xf32>
    %112 = arith.mulf %110, %111 : vector<8x128xf32>
    %113 = vector.broadcast %13 : vector<1x128xf32> to vector<8x128xf32>
    %114 = arith.addf %112, %113 : vector<8x128xf32>
    %cst_46 = arith.constant 0.000000e+00 : f32
    %115 = vector.broadcast %cst_46 : f32 to vector<8x128xf32>
    %116 = arith.cmpf ogt, %114, %115 : vector<8x128xf32>
    %cst_47 = arith.constant 2.000000e-01 : f32
    %117 = vector.broadcast %cst_47 : f32 to vector<8x128xf32>
    %118 = arith.mulf %117, %114 : vector<8x128xf32>
    %119 = arith.select %116, %114, %118 : vector<8x128xi1>, vector<8x128xf32>
    %c1_i32_48 = arith.constant 1 : i32
    %120 = tpu.memref_slice %arg14[%c1_i32_48] : memref<3x!tpu.dma_semaphore, #tpu.memory_space<semaphore_mem>> -> memref<1x!tpu.dma_semaphore, #tpu.memory_space<semaphore_mem>>
    %121 = tpu.memref_squeeze %120 : memref<1x!tpu.dma_semaphore, #tpu.memory_space<semaphore_mem>> -> memref<!tpu.dma_semaphore, #tpu.memory_space<semaphore_mem>>
    tpu.wait_dma2 semaphore(%121 : memref<!tpu.dma_semaphore, #tpu.memory_space<semaphore_mem>>) src(%arg7 : memref<128x1024xbf16, #tpu.memory_space<any>>) dst(%arg12 : memref<128x1024xbf16, #tpu.memory_space<vmem>>)
    %c0_49 = arith.constant 0 : index
    %c0_50 = arith.constant 0 : index
    %122 = vector.load %arg12[%c0_49, %c0_50] : memref<128x1024xbf16, #tpu.memory_space<vmem>>, vector<128x1024xbf16>
    %123 = arith.truncf %119 : vector<8x128xf32> to vector<8x128xbf16>
    %cst_51 = arith.constant dense<0.000000e+00> : vector<8x1024xf32>
    %124 = tpu.matmul %123, %122, %cst_51 {dimension_numbers = #tpu.dot_dimension_numbers<[1], [0], [0], [1], [0, 0, 1, 1], [], []>} : vector<8x128xbf16>, vector<128x1024xbf16>, vector<8x1024xf32> -> vector<8x1024xf32>
    %cst_52 = arith.constant dense<0.000000e+00> : vector<1024xf32>
    %125 = vector.multi_reduction <add>, %124, %cst_52 [0] : vector<8x1024xf32> to vector<1024xf32>
    %126 = vector.shape_cast %125 : vector<1024xf32> to vector<1x1024xf32>
    %127 = arith.mulf %124, %124 : vector<8x1024xf32>
    %cst_53 = arith.constant dense<0.000000e+00> : vector<1024xf32>
    %128 = vector.multi_reduction <add>, %127, %cst_53 [0] : vector<8x1024xf32> to vector<1024xf32>
    %129 = vector.shape_cast %128 : vector<1024xf32> to vector<1x1024xf32>
    %cst_54 = arith.constant 1.250000e-01 : f32
    %130 = vector.broadcast %cst_54 : f32 to vector<1x1024xf32>
    %131 = arith.mulf %126, %130 : vector<1x1024xf32>
    %cst_55 = arith.constant 1.250000e-01 : f32
    %132 = vector.broadcast %cst_55 : f32 to vector<1x1024xf32>
    %133 = arith.mulf %129, %132 : vector<1x1024xf32>
    %134 = arith.mulf %131, %131 : vector<1x1024xf32>
    %135 = arith.subf %133, %134 : vector<1x1024xf32>
    %136 = vector.broadcast %131 : vector<1x1024xf32> to vector<8x1024xf32>
    %137 = arith.subf %124, %136 : vector<8x1024xf32>
    %cst_56 = arith.constant 9.99999974E-6 : f32
    %138 = vector.broadcast %cst_56 : f32 to vector<1x1024xf32>
    %139 = arith.addf %135, %138 : vector<1x1024xf32>
    %140 = math.rsqrt %139 : vector<1x1024xf32>
    %141 = vector.broadcast %140 : vector<1x1024xf32> to vector<8x1024xf32>
    %142 = arith.mulf %137, %141 : vector<8x1024xf32>
    %143 = vector.broadcast %8 : vector<1x1024xf32> to vector<8x1024xf32>
    %144 = arith.mulf %142, %143 : vector<8x1024xf32>
    %145 = vector.broadcast %9 : vector<1x1024xf32> to vector<8x1024xf32>
    %146 = arith.addf %144, %145 : vector<8x1024xf32>
    %cst_57 = arith.constant 0.000000e+00 : f32
    %147 = vector.broadcast %cst_57 : f32 to vector<8x1024xf32>
    %148 = arith.cmpf ogt, %146, %147 : vector<8x1024xf32>
    %cst_58 = arith.constant 2.000000e-01 : f32
    %149 = vector.broadcast %cst_58 : f32 to vector<8x1024xf32>
    %150 = arith.mulf %149, %146 : vector<8x1024xf32>
    %151 = arith.select %148, %146, %150 : vector<8x1024xi1>, vector<8x1024xf32>
    %c2_i32_59 = arith.constant 2 : i32
    %152 = tpu.memref_slice %arg14[%c2_i32_59] : memref<3x!tpu.dma_semaphore, #tpu.memory_space<semaphore_mem>> -> memref<1x!tpu.dma_semaphore, #tpu.memory_space<semaphore_mem>>
    %153 = tpu.memref_squeeze %152 : memref<1x!tpu.dma_semaphore, #tpu.memory_space<semaphore_mem>> -> memref<!tpu.dma_semaphore, #tpu.memory_space<semaphore_mem>>
    tpu.wait_dma2 semaphore(%153 : memref<!tpu.dma_semaphore, #tpu.memory_space<semaphore_mem>>) src(%arg8 : memref<1024x128xbf16, #tpu.memory_space<any>>) dst(%arg13 : memref<1024x128xbf16, #tpu.memory_space<vmem>>)
    %c0_60 = arith.constant 0 : index
    %c0_61 = arith.constant 0 : index
    %154 = vector.load %arg13[%c0_60, %c0_61] : memref<1024x128xbf16, #tpu.memory_space<vmem>>, vector<1024x128xbf16>
    %155 = arith.truncf %151 : vector<8x1024xf32> to vector<8x1024xbf16>
    %cst_62 = arith.constant dense<0.000000e+00> : vector<8x128xf32>
    %156 = tpu.matmul %155, %154, %cst_62 {dimension_numbers = #tpu.dot_dimension_numbers<[1], [0], [0], [1], [0, 0, 1, 1], [], []>} : vector<8x1024xbf16>, vector<1024x128xbf16>, vector<8x128xf32> -> vector<8x128xf32>
    %157 = vector.broadcast %15 : vector<1x128xf32> to vector<8x128xf32>
    %158 = arith.addf %156, %157 : vector<8x128xf32>
    %159 = tpu.concatenate %82, %83, %87 in 1 : vector<8x128xf32>, vector<8x128xf32>, vector<8x128xf32> -> vector<8x384xf32>
    %c0_63 = arith.constant 0 : index
    %c0_64 = arith.constant 0 : index
    %160 = vector.load %arg9[%c0_63, %c0_64] : memref<8x384xf32, #tpu.memory_space<vmem>>, vector<8x384xf32>
    tpu.vector_store %arg9[%c0_63, %c0_64], %159 {strides = array<i32>} : memref<8x384xf32, #tpu.memory_space<vmem>>, vector<8x384xf32>,
    %c0_65 = arith.constant 0 : index
    %c0_66 = arith.constant 0 : index
    %161 = vector.load %arg10[%c0_65, %c0_66] : memref<8x128xf32, #tpu.memory_space<vmem>>, vector<8x128xf32>
    tpu.vector_store %arg10[%c0_65, %c0_66], %158 {strides = array<i32>} : memref<8x128xf32, #tpu.memory_space<vmem>>, vector<8x128xf32>,
    return
  }
}

</mosaic_0001>

<llo_original>
// kernel: vae_forward.1
$region0: #{vae_forward.1}
  #allocation0 [shape = 'u32[]', space=smem, size = 0x4, offset = 0x4, fixed_abs, tag = 'smem constant byte address 0x4 - core index']
  #allocation1 [shape = 'u32[144,128]{1,0:T(1,128)}', space=vmem, size = 0x12000, scoped, tag = 'internal scratch']
  #allocation2 [shape = 'bf16[128,128]{1,0:T(8,128)(2,1)}', space=vmem, size = 0x8000, scoped, tag = 'scratch operand']
  #allocation3 [shape = 'bf16[128,1024]{1,0:T(8,128)(2,1)}', space=vmem, size = 0x40000, scoped, tag = 'scratch operand']
  #allocation4 [shape = 'bf16[1024,128]{1,0:T(8,128)(2,1)}', space=vmem, size = 0x40000, scoped, tag = 'scratch operand']
  #allocation5 [shape = 's32[3]{0}', space=sflag, size = 0xc, scoped, tag = 'scratch operand']
  #allocation15 [shape = 's32[]', space=sflag, size = 0x4, offset = 0, fixed_abs, tag = 'sflag constant byte address 0x0 - dummy sync flag']
  #allocation16 [shape = 's32[]', space=sflag, size = 0x4, offset = 0, fixed_abs, tag = 'sflag constant byte address 0x0 - dummy sync flag']
  #allocation17 [shape = 'u32[]', space=smem, size = 0x4, offset = 0x44, fixed_abs, tag = 'smem constant byte address 0x44 - assertion arg 0']
  #allocation18 [shape = 'u32[]', space=smem, size = 0x4, offset = 0x48, fixed_abs, tag = 'smem constant byte address 0x48 - assertion arg 1']
  #allocation19 [shape = 's32[]', space=sflag, size = 0x4, offset = 0, fixed_abs, tag = 'sflag constant byte address 0x0 - dummy sync flag']
  #allocation20 [shape = 's32[]', space=sflag, size = 0x4, offset = 0, fixed_abs, tag = 'sflag constant byte address 0x0 - dummy sync flag']
  #allocation21 [shape = 's32[]', space=sflag, size = 0x4, offset = 0, fixed_abs, tag = 'sflag constant byte address 0x0 - dummy sync flag']
  #allocation22 [shape = 's32[]', space=sflag, size = 0x4, offset = 0, fixed_abs, tag = 'sflag constant byte address 0x0 - dummy sync flag']
  %s0 = inlined_call_operand.vmem [shape: f32[8,128], index: 0, kind: input, shape index: {}]
  %s1 = inlined_call_operand.vmem [shape: f32[8,128], index: 1, kind: input, shape index: {}]
  %s2 = inlined_call_operand.hbm [shape: bf16[128,1024], index: 2, kind: input, shape index: {}]
  %s3 = inlined_call_operand.hbm [shape: bf16[1024,128], index: 3, kind: input, shape index: {}]
  %s4 = inlined_call_operand.hbm [shape: bf16[128,256], index: 4, kind: input, shape index: {}]
  %s5 = inlined_call_operand.hbm [shape: f32[8,1024], index: 5, kind: input, shape index: {}]
  %s6 = inlined_call_operand.hbm [shape: bf16[128,128], index: 6, kind: input, shape index: {}]
  %s7 = inlined_call_operand.hbm [shape: bf16[128,1024], index: 7, kind: input, shape index: {}]
  %s8 = inlined_call_operand.hbm [shape: bf16[1024,128], index: 8, kind: input, shape index: {}]
  %s9 = inlined_call_operand.vmem [shape: f32[8,384], index: 9, kind: output, shape index: {0}]
  %s10 = inlined_call_operand.hbm [shape: f32[8,128], index: 10, kind: output, shape index: {1}]
  %11 = xla_tuple %s9, %s10
  %s12 = sld [smem:[#allocation0]]
  $region70: #{vae_forward.1} parent=0
    _
  %s14 = ssub.s32 1, %s12
  %s15 = scalar_select 0, %s14, %s12
  $region1: #{vae_forward.1} parent=0
    #allocation6 [shape = 'u8[262144]{0}', space=vmem, size = 0x40000, scoped, tag = 'input window, operand 2, single buffered']
    #allocation7 [shape = 's32[1]{0}', space=sflag, size = 0x4, scoped, tag = 'scoped memory for vae_forward.1']
    #allocation8 [shape = 's32[1]{0}', space=sflag, size = 0x4, scoped, tag = 'scoped memory for vae_forward.1']
    #allocation9 [shape = 'u8[262144]{0}', space=vmem, size = 0x40000, scoped, tag = 'input window, operand 3, single buffered']
    #allocation10 [shape = 's32[1]{0}', space=sflag, size = 0x4, scoped, tag = 'scoped memory for vae_forward.1']
    #allocation11 [shape = 'u8[65536]{0}', space=vmem, size = 0x10000, scoped, tag = 'input window, operand 4, single buffered']
    #allocation12 [shape = 'u8[32768]{0}', space=vmem, size = 0x8000, scoped, tag = 'input window, operand 5, single buffered']
    #allocation13 [shape = 's32[1]{0}', space=sflag, size = 0x4, scoped, tag = 'scoped memory for vae_forward.1']
    #allocation14 [shape = 'u8[4096]{0}', space=vmem, size = 0x1000, scoped, tag = 'output window, operand 1, single buffered']
    %16 = vsyncpa [#allocation7], 0
    %17 = vsyncpa [#allocation10], 0
    %18 = vsyncpa [#allocation13], 0
    %19 = vsyncpa [#allocation8], 0
    // Predicated region
    $region2: #{vae_forward.1} parent=1 // pred_check
      _
    $region3: #{vae_forward.1} parent=1 // pred_check_branch
      %21 = sbr.rel (0) target = $region5
    $region4: #{vae_forward.1} parent=1 // pred_region
      _
    $region5: #{vae_forward.1} parent=1 // pred_fallthru
      _
    // Predicated region
    $region6: #{vae_forward.1} parent=1 // pred_check
      _
    $region7: #{vae_forward.1} parent=1 // pred_check_branch
      %23 = sbr.rel (0) target = $region9
    $region8: #{vae_forward.1} parent=1 // pred_region
      _
    $region9: #{vae_forward.1} parent=1 // pred_fallthru
      _
    // Predicated region
    $region10: #{vae_forward.1} parent=1 // pred_check
      _
    $region11: #{vae_forward.1} parent=1 // pred_check_branch
      %25 = sbr.rel (0) target = $region13
    $region12: #{vae_forward.1} parent=1 // pred_region
      %s27 = ssub.s32 8192, 8192
      %28 = vsyncadd [#allocation7], %s27
      %s29 = sshll.u32 [#allocation6], 4
      %s30 = int_to_ptr.vmem [resolvable:$true] %s29
      %35 = dma.hbm_to_vmem [thread:$0]  %s2, 8192, %s30, [#allocation7], 512, 512, 32
    $region13: #{vae_forward.1} parent=1 // pred_fallthru
      _
    // Predicated region
    $region14: #{vae_forward.1} parent=1 // pred_check
      _
    $region15: #{vae_forward.1} parent=1 // pred_check_branch
      %37 = sbr.rel (0) target = $region17
    $region16: #{vae_forward.1} parent=1 // pred_region
      %s39 = ssub.s32 8192, 8192
      %40 = vsyncadd [#allocation10], %s39
      %s41 = sshll.u32 [#allocation9], 4
      %s42 = int_to_ptr.vmem [resolvable:$true] %s41
      %47 = dma.hbm_to_vmem [thread:$0]  %s3, 8192, %s42, [#allocation10], 64, 64, 4
    $region17: #{vae_forward.1} parent=1 // pred_fallthru
      _
    // Predicated region
    $region18: #{vae_forward.1} parent=1 // pred_check
      _
    $region19: #{vae_forward.1} parent=1 // pred_check_branch
      %49 = sbr.rel (0) target = $region21
    $region20: #{vae_forward.1} parent=1 // pred_region
      %s51 = ssub.s32 2048, 2048
      %52 = vsyncadd [#allocation10], %s51
      %s53 = sshll.u32 [#allocation11], 4
      %s54 = int_to_ptr.vmem [resolvable:$true] %s53
      %59 = dma.hbm_to_vmem [thread:$0]  %s4, 2048, %s54, [#allocation10], 128, 128, 8
    $region21: #{vae_forward.1} parent=1 // pred_fallthru
      _
    // Predicated region
    $region22: #{vae_forward.1} parent=1 // pred_check
      _
    $region23: #{vae_forward.1} parent=1 // pred_check_branch
      %61 = sbr.rel (0) target = $region25
    $region24: #{vae_forward.1} parent=1 // pred_region
      %s63 = ssub.s32 1024, 1024
      %64 = vsyncadd [#allocation13], %s63
      %s66 = sshll.u32 [#allocation12], 4
      %s67 = int_to_ptr.vmem [resolvable:$true] %s66
      %69 = dma.hbm_to_vmem [thread:$0]  %s5, 1024, %s67, [#allocation13]
    $region25: #{vae_forward.1} parent=1 // pred_fallthru
      _
    // Predicated region
    $region26: #{vae_forward.1} parent=1 // pred_check
      _
    $region27: #{vae_forward.1} parent=1 // pred_check_branch
      %71 = sbr.rel (0) target = $region29
    $region28: #{vae_forward.1} parent=1 // pred_region
      %72 = dma.done [#allocation7], 8192
    $region29: #{vae_forward.1} parent=1 // pred_fallthru
      _
    // Predicated region
    $region30: #{vae_forward.1} parent=1 // pred_check
      _
    $region31: #{vae_forward.1} parent=1 // pred_check_branch
      %74 = sbr.rel (0) target = $region33
    $region32: #{vae_forward.1} parent=1 // pred_region
      %75 = dma.done [#allocation10], 8192
    $region33: #{vae_forward.1} parent=1 // pred_fallthru
      _
    // Predicated region
    $region34: #{vae_forward.1} parent=1 // pred_check
      _
    $region35: #{vae_forward.1} parent=1 // pred_check_branch
      %77 = sbr.rel (0) target = $region37
    $region36: #{vae_forward.1} parent=1 // pred_region
      %78 = dma.done [#allocation10], 2048
    $region37: #{vae_forward.1} parent=1 // pred_fallthru
      _
    // Predicated region
    $region38: #{vae_forward.1} parent=1 // pred_check
      _
    $region39: #{vae_forward.1} parent=1 // pred_check_branch
      %80 = sbr.rel (0) target = $region41
    $region40: #{vae_forward.1} parent=1 // pred_region
      %81 = dma.done [#allocation13], 1024
    $region41: #{vae_forward.1} parent=1 // pred_fallthru
      _
    // Predicated region
    $region42: #{vae_forward.1} parent=1 // pred_check
      _
    $region43: #{vae_forward.1} parent=1 // pred_check_branch
      %84 = sbr.rel target = $region45
    $region44: #{vae_forward.1} parent=1 // pred_region
      %85 = sst [smem:[#allocation17]] [#allocation16]
      %86 = sst [smem:[#allocation18]] [#allocation15]
    $region45: #{vae_forward.1} parent=1 // pred_fallthru
      _
    %88 = shalt.err (0)
    %s90 = sshll.u32 [#allocation2], 4
    %s91 = int_to_ptr.vmem [resolvable:$true] %s90
    %93 = dma.hbm_to_vmem [thread:$0]  %s6, 1024, %s91, [#allocation5]
    %s94 = scalar_lea.sflag [#allocation5], 1
    // Predicated region
    $region46: #{vae_forward.1} parent=1 // pred_check
      _
    $region47: #{vae_forward.1} parent=1 // pred_check_branch
      %96 = sbr.rel target = $region49
    $region48: #{vae_forward.1} parent=1 // pred_region
      %97 = sst [smem:[#allocation17]] [#allocation20]
      %98 = sst [smem:[#allocation18]] [#allocation19]
    $region49: #{vae_forward.1} parent=1 // pred_fallthru
      _
    %100 = shalt.err (0)
    %s102 = sshll.u32 [#allocation3], 4
    %s103 = int_to_ptr.vmem [resolvable:$true] %s102
    %105 = dma.hbm_to_vmem [thread:$0]  %s7, 8192, %s103, %s94
    %s106 = scalar_lea.sflag [#allocation5], 2
    // Predicated region
    $region50: #{vae_forward.1} parent=1 // pred_check
      _
    $region51: #{vae_forward.1} parent=1 // pred_check_branch
      %108 = sbr.rel target = $region53
    $region52: #{vae_forward.1} parent=1 // pred_region
      %109 = sst [smem:[#allocation17]] [#allocation22]
      %110 = sst [smem:[#allocation18]] [#allocation21]
    $region53: #{vae_forward.1} parent=1 // pred_fallthru
      _
    %112 = shalt.err (0)
    %s114 = sshll.u32 [#allocation4], 4
    %s115 = int_to_ptr.vmem [resolvable:$true] %s114
    %117 = dma.hbm_to_vmem [thread:$0]  %s8, 8192, %s115, %s106
    %v118 = vld [vmem:[#allocation12] ss:$8 sm:$0xf]
    %v119 = vld [vmem:[#allocation12] ss:$8 sm:$0xf0]
    %v120 = vor.u32 %v118, %v119
    %s121 = scalar_lea.vmem [#allocation12], 1
    %v122 = vld [vmem:[%s121] ss:$8 sm:$0xf]
    %v123 = vld [vmem:[%s121] ss:$8 sm:$0xf0]
    %v124 = vor.u32 %v122, %v123
    %s125 = scalar_lea.vmem [#allocation12], 2
    %v126 = vld [vmem:[%s125] ss:$8 sm:$0xf]
    %v127 = vld [vmem:[%s125] ss:$8 sm:$0xf0]
    %v128 = vor.u32 %v126, %v127
    %s129 = scalar_lea.vmem [#allocation12], 3
    %v130 = vld [vmem:[%s129] ss:$8 sm:$0xf]
    %v131 = vld [vmem:[%s129] ss:$8 sm:$0xf0]
    %v132 = vor.u32 %v130, %v131
    %v133 = vld [vmem:[#allocation12 + $0x4] ss:$0 sm:$0xff]
    %v134 = vld [vmem:[#allocation12 + $0xc] ss:$0 sm:$0xff]
    %v135 = vld [vmem:[#allocation12 + $0x5] ss:$0 sm:$0xff]
    %v136 = vld [vmem:[#allocation12 + $0xd] ss:$0 sm:$0xff]
    %s137 = scalar_lea.vmem [#allocation12], 6
    %v138 = vld [vmem:[%s137] ss:$8 sm:$0x3]
    %v139 = vld [vmem:[#allocation12 + $0x7] ss:$0 sm:$0xff]
    %v140 = vld [vmem:[%s0] sm:$0xff]
    %v141 = vld [vmem:[#allocation6] sm:$0xff]
    %v142 = vld [vmem:[#allocation6 + $0x8] sm:$0xff]
    %v143 = vld [vmem:[#allocation6 + $0x10] sm:$0xff]
    %v144 = vld [vmem:[#allocation6 + $0x18] sm:$0xff]
    %v145 = vld [vmem:[#allocation6 + $0x20] sm:$0xff]
    %v146 = vld [vmem:[#allocation6 + $0x28] sm:$0xff]
    %v147 = vld [vmem:[#allocation6 + $0x30] sm:$0xff]
    %v148 = vld [vmem:[#allocation6 + $0x38] sm:$0xff]
    %v149 = vld [vmem:[#allocation6 + $0x40] sm:$0xff]
    %v150 = vld [vmem:[#allocation6 + $0x48] sm:$0xff]
    %v151 = vld [vmem:[#allocation6 + $0x50] sm:$0xff]
    %v152 = vld [vmem:[#allocation6 + $0x58] sm:$0xff]
    %v153 = vld [vmem:[#allocation6 + $0x60] sm:$0xff]
    %v154 = vld [vmem:[#allocation6 + $0x68] sm:$0xff]
    %v155 = vld [vmem:[#allocation6 + $0x70] sm:$0xff]
    %v156 = vld [vmem:[#allocation6 + $0x78] sm:$0xff]
    %v157 = vld [vmem:[#allocation6 + $0x80] sm:$0xff]
    %v158 = vld [vmem:[#allocation6 + $0x88] sm:$0xff]
    %v159 = vld [vmem:[#allocation6 + $0x90] sm:$0xff]
    %v160 = vld [vmem:[#allocation6 + $0x98] sm:$0xff]
    %v161 = vld [vmem:[#allocation6 + $0xa0] sm:$0xff]
    %v162 = vld [vmem:[#allocation6 + $0xa8] sm:$0xff]
    %v163 = vld [vmem:[#allocation6 + $0xb0] sm:$0xff]
    %v164 = vld [vmem:[#allocation6 + $0xb8] sm:$0xff]
    %v165 = vld [vmem:[#allocation6 + $0xc0] sm:$0xff]
    %v166 = vld [vmem:[#allocation6 + $0xc8] sm:$0xff]
    %v167 = vld [vmem:[#allocation6 + $0xd0] sm:$0xff]
    %v168 = vld [vmem:[#allocation6 + $0xd8] sm:$0xff]
    %v169 = vld [vmem:[#allocation6 + $0xe0] sm:$0xff]
    %v170 = vld [vmem:[#allocation6 + $0xe8] sm:$0xff]
    %v171 = vld [vmem:[#allocation6 + $0xf0] sm:$0xff]
    %v172 = vld [vmem:[#allocation6 + $0xf8] sm:$0xff]
    %v173 = vld [vmem:[#allocation6 + $0x100] sm:$0xff]
    %v174 = vld [vmem:[#allocation6 + $0x108] sm:$0xff]
    %v175 = vld [vmem:[#allocation6 + $0x110] sm:$0xff]
    %v176 = vld [vmem:[#allocation6 + $0x118] sm:$0xff]
    %v177 = vld [vmem:[#allocation6 + $0x120] sm:$0xff]
    %v178 = vld [vmem:[#allocation6 + $0x128] sm:$0xff]
    %v179 = vld [vmem:[#allocation6 + $0x130] sm:$0xff]
    %v180 = vld [vmem:[#allocation6 + $0x138] sm:$0xff]
    %v181 = vld [vmem:[#allocation6 + $0x140] sm:$0xff]
    %v182 = vld [vmem:[#allocation6 + $0x148] sm:$0xff]
    %v183 = vld [vmem:[#allocation6 + $0x150] sm:$0xff]
    %v184 = vld [vmem:[#allocation6 + $0x158] sm:$0xff]
    %v185 = vld [vmem:[#allocation6 + $0x160] sm:$0xff]
    %v186 = vld [vmem:[#allocation6 + $0x168] sm:$0xff]
    %v187 = vld [vmem:[#allocation6 + $0x170] sm:$0xff]
    %v188 = vld [vmem:[#allocation6 + $0x178] sm:$0xff]
    %v189 = vld [vmem:[#allocation6 + $0x180] sm:$0xff]
    %v190 = vld [vmem:[#allocation6 + $0x188] sm:$0xff]
    %v191 = vld [vmem:[#allocation6 + $0x190] sm:$0xff]
    %v192 = vld [vmem:[#allocation6 + $0x198] sm:$0xff]
    %v193 = vld [vmem:[#allocation6 + $0x1a0] sm:$0xff]
    %v194 = vld [vmem:[#allocation6 + $0x1a8] sm:$0xff]
    %v195 = vld [vmem:[#allocation6 + $0x1b0] sm:$0xff]
    %v196 = vld [vmem:[#allocation6 + $0x1b8] sm:$0xff]
    %v197 = vld [vmem:[#allocation6 + $0x1c0] sm:$0xff]
    %v198 = vld [vmem:[#allocation6 + $0x1c8] sm:$0xff]
    %v199 = vld [vmem:[#allocation6 + $0x1d0] sm:$0xff]
    %v200 = vld [vmem:[#allocation6 + $0x1d8] sm:$0xff]
    %v201 = vld [vmem:[#allocation6 + $0x1e0] sm:$0xff]
    %v202 = vld [vmem:[#allocation6 + $0x1e8] sm:$0xff]
    %v203 = vld [vmem:[#allocation6 + $0x1f0] sm:$0xff]
    %v204 = vld [vmem:[#allocation6 + $0x1f8] sm:$0xff]
    %v205 = vpack.c.bf16 %v140, %v140
    %v270 = vunpack.c.l.b16 %v141
    %v271 = vunpack.c.h.b16 %v141
    %v272 = vunpack.c.l.b16 %v142
    %v273 = vunpack.c.h.b16 %v142
    %v274 = vunpack.c.l.b16 %v143
    %v275 = vunpack.c.h.b16 %v143
    %v276 = vunpack.c.l.b16 %v144
    %v277 = vunpack.c.h.b16 %v144
    %v278 = vunpack.c.l.b16 %v145
    %v279 = vunpack.c.h.b16 %v145
    %v280 = vunpack.c.l.b16 %v146
    %v281 = vunpack.c.h.b16 %v146
    %v282 = vunpack.c.l.b16 %v147
    %v283 = vunpack.c.h.b16 %v147
    %v284 = vunpack.c.l.b16 %v148
    %v285 = vunpack.c.h.b16 %v148
    %v286 = vunpack.c.l.b16 %v149
    %v287 = vunpack.c.h.b16 %v149
    %v288 = vunpack.c.l.b16 %v150
    %v289 = vunpack.c.h.b16 %v150
    %v290 = vunpack.c.l.b16 %v151
    %v291 = vunpack.c.h.b16 %v151
    %v292 = vunpack.c.l.b16 %v152
    %v293 = vunpack.c.h.b16 %v152
    %v294 = vunpack.c.l.b16 %v153
    %v295 = vunpack.c.h.b16 %v153
    %v296 = vunpack.c.l.b16 %v154
    %v297 = vunpack.c.h.b16 %v154
    %v298 = vunpack.c.l.b16 %v155
    %v299 = vunpack.c.h.b16 %v155
    %v300 = vunpack.c.l.b16 %v156
    %v301 = vunpack.c.h.b16 %v156
    %v302 = vunpack.c.l.b16 %v157
    %v303 = vunpack.c.h.b16 %v157
    %v304 = vunpack.c.l.b16 %v158
    %v305 = vunpack.c.h.b16 %v158
    %v306 = vunpack.c.l.b16 %v159
    %v307 = vunpack.c.h.b16 %v159
    %v308 = vunpack.c.l.b16 %v160
    %v309 = vunpack.c.h.b16 %v160
    %v310 = vunpack.c.l.b16 %v161
    %v311 = vunpack.c.h.b16 %v161
    %v312 = vunpack.c.l.b16 %v162
    %v313 = vunpack.c.h.b16 %v162
    %v314 = vunpack.c.l.b16 %v163
    %v315 = vunpack.c.h.b16 %v163
    %v316 = vunpack.c.l.b16 %v164
    %v317 = vunpack.c.h.b16 %v164
    %v318 = vunpack.c.l.b16 %v165
    %v319 = vunpack.c.h.b16 %v165
    %v320 = vunpack.c.l.b16 %v166
    %v321 = vunpack.c.h.b16 %v166
    %v322 = vunpack.c.l.b16 %v167
    %v323 = vunpack.c.h.b16 %v167
    %v324 = vunpack.c.l.b16 %v168
    %v325 = vunpack.c.h.b16 %v168
    %v326 = vunpack.c.l.b16 %v169
    %v327 = vunpack.c.h.b16 %v169
    %v328 = vunpack.c.l.b16 %v170
    %v329 = vunpack.c.h.b16 %v170
    %v330 = vunpack.c.l.b16 %v171
    %v331 = vunpack.c.h.b16 %v171
    %v332 = vunpack.c.l.b16 %v172
    %v333 = vunpack.c.h.b16 %v172
    %v334 = vunpack.c.l.b16 %v173
    %v335 = vunpack.c.h.b16 %v173
    %v336 = vunpack.c.l.b16 %v174
    %v337 = vunpack.c.h.b16 %v174
    %v338 = vunpack.c.l.b16 %v175
    %v339 = vunpack.c.h.b16 %v175
    %v340 = vunpack.c.l.b16 %v176
    %v341 = vunpack.c.h.b16 %v176
    %v342 = vunpack.c.l.b16 %v177
    %v343 = vunpack.c.h.b16 %v177
    %v344 = vunpack.c.l.b16 %v178
    %v345 = vunpack.c.h.b16 %v178
    %v346 = vunpack.c.l.b16 %v179
    %v347 = vunpack.c.h.b16 %v179
    %v348 = vunpack.c.l.b16 %v180
    %v349 = vunpack.c.h.b16 %v180
    %v350 = vunpack.c.l.b16 %v181
    %v351 = vunpack.c.h.b16 %v181
    %v352 = vunpack.c.l.b16 %v182
    %v353 = vunpack.c.h.b16 %v182
    %v354 = vunpack.c.l.b16 %v183
    %v355 = vunpack.c.h.b16 %v183
    %v356 = vunpack.c.l.b16 %v184
    %v357 = vunpack.c.h.b16 %v184
    %v358 = vunpack.c.l.b16 %v185
    %v359 = vunpack.c.h.b16 %v185
    %v360 = vunpack.c.l.b16 %v186
    %v361 = vunpack.c.h.b16 %v186
    %v362 = vunpack.c.l.b16 %v187
    %v363 = vunpack.c.h.b16 %v187
    %v364 = vunpack.c.l.b16 %v188
    %v365 = vunpack.c.h.b16 %v188
    %v366 = vunpack.c.l.b16 %v189
    %v367 = vunpack.c.h.b16 %v189
    %v368 = vunpack.c.l.b16 %v190
    %v369 = vunpack.c.h.b16 %v190
    %v370 = vunpack.c.l.b16 %v191
    %v371 = vunpack.c.h.b16 %v191
    %v372 = vunpack.c.l.b16 %v192
    %v373 = vunpack.c.h.b16 %v192
    %v374 = vunpack.c.l.b16 %v193
    %v375 = vunpack.c.h.b16 %v193
    %v376 = vunpack.c.l.b16 %v194
    %v377 = vunpack.c.h.b16 %v194
    %v378 = vunpack.c.l.b16 %v195
    %v379 = vunpack.c.h.b16 %v195
    %v380 = vunpack.c.l.b16 %v196
    %v381 = vunpack.c.h.b16 %v196
    %v382 = vunpack.c.l.b16 %v197
    %v383 = vunpack.c.h.b16 %v197
    %v384 = vunpack.c.l.b16 %v198
    %v385 = vunpack.c.h.b16 %v198
    %v386 = vunpack.c.l.b16 %v199
    %v387 = vunpack.c.h.b16 %v199
    %v388 = vunpack.c.l.b16 %v200
    %v389 = vunpack.c.h.b16 %v200
    %v390 = vunpack.c.l.b16 %v201
    %v391 = vunpack.c.h.b16 %v201
    %v392 = vunpack.c.l.b16 %v202
    %v393 = vunpack.c.h.b16 %v202
    %v394 = vunpack.c.l.b16 %v203
    %v395 = vunpack.c.h.b16 %v203
    %v396 = vunpack.c.l.b16 %v204
    %v397 = vunpack.c.h.b16 %v204
    %v398 = vpack.c.b16 %v278, %v270
    %v399 = vpack.c.b16 %v279, %v271
    %v400 = vpack.c.b16 %v280, %v272
    %v401 = vpack.c.b16 %v281, %v273
    %v402 = vpack.c.b16 %v282, %v274
    %v403 = vpack.c.b16 %v283, %v275
    %v404 = vpack.c.b16 %v284, %v276
    %v405 = vpack.c.b16 %v285, %v277
    %v406 = vpack.c.b16 %v294, %v286
    %v407 = vpack.c.b16 %v295, %v287
    %v408 = vpack.c.b16 %v296, %v288
    %v409 = vpack.c.b16 %v297, %v289
    %v410 = vpack.c.b16 %v298, %v290
    %v411 = vpack.c.b16 %v299, %v291
    %v412 = vpack.c.b16 %v300, %v292
    %v413 = vpack.c.b16 %v301, %v293
    %v414 = vpack.c.b16 %v310, %v302
    %v415 = vpack.c.b16 %v311, %v303
    %v416 = vpack.c.b16 %v312, %v304
    %v417 = vpack.c.b16 %v313, %v305
    %v418 = vpack.c.b16 %v314, %v306
    %v419 = vpack.c.b16 %v315, %v307
    %v420 = vpack.c.b16 %v316, %v308
    %v421 = vpack.c.b16 %v317, %v309
    %v422 = vpack.c.b16 %v326, %v318
    %v423 = vpack.c.b16 %v327, %v319
    %v424 = vpack.c.b16 %v328, %v320
    %v425 = vpack.c.b16 %v329, %v321
    %v426 = vpack.c.b16 %v330, %v322
    %v427 = vpack.c.b16 %v331, %v323
    %v428 = vpack.c.b16 %v332, %v324
    %v429 = vpack.c.b16 %v333, %v325
    %v430 = vpack.c.b16 %v342, %v334
    %v431 = vpack.c.b16 %v343, %v335
    %v432 = vpack.c.b16 %v344, %v336
    %v433 = vpack.c.b16 %v345, %v337
    %v434 = vpack.c.b16 %v346, %v338
    %v435 = vpack.c.b16 %v347, %v339
    %v436 = vpack.c.b16 %v348, %v340
    %v437 = vpack.c.b16 %v349, %v341
    %v438 = vpack.c.b16 %v358, %v350
    %v439 = vpack.c.b16 %v359, %v351
    %v440 = vpack.c.b16 %v360, %v352
    %v441 = vpack.c.b16 %v361, %v353
    %v442 = vpack.c.b16 %v362, %v354
    %v443 = vpack.c.b16 %v363, %v355
    %v444 = vpack.c.b16 %v364, %v356
    %v445 = vpack.c.b16 %v365, %v357
    %v446 = vpack.c.b16 %v374, %v366
    %v447 = vpack.c.b16 %v375, %v367
    %v448 = vpack.c.b16 %v376, %v368
    %v449 = vpack.c.b16 %v377, %v369
    %v450 = vpack.c.b16 %v378, %v370
    %v451 = vpack.c.b16 %v379, %v371
    %v452 = vpack.c.b16 %v380, %v372
    %v453 = vpack.c.b16 %v381, %v373
    %v454 = vpack.c.b16 %v390, %v382
    %v455 = vpack.c.b16 %v391, %v383
    %v456 = vpack.c.b16 %v392, %v384
    %v457 = vpack.c.b16 %v393, %v385
    %v458 = vpack.c.b16 %v394, %v386
    %v459 = vpack.c.b16 %v395, %v387
    %v460 = vpack.c.b16 %v396, %v388
    %v461 = vpack.c.b16 %v397, %v389
    %526 = vmatprep.subr.bf16.mxu0 %v455
    %527 = vmatpush1.bf16.msra.mxu0 %v454
    %528 = vmatprep.subr.bf16.mxu0 %v447
    %529 = vmatpush1.bf16.msra.mxu0 %v446
    %530 = vmatprep.subr.bf16.mxu0 %v439
    %531 = vmatpush1.bf16.msra.mxu0 %v438
    %532 = vmatprep.subr.bf16.mxu0 %v431
    %533 = vmatpush1.bf16.msra.mxu0 %v430
    %534 = vmatprep.subr.bf16.mxu0 %v423
    %535 = vmatpush1.bf16.msra.mxu0 %v422
    %536 = vmatprep.subr.bf16.mxu0 %v415
    %537 = vmatpush1.bf16.msra.mxu0 %v414
    %538 = vmatprep.subr.bf16.mxu0 %v407
    %539 = vmatpush1.bf16.msra.mxu0 %v406
    %540 = vmatprep.subr.bf16.mxu0 %v399
    %541 = vmatpush1.bf16.msra.mxu0 %v398
    %542 = vmatprep.subr.bf16.mxu0 0
    %543 = vmatpush2.bf16.msra.mxu0 0
    %544 = vmatprep.subr.bf16.mxu0 0
    %545 = vmatpush2.bf16.msra.mxu0 0
    %546 = vmatprep.subr.bf16.mxu0 0
    %547 = vmatpush2.bf16.msra.mxu0 0
    %548 = vmatprep.subr.bf16.mxu0 0
    %549 = vmatpush2.bf16.msra.mxu0 0
    %550 = vmatprep.subr.bf16.mxu0 0
    %551 = vmatpush2.bf16.msra.mxu0 0
    %552 = vmatprep.subr.bf16.mxu0 0
    %553 = vmatpush2.bf16.msra.mxu0 0
    %554 = vmatprep.subr.bf16.mxu0 0
    %555 = vmatpush2.bf16.msra.mxu0 0
    %556 = vmatprep.subr.bf16.mxu0 0
    %557 = vmatpush2.bf16.msra.mxu0 0
    %558 = vmatprep.mubr.bf16.mxu0 0
    %559 = vmatmul.mubr.bf16.gmra.mxu0 %v205
    %v560 = vpop.f32.mrf.mxu0
    %v561 = vadd.f32 0.0, %v560
    %v562 = vpop.f32.mrf.mxu0
    %v563 = vadd.f32 0.0, %v562
    %v564 = vpop.f32.mrf.mxu0
    %v565 = vpop.f32.mrf.mxu0
    %566 = vdwg.mxu0
    %567 = vmatprep.subr.bf16.mxu0 %v457
    %568 = vmatpush1.bf16.msra.mxu0 %v456
    %569 = vmatprep.subr.bf16.mxu0 %v449
    %570 = vmatpush1.bf16.msra.mxu0 %v448
    %571 = vmatprep.subr.bf16.mxu0 %v441
    %572 = vmatpush1.bf16.msra.mxu0 %v440
    %573 = vmatprep.subr.bf16.mxu0 %v433
    %574 = vmatpush1.bf16.msra.mxu0 %v432
    %575 = vmatprep.subr.bf16.mxu0 %v425
    %576 = vmatpush1.bf16.msra.mxu0 %v424
    %577 = vmatprep.subr.bf16.mxu0 %v417
    %578 = vmatpush1.bf16.msra.mxu0 %v416
    %579 = vmatprep.subr.bf16.mxu0 %v409
    %580 = vmatpush1.bf16.msra.mxu0 %v408
    %581 = vmatprep.subr.bf16.mxu0 %v401
    %582 = vmatpush1.bf16.msra.mxu0 %v400
    %583 = vmatprep.subr.bf16.mxu0 0
    %584 = vmatpush2.bf16.msra.mxu0 0
    %585 = vmatprep.subr.bf16.mxu0 0
    %586 = vmatpush2.bf16.msra.mxu0 0
    %587 = vmatprep.subr.bf16.mxu0 0
    %588 = vmatpush2.bf16.msra.mxu0 0
    %589 = vmatprep.subr.bf16.mxu0 0
    %590 = vmatpush2.bf16.msra.mxu0 0
    %591 = vmatprep.subr.bf16.mxu0 0
    %592 = vmatpush2.bf16.msra.mxu0 0
    %593 = vmatprep.subr.bf16.mxu0 0
    %594 = vmatpush2.bf16.msra.mxu0 0
    %595 = vmatprep.subr.bf16.mxu0 0
    %596 = vmatpush2.bf16.msra.mxu0 0
    %597 = vmatprep.subr.bf16.mxu0 0
    %598 = vmatpush2.bf16.msra.mxu0 0
    %599 = vmatprep.mubr.bf16.mxu0 0
    %600 = vmatmul.mubr.bf16.gmra.mxu0 %v205
    %v601 = vpop.f32.mrf.mxu0
    %v602 = vadd.f32 0.0, %v601
    %v603 = vpop.f32.mrf.mxu0
    %v604 = vadd.f32 0.0, %v603
    %v605 = vpop.f32.mrf.mxu0
    %v606 = vpop.f32.mrf.mxu0
    %607 = vdwg.mxu0
    %608 = vmatprep.subr.bf16.mxu0 %v459
    %609 = vmatpush1.bf16.msra.mxu0 %v458
    %610 = vmatprep.subr.bf16.mxu0 %v451
    %611 = vmatpush1.bf16.msra.mxu0 %v450
    %612 = vmatprep.subr.bf16.mxu0 %v443
    %613 = vmatpush1.bf16.msra.mxu0 %v442
    %614 = vmatprep.subr.bf16.mxu0 %v435
    %615 = vmatpush1.bf16.msra.mxu0 %v434
    %616 = vmatprep.subr.bf16.mxu0 %v427
    %617 = vmatpush1.bf16.msra.mxu0 %v426
    %618 = vmatprep.subr.bf16.mxu0 %v419
    %619 = vmatpush1.bf16.msra.mxu0 %v418
    %620 = vmatprep.subr.bf16.mxu0 %v411
    %621 = vmatpush1.bf16.msra.mxu0 %v410
    %622 = vmatprep.subr.bf16.mxu0 %v403
    %623 = vmatpush1.bf16.msra.mxu0 %v402
    %624 = vmatprep.subr.bf16.mxu0 0
    %625 = vmatpush2.bf16.msra.mxu0 0
    %626 = vmatprep.subr.bf16.mxu0 0
    %627 = vmatpush2.bf16.msra.mxu0 0
    %628 = vmatprep.subr.bf16.mxu0 0
    %629 = vmatpush2.bf16.msra.mxu0 0
    %630 = vmatprep.subr.bf16.mxu0 0
    %631 = vmatpush2.bf16.msra.mxu0 0
    %632 = vmatprep.subr.bf16.mxu0 0
    %633 = vmatpush2.bf16.msra.mxu0 0
    %634 = vmatprep.subr.bf16.mxu0 0
    %635 = vmatpush2.bf16.msra.mxu0 0
    %636 = vmatprep.subr.bf16.mxu0 0
    %637 = vmatpush2.bf16.msra.mxu0 0
    %638 = vmatprep.subr.bf16.mxu0 0
    %639 = vmatpush2.bf16.msra.mxu0 0
    %640 = vmatprep.mubr.bf16.mxu0 0
    %641 = vmatmul.mubr.bf16.gmra.mxu0 %v205
    %v642 = vpop.f32.mrf.mxu0
    %v643 = vadd.f32 0.0, %v642
    %v644 = vpop.f32.mrf.mxu0
    %v645 = vadd.f32 0.0, %v644
    %v646 = vpop.f32.mrf.mxu0
    %v647 = vpop.f32.mrf.mxu0
    %648 = vdwg.mxu0
    %649 = vmatprep.subr.bf16.mxu0 %v461
    %650 = vmatpush1.bf16.msra.mxu0 %v460
    %651 = vmatprep.subr.bf16.mxu0 %v453
    %652 = vmatpush1.bf16.msra.mxu0 %v452
    %653 = vmatprep.subr.bf16.mxu0 %v445
    %654 = vmatpush1.bf16.msra.mxu0 %v444
    %655 = vmatprep.subr.bf16.mxu0 %v437
    %656 = vmatpush1.bf16.msra.mxu0 %v436
    %657 = vmatprep.subr.bf16.mxu0 %v429
    %658 = vmatpush1.bf16.msra.mxu0 %v428
    %659 = vmatprep.subr.bf16.mxu0 %v421
    %660 = vmatpush1.bf16.msra.mxu0 %v420
    %661 = vmatprep.subr.bf16.mxu0 %v413
    %662 = vmatpush1.bf16.msra.mxu0 %v412
    %663 = vmatprep.subr.bf16.mxu0 %v405
    %664 = vmatpush1.bf16.msra.mxu0 %v404
    %665 = vmatprep.subr.bf16.mxu0 0
    %666 = vmatpush2.bf16.msra.mxu0 0
    %667 = vmatprep.subr.bf16.mxu0 0
    %668 = vmatpush2.bf16.msra.mxu0 0
    %669 = vmatprep.subr.bf16.mxu0 0
    %670 = vmatpush2.bf16.msra.mxu0 0
    %671 = vmatprep.subr.bf16.mxu0 0
    %672 = vmatpush2.bf16.msra.mxu0 0
    %673 = vmatprep.subr.bf16.mxu0 0
    %674 = vmatpush2.bf16.msra.mxu0 0
    %675 = vmatprep.subr.bf16.mxu0 0
    %676 = vmatpush2.bf16.msra.mxu0 0
    %677 = vmatprep.subr.bf16.mxu0 0
    %678 = vmatpush2.bf16.msra.mxu0 0
    %679 = vmatprep.subr.bf16.mxu0 0
    %680 = vmatpush2.bf16.msra.mxu0 0
    %681 = vmatprep.mubr.bf16.mxu0 0
    %682 = vmatmul.mubr.bf16.gmra.mxu0 %v205
    %v683 = vpop.f32.mrf.mxu0
    %v684 = vadd.f32 0.0, %v683
    %v685 = vpop.f32.mrf.mxu0
    %v686 = vadd.f32 0.0, %v685
    %v687 = vpop.f32.mrf.mxu0
    %v688 = vpop.f32.mrf.mxu0
    %689 = vdwg.mxu0
    %v690 = vrot.slane %v561, 4
    %v691 = vadd.f32 %v561, %v690
    %v692 = vrot.slane %v691, 2
    %v693 = vadd.f32 %v691, %v692
    %v694 = vrot.slane %v693, 1
    %v695 = vadd.f32 %v693, %v694
    %v696 = vrot.slane %v563, 4
    %v697 = vadd.f32 %v563, %v696
    %v698 = vrot.slane %v697, 2
    %v699 = vadd.f32 %v697, %v698
    %v700 = vrot.slane %v699, 1
    %v701 = vadd.f32 %v699, %v700
    %v702 = vrot.slane %v602, 4
    %v703 = vadd.f32 %v602, %v702
    %v704 = vrot.slane %v703, 2
    %v705 = vadd.f32 %v703, %v704
    %v706 = vrot.slane %v705, 1
    %v707 = vadd.f32 %v705, %v706
    %v708 = vrot.slane %v604, 4
    %v709 = vadd.f32 %v604, %v708
    %v710 = vrot.slane %v709, 2
    %v711 = vadd.f32 %v709, %v710
    %v712 = vrot.slane %v711, 1
    %v713 = vadd.f32 %v711, %v712
    %v714 = vrot.slane %v643, 4
    %v715 = vadd.f32 %v643, %v714
    %v716 = vrot.slane %v715, 2
    %v717 = vadd.f32 %v715, %v716
    %v718 = vrot.slane %v717, 1
    %v719 = vadd.f32 %v717, %v718
    %v720 = vrot.slane %v645, 4
    %v721 = vadd.f32 %v645, %v720
    %v722 = vrot.slane %v721, 2
    %v723 = vadd.f32 %v721, %v722
    %v724 = vrot.slane %v723, 1
    %v725 = vadd.f32 %v723, %v724
    %v726 = vrot.slane %v684, 4
    %v727 = vadd.f32 %v684, %v726
    %v728 = vrot.slane %v727, 2
    %v729 = vadd.f32 %v727, %v728
    %v730 = vrot.slane %v729, 1
    %v731 = vadd.f32 %v729, %v730
    %v732 = vrot.slane %v686, 4
    %v733 = vadd.f32 %v686, %v732
    %v734 = vrot.slane %v733, 2
    %v735 = vadd.f32 %v733, %v734
    %v736 = vrot.slane %v735, 1
    %v737 = vadd.f32 %v735, %v736
    %v738 = vmul.f32 %v561, %v561
    %v739 = vmul.f32 %v563, %v563
    %v740 = vmul.f32 %v602, %v602
    %v741 = vmul.f32 %v604, %v604
    %v742 = vmul.f32 %v643, %v643
    %v743 = vmul.f32 %v645, %v645
    %v744 = vmul.f32 %v684, %v684
    %v745 = vmul.f32 %v686, %v686
    %v746 = vrot.slane %v738, 4
    %v747 = vadd.f32 %v738, %v746
    %v748 = vrot.slane %v747, 2
    %v749 = vadd.f32 %v747, %v748
    %v750 = vrot.slane %v749, 1
    %v751 = vadd.f32 %v749, %v750
    %v752 = vrot.slane %v739, 4
    %v753 = vadd.f32 %v739, %v752
    %v754 = vrot.slane %v753, 2
    %v755 = vadd.f32 %v753, %v754
    %v756 = vrot.slane %v755, 1
    %v757 = vadd.f32 %v755, %v756
    %v758 = vrot.slane %v740, 4
    %v759 = vadd.f32 %v740, %v758
    %v760 = vrot.slane %v759, 2
    %v761 = vadd.f32 %v759, %v760
    %v762 = vrot.slane %v761, 1
    %v763 = vadd.f32 %v761, %v762
    %v764 = vrot.slane %v741, 4
    %v765 = vadd.f32 %v741, %v764
    %v766 = vrot.slane %v765, 2
    %v767 = vadd.f32 %v765, %v766
    %v768 = vrot.slane %v767, 1
    %v769 = vadd.f32 %v767, %v768
    %v770 = vrot.slane %v742, 4
    %v771 = vadd.f32 %v742, %v770
    %v772 = vrot.slane %v771, 2
    %v773 = vadd.f32 %v771, %v772
    %v774 = vrot.slane %v773, 1
    %v775 = vadd.f32 %v773, %v774
    %v776 = vrot.slane %v743, 4
    %v777 = vadd.f32 %v743, %v776
    %v778 = vrot.slane %v777, 2
    %v779 = vadd.f32 %v777, %v778
    %v780 = vrot.slane %v779, 1
    %v781 = vadd.f32 %v779, %v780
    %v782 = vrot.slane %v744, 4
    %v783 = vadd.f32 %v744, %v782
    %v784 = vrot.slane %v783, 2
    %v785 = vadd.f32 %v783, %v784
    %v786 = vrot.slane %v785, 1
    %v787 = vadd.f32 %v785, %v786
    %v788 = vrot.slane %v745, 4
    %v789 = vadd.f32 %v745, %v788
    %v790 = vrot.slane %v789, 2
    %v791 = vadd.f32 %v789, %v790
    %v792 = vrot.slane %v791, 1
    %v793 = vadd.f32 %v791, %v792
    %v794 = vmul.f32 %v695, 0.125
    %v795 = vmul.f32 %v701, 0.125
    %v796 = vmul.f32 %v707, 0.125
    %v797 = vmul.f32 %v713, 0.125
    %v798 = vmul.f32 %v719, 0.125
    %v799 = vmul.f32 %v725, 0.125
    %v800 = vmul.f32 %v731, 0.125
    %v801 = vmul.f32 %v737, 0.125
    %v802 = vmul.f32 %v751, 0.125
    %v803 = vmul.f32 %v757, 0.125
    %v804 = vmul.f32 %v763, 0.125
    %v805 = vmul.f32 %v769, 0.125
    %v806 = vmul.f32 %v775, 0.125
    %v807 = vmul.f32 %v781, 0.125
    %v808 = vmul.f32 %v787, 0.125
    %v809 = vmul.f32 %v793, 0.125
    %v810 = vmul.f32 %v794, %v794
    %v811 = vmul.f32 %v795, %v795
    %v812 = vmul.f32 %v796, %v796
    %v813 = vmul.f32 %v797, %v797
    %v814 = vmul.f32 %v798, %v798
    %v815 = vmul.f32 %v799, %v799
    %v816 = vmul.f32 %v800, %v800
    %v817 = vmul.f32 %v801, %v801
    %v818 = vsub.f32 %v802, %v810
    %v819 = vsub.f32 %v803, %v811
    %v820 = vsub.f32 %v804, %v812
    %v821 = vsub.f32 %v805, %v813
    %v822 = vsub.f32 %v806, %v814
    %v823 = vsub.f32 %v807, %v815
    %v824 = vsub.f32 %v808, %v816
    %v825 = vsub.f32 %v809, %v817
    %v826 = vsub.f32 %v561, %v794
    %v827 = vsub.f32 %v563, %v795
    %v828 = vsub.f32 %v602, %v796
    %v829 = vsub.f32 %v604, %v797
    %v830 = vsub.f32 %v643, %v798
    %v831 = vsub.f32 %v645, %v799
    %v832 = vsub.f32 %v684, %v800
    %v833 = vsub.f32 %v686, %v801
    %v834 = vadd.f32 %v818, 1e-05
    %v835 = vadd.f32 %v819, 1e-05
    %v836 = vadd.f32 %v820, 1e-05
    %v837 = vadd.f32 %v821, 1e-05
    %v838 = vadd.f32 %v822, 1e-05
    %v839 = vadd.f32 %v823, 1e-05
    %v840 = vadd.f32 %v824, 1e-05
    %v841 = vadd.f32 %v825, 1e-05
    %v842 = vrsqrt.pop %v834
    %v843 = vrsqrt.pop %v835
    %v844 = vrsqrt.pop %v836
    %v845 = vrsqrt.pop %v837
    %v846 = vrsqrt.pop %v838
    %v847 = vrsqrt.pop %v839
    %v848 = vrsqrt.pop %v840
    %v849 = vrsqrt.pop %v841
    %v850 = vmul.f32 %v826, %v842
    %v851 = vmul.f32 %v827, %v843
    %v852 = vmul.f32 %v828, %v844
    %v853 = vmul.f32 %v829, %v845
    %v854 = vmul.f32 %v830, %v846
    %v855 = vmul.f32 %v831, %v847
    %v856 = vmul.f32 %v832, %v848
    %v857 = vmul.f32 %v833, %v849
    %v859 = vlaneseq
    %v860 = vshrl.u32 %v859, 7
    %v861 = vsub.s32 0, %v860
    %v862 = vrot.slane %v120, %v861
    %v863 = vlaneseq
    %v864 = vshrl.u32 %v863, 7
    %v865 = vsub.s32 1, %v864
    %v866 = vrot.slane %v120, %v865
    %v867 = vlaneseq
    %v868 = vshrl.u32 %v867, 7
    %v869 = vsub.s32 2, %v868
    %v870 = vrot.slane %v120, %v869
    %v871 = vlaneseq
    %v872 = vshrl.u32 %v871, 7
    %v873 = vsub.s32 3, %v872
    %v874 = vrot.slane %v120, %v873
    %v875 = vlaneseq
    %v876 = vshrl.u32 %v875, 7
    %v877 = vsub.s32 4, %v876
    %v878 = vrot.slane %v120, %v877
    %v879 = vlaneseq
    %v880 = vshrl.u32 %v879, 7
    %v881 = vsub.s32 5, %v880
    %v882 = vrot.slane %v120, %v881
    %v883 = vlaneseq
    %v884 = vshrl.u32 %v883, 7
    %v885 = vsub.s32 6, %v884
    %v886 = vrot.slane %v120, %v885
    %v887 = vlaneseq
    %v888 = vshrl.u32 %v887, 7
    %v889 = vsub.s32 7, %v888
    %v890 = vrot.slane %v120, %v889
    %v899 = vmul.f32 %v850, %v862
    %v900 = vmul.f32 %v851, %v866
    %v901 = vmul.f32 %v852, %v870
    %v902 = vmul.f32 %v853, %v874
    %v903 = vmul.f32 %v854, %v878
    %v904 = vmul.f32 %v855, %v882
    %v905 = vmul.f32 %v856, %v886
    %v906 = vmul.f32 %v857, %v890
    %v908 = vlaneseq
    %v909 = vshrl.u32 %v908, 7
    %v910 = vsub.s32 0, %v909
    %v911 = vrot.slane %v124, %v910
    %v912 = vlaneseq
    %v913 = vshrl.u32 %v912, 7
    %v914 = vsub.s32 1, %v913
    %v915 = vrot.slane %v124, %v914
    %v916 = vlaneseq
    %v917 = vshrl.u32 %v916, 7
    %v918 = vsub.s32 2, %v917
    %v919 = vrot.slane %v124, %v918
    %v920 = vlaneseq
    %v921 = vshrl.u32 %v920, 7
    %v922 = vsub.s32 3, %v921
    %v923 = vrot.slane %v124, %v922
    %v924 = vlaneseq
    %v925 = vshrl.u32 %v924, 7
    %v926 = vsub.s32 4, %v925
    %v927 = vrot.slane %v124, %v926
    %v928 = vlaneseq
    %v929 = vshrl.u32 %v928, 7
    %v930 = vsub.s32 5, %v929
    %v931 = vrot.slane %v124, %v930
    %v932 = vlaneseq
    %v933 = vshrl.u32 %v932, 7
    %v934 = vsub.s32 6, %v933
    %v935 = vrot.slane %v124, %v934
    %v936 = vlaneseq
    %v937 = vshrl.u32 %v936, 7
    %v938 = vsub.s32 7, %v937
    %v939 = vrot.slane %v124, %v938
    %v948 = vadd.f32 %v899, %v911
    %v949 = vadd.f32 %v900, %v915
    %v950 = vadd.f32 %v901, %v919
    %v951 = vadd.f32 %v902, %v923
    %v952 = vadd.f32 %v903, %v927
    %v953 = vadd.f32 %v904, %v931
    %v954 = vadd.f32 %v905, %v935
    %v955 = vadd.f32 %v906, %v939
    %vm956 = vcmp.gt.f32.partialorder %v948, 0.0
    %vm957 = vcmp.gt.f32.partialorder %v949, 0.0
    %vm958 = vcmp.gt.f32.partialorder %v950, 0.0
    %vm959 = vcmp.gt.f32.partialorder %v951, 0.0
    %vm960 = vcmp.gt.f32.partialorder %v952, 0.0
    %vm961 = vcmp.gt.f32.partialorder %v953, 0.0
    %vm962 = vcmp.gt.f32.partialorder %v954, 0.0
    %vm963 = vcmp.gt.f32.partialorder %v955, 0.0
    %v964 = vmul.f32 %v948, 0.2
    %v965 = vmul.f32 %v949, 0.2
    %v966 = vmul.f32 %v950, 0.2
    %v967 = vmul.f32 %v951, 0.2
    %v968 = vmul.f32 %v952, 0.2
    %v969 = vmul.f32 %v953, 0.2
    %v970 = vmul.f32 %v954, 0.2
    %v971 = vmul.f32 %v955, 0.2
    %v972 = vsel %vm956, %v948, %v964
    %v973 = vsel %vm957, %v949, %v965
    %v974 = vsel %vm958, %v950, %v966
    %v975 = vsel %vm959, %v951, %v967
    %v976 = vsel %vm960, %v952, %v968
    %v977 = vsel %vm961, %v953, %v969
    %v978 = vsel %vm962, %v954, %v970
    %v979 = vsel %vm963, %v955, %v971
    %v980 = vld [vmem:[#allocation9] sm:$0xf]
    %v981 = vld [vmem:[#allocation9 + $0x4] sm:$0xf]
    %v982 = vld [vmem:[#allocation9 + $0x8] sm:$0xf]
    %v983 = vld [vmem:[#allocation9 + $0xc] sm:$0xf]
    %v984 = vld [vmem:[#allocation9 + $0x10] sm:$0xf]
    %v985 = vld [vmem:[#allocation9 + $0x14] sm:$0xf]
    %v986 = vld [vmem:[#allocation9 + $0x18] sm:$0xf]
    %v987 = vld [vmem:[#allocation9 + $0x1c] sm:$0xf]
    %v988 = vld [vmem:[#allocation9 + $0x20] sm:$0xf]
    %v989 = vld [vmem:[#allocation9 + $0x24] sm:$0xf]
    %v990 = vld [vmem:[#allocation9 + $0x28] sm:$0xf]
    %v991 = vld [vmem:[#allocation9 + $0x2c] sm:$0xf]
    %v992 = vld [vmem:[#allocation9 + $0x30] sm:$0xf]
    %v993 = vld [vmem:[#allocation9 + $0x34] sm:$0xf]
    %v994 = vld [vmem:[#allocation9 + $0x38] sm:$0xf]
    %v995 = vld [vmem:[#allocation9 + $0x3c] sm:$0xf]
    %v996 = vld [vmem:[#allocation9 + $0x40] sm:$0xf]
    %v997 = vld [vmem:[#allocation9 + $0x44] sm:$0xf]
    %v998 = vld [vmem:[#allocation9 + $0x48] sm:$0xf]
    %v999 = vld [vmem:[#allocation9 + $0x4c] sm:$0xf]
    %v1000 = vld [vmem:[#allocation9 + $0x50] sm:$0xf]
    %v1001 = vld [vmem:[#allocation9 + $0x54] sm:$0xf]
    %v1002 = vld [vmem:[#allocation9 + $0x58] sm:$0xf]
    %v1003 = vld [vmem:[#allocation9 + $0x5c] sm:$0xf]
    %v1004 = vld [vmem:[#allocation9 + $0x60] sm:$0xf]
    %v1005 = vld [vmem:[#allocation9 + $0x64] sm:$0xf]
    %v1006 = vld [vmem:[#allocation9 + $0x68] sm:$0xf]
    %v1007 = vld [vmem:[#allocation9 + $0x6c] sm:$0xf]
    %v1008 = vld [vmem:[#allocation9 + $0x70] sm:$0xf]
    %v1009 = vld [vmem:[#allocation9 + $0x74] sm:$0xf]
    %v1010 = vld [vmem:[#allocation9 + $0x78] sm:$0xf]
    %v1011 = vld [vmem:[#allocation9 + $0x7c] sm:$0xf]
    %v1012 = vld [vmem:[#allocation9 + $0x80] sm:$0xf]
    %v1013 = vld [vmem:[#allocation9 + $0x84] sm:$0xf]
    %v1014 = vld [vmem:[#allocation9 + $0x88] sm:$0xf]
    %v1015 = vld [vmem:[#allocation9 + $0x8c] sm:$0xf]
    %v1016 = vld [vmem:[#allocation9 + $0x90] sm:$0xf]
    %v1017 = vld [vmem:[#allocation9 + $0x94] sm:$0xf]
    %v1018 = vld [vmem:[#allocation9 + $0x98] sm:$0xf]
    %v1019 = vld [vmem:[#allocation9 + $0x9c] sm:$0xf]
    %v1020 = vld [vmem:[#allocation9 + $0xa0] sm:$0xf]
    %v1021 = vld [vmem:[#allocation9 + $0xa4] sm:$0xf]
    %v1022 = vld [vmem:[#allocation9 + $0xa8] sm:$0xf]
    %v1023 = vld [vmem:[#allocation9 + $0xac] sm:$0xf]
    %v1024 = vld [vmem:[#allocation9 + $0xb0] sm:$0xf]
    %v1025 = vld [vmem:[#allocation9 + $0xb4] sm:$0xf]
    %v1026 = vld [vmem:[#allocation9 + $0xb8] sm:$0xf]
    %v1027 = vld [vmem:[#allocation9 + $0xbc] sm:$0xf]
    %v1028 = vld [vmem:[#allocation9 + $0xc0] sm:$0xf]
    %v1029 = vld [vmem:[#allocation9 + $0xc4] sm:$0xf]
    %v1030 = vld [vmem:[#allocation9 + $0xc8] sm:$0xf]
    %v1031 = vld [vmem:[#allocation9 + $0xcc] sm:$0xf]
    %v1032 = vld [vmem:[#allocation9 + $0xd0] sm:$0xf]
    %v1033 = vld [vmem:[#allocation9 + $0xd4] sm:$0xf]
    %v1034 = vld [vmem:[#allocation9 + $0xd8] sm:$0xf]
    %v1035 = vld [vmem:[#allocation9 + $0xdc] sm:$0xf]
    %v1036 = vld [vmem:[#allocation9 + $0xe0] sm:$0xf]
    %v1037 = vld [vmem:[#allocation9 + $0xe4] sm:$0xf]
    %v1038 = vld [vmem:[#allocation9 + $0xe8] sm:$0xf]
    %v1039 = vld [vmem:[#allocation9 + $0xec] sm:$0xf]
    %v1040 = vld [vmem:[#allocation9 + $0xf0] sm:$0xf]
    %v1041 = vld [vmem:[#allocation9 + $0xf4] sm:$0xf]
    %v1042 = vld [vmem:[#allocation9 + $0xf8] sm:$0xf]
    %v1043 = vld [vmem:[#allocation9 + $0xfc] sm:$0xf]
    %v1044 = vld [vmem:[#allocation9 + $0x100] sm:$0xf]
    %v1045 = vld [vmem:[#allocation9 + $0x104] sm:$0xf]
    %v1046 = vld [vmem:[#allocation9 + $0x108] sm:$0xf]
    %v1047 = vld [vmem:[#allocation9 + $0x10c] sm:$0xf]
    %v1048 = vld [vmem:[#allocation9 + $0x110] sm:$0xf]
    %v1049 = vld [vmem:[#allocation9 + $0x114] sm:$0xf]
    %v1050 = vld [vmem:[#allocation9 + $0x118] sm:$0xf]
    %v1051 = vld [vmem:[#allocation9 + $0x11c] sm:$0xf]
    %v1052 = vld [vmem:[#allocation9 + $0x120] sm:$0xf]
    %v1053 = vld [vmem:[#allocation9 + $0x124] sm:$0xf]
    %v1054 = vld [vmem:[#allocation9 + $0x128] sm:$0xf]
    %v1055 = vld [vmem:[#allocation9 + $0x12c] sm:$0xf]
    %v1056 = vld [vmem:[#allocation9 + $0x130] sm:$0xf]
    %v1057 = vld [vmem:[#allocation9 + $0x134] sm:$0xf]
    %v1058 = vld [vmem:[#allocation9 + $0x138] sm:$0xf]
    %v1059 = vld [vmem:[#allocation9 + $0x13c] sm:$0xf]
    %v1060 = vld [vmem:[#allocation9 + $0x140] sm:$0xf]
    %v1061 = vld [vmem:[#allocation9 + $0x144] sm:$0xf]
    %v1062 = vld [vmem:[#allocation9 + $0x148] sm:$0xf]
    %v1063 = vld [vmem:[#allocation9 + $0x14c] sm:$0xf]
    %v1064 = vld [vmem:[#allocation9 + $0x150] sm:$0xf]
    %v1065 = vld [vmem:[#allocation9 + $0x154] sm:$0xf]
    %v1066 = vld [vmem:[#allocation9 + $0x158] sm:$0xf]
    %v1067 = vld [vmem:[#allocation9 + $0x15c] sm:$0xf]
    %v1068 = vld [vmem:[#allocation9 + $0x160] sm:$0xf]
    %v1069 = vld [vmem:[#allocation9 + $0x164] sm:$0xf]
    %v1070 = vld [vmem:[#allocation9 + $0x168] sm:$0xf]
    %v1071 = vld [vmem:[#allocation9 + $0x16c] sm:$0xf]
    %v1072 = vld [vmem:[#allocation9 + $0x170] sm:$0xf]
    %v1073 = vld [vmem:[#allocation9 + $0x174] sm:$0xf]
    %v1074 = vld [vmem:[#allocation9 + $0x178] sm:$0xf]
    %v1075 = vld [vmem:[#allocation9 + $0x17c] sm:$0xf]
    %v1076 = vld [vmem:[#allocation9 + $0x180] sm:$0xf]
    %v1077 = vld [vmem:[#allocation9 + $0x184] sm:$0xf]
    %v1078 = vld [vmem:[#allocation9 + $0x188] sm:$0xf]
    %v1079 = vld [vmem:[#allocation9 + $0x18c] sm:$0xf]
    %v1080 = vld [vmem:[#allocation9 + $0x190] sm:$0xf]
    %v1081 = vld [vmem:[#allocation9 + $0x194] sm:$0xf]
    %v1082 = vld [vmem:[#allocation9 + $0x198] sm:$0xf]
    %v1083 = vld [vmem:[#allocation9 + $0x19c] sm:$0xf]
    %v1084 = vld [vmem:[#allocation9 + $0x1a0] sm:$0xf]
    %v1085 = vld [vmem:[#allocation9 + $0x1a4] sm:$0xf]
    %v1086 = vld [vmem:[#allocation9 + $0x1a8] sm:$0xf]
    %v1087 = vld [vmem:[#allocation9 + $0x1ac] sm:$0xf]
    %v1088 = vld [vmem:[#allocation9 + $0x1b0] sm:$0xf]
    %v1089 = vld [vmem:[#allocation9 + $0x1b4] sm:$0xf]
    %v1090 = vld [vmem:[#allocation9 + $0x1b8] sm:$0xf]
    %v1091 = vld [vmem:[#allocation9 + $0x1bc] sm:$0xf]
    %v1092 = vld [vmem:[#allocation9 + $0x1c0] sm:$0xf]
    %v1093 = vld [vmem:[#allocation9 + $0x1c4] sm:$0xf]
    %v1094 = vld [vmem:[#allocation9 + $0x1c8] sm:$0xf]
    %v1095 = vld [vmem:[#allocation9 + $0x1cc] sm:$0xf]
    %v1096 = vld [vmem:[#allocation9 + $0x1d0] sm:$0xf]
    %v1097 = vld [vmem:[#allocation9 + $0x1d4] sm:$0xf]
    %v1098 = vld [vmem:[#allocation9 + $0x1d8] sm:$0xf]
    %v1099 = vld [vmem:[#allocation9 + $0x1dc] sm:$0xf]
    %v1100 = vld [vmem:[#allocation9 + $0x1e0] sm:$0xf]
    %v1101 = vld [vmem:[#allocation9 + $0x1e4] sm:$0xf]
    %v1102 = vld [vmem:[#allocation9 + $0x1e8] sm:$0xf]
    %v1103 = vld [vmem:[#allocation9 + $0x1ec] sm:$0xf]
    %v1104 = vld [vmem:[#allocation9 + $0x1f0] sm:$0xf]
    %v1105 = vld [vmem:[#allocation9 + $0x1f4] sm:$0xf]
    %v1106 = vld [vmem:[#allocation9 + $0x1f8] sm:$0xf]
    %v1107 = vld [vmem:[#allocation9 + $0x1fc] sm:$0xf]
    %v1108 = vpack.c.bf16 %v972, %v972
    %v1109 = vpack.c.bf16 %v973, %v973
    %v1110 = vpack.c.bf16 %v974, %v974
    %v1111 = vpack.c.bf16 %v975, %v975
    %v1112 = vpack.c.bf16 %v976, %v976
    %v1113 = vpack.c.bf16 %v977, %v977
    %v1114 = vpack.c.bf16 %v978, %v978
    %v1115 = vpack.c.bf16 %v979, %v979
    %v1244 = vunpack.c.l.b16 %v980
    %v1245 = vunpack.c.l.b16 %v981
    %v1246 = vunpack.c.l.b16 %v982
    %v1247 = vunpack.c.l.b16 %v983
    %v1248 = vunpack.c.l.b16 %v984
    %v1249 = vunpack.c.l.b16 %v985
    %v1250 = vunpack.c.l.b16 %v986
    %v1251 = vunpack.c.l.b16 %v987
    %v1252 = vunpack.c.l.b16 %v988
    %v1253 = vunpack.c.l.b16 %v989
    %v1254 = vunpack.c.l.b16 %v990
    %v1255 = vunpack.c.l.b16 %v991
    %v1256 = vunpack.c.l.b16 %v992
    %v1257 = vunpack.c.l.b16 %v993
    %v1258 = vunpack.c.l.b16 %v994
    %v1259 = vunpack.c.l.b16 %v995
    %v1260 = vunpack.c.l.b16 %v996
    %v1261 = vunpack.c.l.b16 %v997
    %v1262 = vunpack.c.l.b16 %v998
    %v1263 = vunpack.c.l.b16 %v999
    %v1264 = vunpack.c.l.b16 %v1000
    %v1265 = vunpack.c.l.b16 %v1001
    %v1266 = vunpack.c.l.b16 %v1002
    %v1267 = vunpack.c.l.b16 %v1003
    %v1268 = vunpack.c.l.b16 %v1004
    %v1269 = vunpack.c.l.b16 %v1005
    %v1270 = vunpack.c.l.b16 %v1006
    %v1271 = vunpack.c.l.b16 %v1007
    %v1272 = vunpack.c.l.b16 %v1008
    %v1273 = vunpack.c.l.b16 %v1009
    %v1274 = vunpack.c.l.b16 %v1010
    %v1275 = vunpack.c.l.b16 %v1011
    %v1276 = vunpack.c.l.b16 %v1012
    %v1277 = vunpack.c.l.b16 %v1013
    %v1278 = vunpack.c.l.b16 %v1014
    %v1279 = vunpack.c.l.b16 %v1015
    %v1280 = vunpack.c.l.b16 %v1016
    %v1281 = vunpack.c.l.b16 %v1017
    %v1282 = vunpack.c.l.b16 %v1018
    %v1283 = vunpack.c.l.b16 %v1019
    %v1284 = vunpack.c.l.b16 %v1020
    %v1285 = vunpack.c.l.b16 %v1021
    %v1286 = vunpack.c.l.b16 %v1022
    %v1287 = vunpack.c.l.b16 %v1023
    %v1288 = vunpack.c.l.b16 %v1024
    %v1289 = vunpack.c.l.b16 %v1025
    %v1290 = vunpack.c.l.b16 %v1026
    %v1291 = vunpack.c.l.b16 %v1027
    %v1292 = vunpack.c.l.b16 %v1028
    %v1293 = vunpack.c.l.b16 %v1029
    %v1294 = vunpack.c.l.b16 %v1030
    %v1295 = vunpack.c.l.b16 %v1031
    %v1296 = vunpack.c.l.b16 %v1032
    %v1297 = vunpack.c.l.b16 %v1033
    %v1298 = vunpack.c.l.b16 %v1034
    %v1299 = vunpack.c.l.b16 %v1035
    %v1300 = vunpack.c.l.b16 %v1036
    %v1301 = vunpack.c.l.b16 %v1037
    %v1302 = vunpack.c.l.b16 %v1038
    %v1303 = vunpack.c.l.b16 %v1039
    %v1304 = vunpack.c.l.b16 %v1040
    %v1305 = vunpack.c.l.b16 %v1041
    %v1306 = vunpack.c.l.b16 %v1042
    %v1307 = vunpack.c.l.b16 %v1043
    %v1308 = vunpack.c.l.b16 %v1044
    %v1309 = vunpack.c.l.b16 %v1045
    %v1310 = vunpack.c.l.b16 %v1046
    %v1311 = vunpack.c.l.b16 %v1047
    %v1312 = vunpack.c.l.b16 %v1048
    %v1313 = vunpack.c.l.b16 %v1049
    %v1314 = vunpack.c.l.b16 %v1050
    %v1315 = vunpack.c.l.b16 %v1051
    %v1316 = vunpack.c.l.b16 %v1052
    %v1317 = vunpack.c.l.b16 %v1053
    %v1318 = vunpack.c.l.b16 %v1054
    %v1319 = vunpack.c.l.b16 %v1055
    %v1320 = vunpack.c.l.b16 %v1056
    %v1321 = vunpack.c.l.b16 %v1057
    %v1322 = vunpack.c.l.b16 %v1058
    %v1323 = vunpack.c.l.b16 %v1059
    %v1324 = vunpack.c.l.b16 %v1060
    %v1325 = vunpack.c.l.b16 %v1061
    %v1326 = vunpack.c.l.b16 %v1062
    %v1327 = vunpack.c.l.b16 %v1063
    %v1328 = vunpack.c.l.b16 %v1064
    %v1329 = vunpack.c.l.b16 %v1065
    %v1330 = vunpack.c.l.b16 %v1066
    %v1331 = vunpack.c.l.b16 %v1067
    %v1332 = vunpack.c.l.b16 %v1068
    %v1333 = vunpack.c.l.b16 %v1069
    %v1334 = vunpack.c.l.b16 %v1070
    %v1335 = vunpack.c.l.b16 %v1071
    %v1336 = vunpack.c.l.b16 %v1072
    %v1337 = vunpack.c.l.b16 %v1073
    %v1338 = vunpack.c.l.b16 %v1074
    %v1339 = vunpack.c.l.b16 %v1075
    %v1340 = vunpack.c.l.b16 %v1076
    %v1341 = vunpack.c.l.b16 %v1077
    %v1342 = vunpack.c.l.b16 %v1078
    %v1343 = vunpack.c.l.b16 %v1079
    %v1344 = vunpack.c.l.b16 %v1080
    %v1345 = vunpack.c.l.b16 %v1081
    %v1346 = vunpack.c.l.b16 %v1082
    %v1347 = vunpack.c.l.b16 %v1083
    %v1348 = vunpack.c.l.b16 %v1084
    %v1349 = vunpack.c.l.b16 %v1085
    %v1350 = vunpack.c.l.b16 %v1086
    %v1351 = vunpack.c.l.b16 %v1087
    %v1352 = vunpack.c.l.b16 %v1088
    %v1353 = vunpack.c.l.b16 %v1089
    %v1354 = vunpack.c.l.b16 %v1090
    %v1355 = vunpack.c.l.b16 %v1091
    %v1356 = vunpack.c.l.b16 %v1092
    %v1357 = vunpack.c.l.b16 %v1093
    %v1358 = vunpack.c.l.b16 %v1094
    %v1359 = vunpack.c.l.b16 %v1095
    %v1360 = vunpack.c.l.b16 %v1096
    %v1361 = vunpack.c.l.b16 %v1097
    %v1362 = vunpack.c.l.b16 %v1098
    %v1363 = vunpack.c.l.b16 %v1099
    %v1364 = vunpack.c.l.b16 %v1100
    %v1365 = vunpack.c.l.b16 %v1101
    %v1366 = vunpack.c.l.b16 %v1102
    %v1367 = vunpack.c.l.b16 %v1103
    %v1368 = vunpack.c.l.b16 %v1104
    %v1369 = vunpack.c.l.b16 %v1105
    %v1370 = vunpack.c.l.b16 %v1106
    %v1371 = vunpack.c.l.b16 %v1107
    %v1372 = vpack.c.b16 %v1245, %v1244
    %v1373 = vpack.c.b16 %v1247, %v1246
    %v1374 = vpack.c.b16 %v1249, %v1248
    %v1375 = vpack.c.b16 %v1251, %v1250
    %v1376 = vpack.c.b16 %v1253, %v1252
    %v1377 = vpack.c.b16 %v1255, %v1254
    %v1378 = vpack.c.b16 %v1257, %v1256
    %v1379 = vpack.c.b16 %v1259, %v1258
    %v1380 = vpack.c.b16 %v1261, %v1260
    %v1381 = vpack.c.b16 %v1263, %v1262
    %v1382 = vpack.c.b16 %v1265, %v1264
    %v1383 = vpack.c.b16 %v1267, %v1266
    %v1384 = vpack.c.b16 %v1269, %v1268
    %v1385 = vpack.c.b16 %v1271, %v1270
    %v1386 = vpack.c.b16 %v1273, %v1272
    %v1387 = vpack.c.b16 %v1275, %v1274
    %v1388 = vpack.c.b16 %v1277, %v1276
    %v1389 = vpack.c.b16 %v1279, %v1278
    %v1390 = vpack.c.b16 %v1281, %v1280
    %v1391 = vpack.c.b16 %v1283, %v1282
    %v1392 = vpack.c.b16 %v1285, %v1284
    %v1393 = vpack.c.b16 %v1287, %v1286
    %v1394 = vpack.c.b16 %v1289, %v1288
    %v1395 = vpack.c.b16 %v1291, %v1290
    %v1396 = vpack.c.b16 %v1293, %v1292
    %v1397 = vpack.c.b16 %v1295, %v1294
    %v1398 = vpack.c.b16 %v1297, %v1296
    %v1399 = vpack.c.b16 %v1299, %v1298
    %v1400 = vpack.c.b16 %v1301, %v1300
    %v1401 = vpack.c.b16 %v1303, %v1302
    %v1402 = vpack.c.b16 %v1305, %v1304
    %v1403 = vpack.c.b16 %v1307, %v1306
    %v1404 = vpack.c.b16 %v1309, %v1308
    %v1405 = vpack.c.b16 %v1311, %v1310
    %v1406 = vpack.c.b16 %v1313, %v1312
    %v1407 = vpack.c.b16 %v1315, %v1314
    %v1408 = vpack.c.b16 %v1317, %v1316
    %v1409 = vpack.c.b16 %v1319, %v1318
    %v1410 = vpack.c.b16 %v1321, %v1320
    %v1411 = vpack.c.b16 %v1323, %v1322
    %v1412 = vpack.c.b16 %v1325, %v1324
    %v1413 = vpack.c.b16 %v1327, %v1326
    %v1414 = vpack.c.b16 %v1329, %v1328
    %v1415 = vpack.c.b16 %v1331, %v1330
    %v1416 = vpack.c.b16 %v1333, %v1332
    %v1417 = vpack.c.b16 %v1335, %v1334
    %v1418 = vpack.c.b16 %v1337, %v1336
    %v1419 = vpack.c.b16 %v1339, %v1338
    %v1420 = vpack.c.b16 %v1341, %v1340
    %v1421 = vpack.c.b16 %v1343, %v1342
    %v1422 = vpack.c.b16 %v1345, %v1344
    %v1423 = vpack.c.b16 %v1347, %v1346
    %v1424 = vpack.c.b16 %v1349, %v1348
    %v1425 = vpack.c.b16 %v1351, %v1350
    %v1426 = vpack.c.b16 %v1353, %v1352
    %v1427 = vpack.c.b16 %v1355, %v1354
    %v1428 = vpack.c.b16 %v1357, %v1356
    %v1429 = vpack.c.b16 %v1359, %v1358
    %v1430 = vpack.c.b16 %v1361, %v1360
    %v1431 = vpack.c.b16 %v1363, %v1362
    %v1432 = vpack.c.b16 %v1365, %v1364
    %v1433 = vpack.c.b16 %v1367, %v1366
    %v1434 = vpack.c.b16 %v1369, %v1368
    %v1435 = vpack.c.b16 %v1371, %v1370
    %1500 = vmatprep.subr.bf16.mxu0 0
    %1501 = vmatpush1.bf16.msra.mxu0 %v1379
    %1502 = vmatprep.subr.bf16.mxu0 0
    %1503 = vmatpush1.bf16.msra.mxu0 %v1378
    %1504 = vmatprep.subr.bf16.mxu0 0
    %1505 = vmatpush1.bf16.msra.mxu0 %v1377
    %1506 = vmatprep.subr.bf16.mxu0 0
    %1507 = vmatpush1.bf16.msra.mxu0 %v1376
    %1508 = vmatprep.subr.bf16.mxu0 0
    %1509 = vmatpush1.bf16.msra.mxu0 %v1375
    %1510 = vmatprep.subr.bf16.mxu0 0
    %1511 = vmatpush1.bf16.msra.mxu0 %v1374
    %1512 = vmatprep.subr.bf16.mxu0 0
    %1513 = vmatpush1.bf16.msra.mxu0 %v1373
    %1514 = vmatprep.subr.bf16.mxu0 0
    %1515 = vmatpush1.bf16.msra.mxu0 %v1372
    %1516 = vmatprep.subr.bf16.mxu0 0
    %1517 = vmatpush2.bf16.msra.mxu0 %v1387
    %1518 = vmatprep.subr.bf16.mxu0 0
    %1519 = vmatpush2.bf16.msra.mxu0 %v1386
    %1520 = vmatprep.subr.bf16.mxu0 0
    %1521 = vmatpush2.bf16.msra.mxu0 %v1385
    %1522 = vmatprep.subr.bf16.mxu0 0
    %1523 = vmatpush2.bf16.msra.mxu0 %v1384
    %1524 = vmatprep.subr.bf16.mxu0 0
    %1525 = vmatpush2.bf16.msra.mxu0 %v1383
    %1526 = vmatprep.subr.bf16.mxu0 0
    %1527 = vmatpush2.bf16.msra.mxu0 %v1382
    %1528 = vmatprep.subr.bf16.mxu0 0
    %1529 = vmatpush2.bf16.msra.mxu0 %v1381
    %1530 = vmatprep.subr.bf16.mxu0 0
    %1531 = vmatpush2.bf16.msra.mxu0 %v1380
    %1532 = vmatprep.mubr.bf16.mxu0 %v1109
    %1533 = vmatmul.mubr.bf16.gmra.mxu0 %v1108
    %v1534 = vpop.f32.mrf.mxu0
    %v1535 = vadd.f32 0.0, %v1534
    %v1536 = vpop.f32.mrf.mxu0
    %v1537 = vpop.f32.mrf.mxu0
    %v1538 = vpop.f32.mrf.mxu0
    %1539 = vdwg.mxu0
    %1540 = vmatprep.subr.bf16.mxu0 0
    %1541 = vmatpush1.bf16.msra.mxu0 %v1395
    %1542 = vmatprep.subr.bf16.mxu0 0
    %1543 = vmatpush1.bf16.msra.mxu0 %v1394
    %1544 = vmatprep.subr.bf16.mxu0 0
    %1545 = vmatpush1.bf16.msra.mxu0 %v1393
    %1546 = vmatprep.subr.bf16.mxu0 0
    %1547 = vmatpush1.bf16.msra.mxu0 %v1392
    %1548 = vmatprep.subr.bf16.mxu0 0
    %1549 = vmatpush1.bf16.msra.mxu0 %v1391
    %1550 = vmatprep.subr.bf16.mxu0 0
    %1551 = vmatpush1.bf16.msra.mxu0 %v1390
    %1552 = vmatprep.subr.bf16.mxu0 0
    %1553 = vmatpush1.bf16.msra.mxu0 %v1389
    %1554 = vmatprep.subr.bf16.mxu0 0
    %1555 = vmatpush1.bf16.msra.mxu0 %v1388
    %1556 = vmatprep.subr.bf16.mxu0 0
    %1557 = vmatpush2.bf16.msra.mxu0 %v1403
    %1558 = vmatprep.subr.bf16.mxu0 0
    %1559 = vmatpush2.bf16.msra.mxu0 %v1402
    %1560 = vmatprep.subr.bf16.mxu0 0
    %1561 = vmatpush2.bf16.msra.mxu0 %v1401
    %1562 = vmatprep.subr.bf16.mxu0 0
    %1563 = vmatpush2.bf16.msra.mxu0 %v1400
    %1564 = vmatprep.subr.bf16.mxu0 0
    %1565 = vmatpush2.bf16.msra.mxu0 %v1399
    %1566 = vmatprep.subr.bf16.mxu0 0
    %1567 = vmatpush2.bf16.msra.mxu0 %v1398
    %1568 = vmatprep.subr.bf16.mxu0 0
    %1569 = vmatpush2.bf16.msra.mxu0 %v1397
    %1570 = vmatprep.subr.bf16.mxu0 0
    %1571 = vmatpush2.bf16.msra.mxu0 %v1396
    %1572 = vmatprep.mubr.bf16.mxu0 %v1111
    %1573 = vmatmul.mubr.bf16.gmra.mxu0 %v1110
    %v1574 = vpop.f32.mrf.mxu0
    %v1575 = vadd.f32 %v1535, %v1574
    %v1576 = vpop.f32.mrf.mxu0
    %v1577 = vpop.f32.mrf.mxu0
    %v1578 = vpop.f32.mrf.mxu0
    %1579 = vdwg.mxu0
    %1580 = vmatprep.subr.bf16.mxu0 0
    %1581 = vmatpush1.bf16.msra.mxu0 %v1411
    %1582 = vmatprep.subr.bf16.mxu0 0
    %1583 = vmatpush1.bf16.msra.mxu0 %v1410
    %1584 = vmatprep.subr.bf16.mxu0 0
    %1585 = vmatpush1.bf16.msra.mxu0 %v1409
    %1586 = vmatprep.subr.bf16.mxu0 0
    %1587 = vmatpush1.bf16.msra.mxu0 %v1408
    %1588 = vmatprep.subr.bf16.mxu0 0
    %1589 = vmatpush1.bf16.msra.mxu0 %v1407
    %1590 = vmatprep.subr.bf16.mxu0 0
    %1591 = vmatpush1.bf16.msra.mxu0 %v1406
    %1592 = vmatprep.subr.bf16.mxu0 0
    %1593 = vmatpush1.bf16.msra.mxu0 %v1405
    %1594 = vmatprep.subr.bf16.mxu0 0
    %1595 = vmatpush1.bf16.msra.mxu0 %v1404
    %1596 = vmatprep.subr.bf16.mxu0 0
    %1597 = vmatpush2.bf16.msra.mxu0 %v1419
    %1598 = vmatprep.subr.bf16.mxu0 0
    %1599 = vmatpush2.bf16.msra.mxu0 %v1418
    %1600 = vmatprep.subr.bf16.mxu0 0
    %1601 = vmatpush2.bf16.msra.mxu0 %v1417
    %1602 = vmatprep.subr.bf16.mxu0 0
    %1603 = vmatpush2.bf16.msra.mxu0 %v1416
    %1604 = vmatprep.subr.bf16.mxu0 0
    %1605 = vmatpush2.bf16.msra.mxu0 %v1415
    %1606 = vmatprep.subr.bf16.mxu0 0
    %1607 = vmatpush2.bf16.msra.mxu0 %v1414
    %1608 = vmatprep.subr.bf16.mxu0 0
    %1609 = vmatpush2.bf16.msra.mxu0 %v1413
    %1610 = vmatprep.subr.bf16.mxu0 0
    %1611 = vmatpush2.bf16.msra.mxu0 %v1412
    %1612 = vmatprep.mubr.bf16.mxu0 %v1113
    %1613 = vmatmul.mubr.bf16.gmra.mxu0 %v1112
    %v1614 = vpop.f32.mrf.mxu0
    %v1615 = vadd.f32 %v1575, %v1614
    %v1616 = vpop.f32.mrf.mxu0
    %v1617 = vpop.f32.mrf.mxu0
    %v1618 = vpop.f32.mrf.mxu0
    %1619 = vdwg.mxu0
    %1620 = vmatprep.subr.bf16.mxu0 0
    %1621 = vmatpush1.bf16.msra.mxu0 %v1427
    %1622 = vmatprep.subr.bf16.mxu0 0
    %1623 = vmatpush1.bf16.msra.mxu0 %v1426
    %1624 = vmatprep.subr.bf16.mxu0 0
    %1625 = vmatpush1.bf16.msra.mxu0 %v1425
    %1626 = vmatprep.subr.bf16.mxu0 0
    %1627 = vmatpush1.bf16.msra.mxu0 %v1424
    %1628 = vmatprep.subr.bf16.mxu0 0
    %1629 = vmatpush1.bf16.msra.mxu0 %v1423
    %1630 = vmatprep.subr.bf16.mxu0 0
    %1631 = vmatpush1.bf16.msra.mxu0 %v1422
    %1632 = vmatprep.subr.bf16.mxu0 0
    %1633 = vmatpush1.bf16.msra.mxu0 %v1421
    %1634 = vmatprep.subr.bf16.mxu0 0
    %1635 = vmatpush1.bf16.msra.mxu0 %v1420
    %1636 = vmatprep.subr.bf16.mxu0 0
    %1637 = vmatpush2.bf16.msra.mxu0 %v1435
    %1638 = vmatprep.subr.bf16.mxu0 0
    %1639 = vmatpush2.bf16.msra.mxu0 %v1434
    %1640 = vmatprep.subr.bf16.mxu0 0
    %1641 = vmatpush2.bf16.msra.mxu0 %v1433
    %1642 = vmatprep.subr.bf16.mxu0 0
    %1643 = vmatpush2.bf16.msra.mxu0 %v1432
    %1644 = vmatprep.subr.bf16.mxu0 0
    %1645 = vmatpush2.bf16.msra.mxu0 %v1431
    %1646 = vmatprep.subr.bf16.mxu0 0
    %1647 = vmatpush2.bf16.msra.mxu0 %v1430
    %1648 = vmatprep.subr.bf16.mxu0 0
    %1649 = vmatpush2.bf16.msra.mxu0 %v1429
    %1650 = vmatprep.subr.bf16.mxu0 0
    %1651 = vmatpush2.bf16.msra.mxu0 %v1428
    %1652 = vmatprep.mubr.bf16.mxu0 %v1115
    %1653 = vmatmul.mubr.bf16.gmra.mxu0 %v1114
    %v1654 = vpop.f32.mrf.mxu0
    %v1655 = vadd.f32 %v1615, %v1654
    %v1656 = vpop.f32.mrf.mxu0
    %v1657 = vpop.f32.mrf.mxu0
    %v1658 = vpop.f32.mrf.mxu0
    %1659 = vdwg.mxu0
    %v1660 = vrot.slane %v1655, 4
    %v1661 = vadd.f32 %v1655, %v1660
    %v1662 = vrot.slane %v1661, 2
    %v1663 = vadd.f32 %v1661, %v1662
    %v1664 = vrot.slane %v1663, 1
    %v1665 = vadd.f32 %v1663, %v1664
    %v1666 = vmul.f32 %v1655, %v1655
    %v1667 = vrot.slane %v1666, 4
    %v1668 = vadd.f32 %v1666, %v1667
    %v1669 = vrot.slane %v1668, 2
    %v1670 = vadd.f32 %v1668, %v1669
    %v1671 = vrot.slane %v1670, 1
    %v1672 = vadd.f32 %v1670, %v1671
    %v1673 = vmul.f32 %v1665, 0.125
    %v1674 = vmul.f32 %v1672, 0.125
    %v1675 = vmul.f32 %v1673, %v1673
    %v1676 = vsub.f32 %v1674, %v1675
    %v1677 = vsub.f32 %v1655, %v1673
    %v1678 = vadd.f32 %v1676, 1e-05
    %v1679 = vrsqrt.pop %v1678
    %v1680 = vmul.f32 %v1677, %v1679
    %v1681 = vmul.f32 %v1680, %v133
    %v1682 = vadd.f32 %v1681, %v135
    %vm1683 = vcmp.gt.f32.partialorder %v1682, 0.0
    %v1684 = vmul.f32 %v1682, 0.2
    %v1685 = vsel %vm1683, %v1682, %v1684
    %v1686 = vld [vmem:[#allocation11] sm:$0xff]
    %v1687 = vld [vmem:[#allocation11 + $0x8] sm:$0xff]
    %v1688 = vld [vmem:[#allocation11 + $0x10] sm:$0xff]
    %v1689 = vld [vmem:[#allocation11 + $0x18] sm:$0xff]
    %v1690 = vld [vmem:[#allocation11 + $0x20] sm:$0xff]
    %v1691 = vld [vmem:[#allocation11 + $0x28] sm:$0xff]
    %v1692 = vld [vmem:[#allocation11 + $0x30] sm:$0xff]
    %v1693 = vld [vmem:[#allocation11 + $0x38] sm:$0xff]
    %v1694 = vld [vmem:[#allocation11 + $0x40] sm:$0xff]
    %v1695 = vld [vmem:[#allocation11 + $0x48] sm:$0xff]
    %v1696 = vld [vmem:[#allocation11 + $0x50] sm:$0xff]
    %v1697 = vld [vmem:[#allocation11 + $0x58] sm:$0xff]
    %v1698 = vld [vmem:[#allocation11 + $0x60] sm:$0xff]
    %v1699 = vld [vmem:[#allocation11 + $0x68] sm:$0xff]
    %v1700 = vld [vmem:[#allocation11 + $0x70] sm:$0xff]
    %v1701 = vld [vmem:[#allocation11 + $0x78] sm:$0xff]
    %v1702 = vpack.c.bf16 %v1685, %v1685
    %v1704 = vlaneseq
    %v1705 = vshrl.u32 %v1704, 7
    %v1706 = vsub.s32 0, %v1705
    %v1707 = vrot.slane %v138, %v1706
    %v1708 = vlaneseq
    %v1709 = vshrl.u32 %v1708, 7
    %v1710 = vsub.s32 1, %v1709
    %v1711 = vrot.slane %v138, %v1710
    %v1730 = vunpack.c.l.b16 %v1686
    %v1731 = vunpack.c.h.b16 %v1686
    %v1732 = vunpack.c.l.b16 %v1687
    %v1733 = vunpack.c.h.b16 %v1687
    %v1734 = vunpack.c.l.b16 %v1688
    %v1735 = vunpack.c.h.b16 %v1688
    %v1736 = vunpack.c.l.b16 %v1689
    %v1737 = vunpack.c.h.b16 %v1689
    %v1738 = vunpack.c.l.b16 %v1690
    %v1739 = vunpack.c.h.b16 %v1690
    %v1740 = vunpack.c.l.b16 %v1691
    %v1741 = vunpack.c.h.b16 %v1691
    %v1742 = vunpack.c.l.b16 %v1692
    %v1743 = vunpack.c.h.b16 %v1692
    %v1744 = vunpack.c.l.b16 %v1693
    %v1745 = vunpack.c.h.b16 %v1693
    %v1746 = vunpack.c.l.b16 %v1694
    %v1747 = vunpack.c.h.b16 %v1694
    %v1748 = vunpack.c.l.b16 %v1695
    %v1749 = vunpack.c.h.b16 %v1695
    %v1750 = vunpack.c.l.b16 %v1696
    %v1751 = vunpack.c.h.b16 %v1696
    %v1752 = vunpack.c.l.b16 %v1697
    %v1753 = vunpack.c.h.b16 %v1697
    %v1754 = vunpack.c.l.b16 %v1698
    %v1755 = vunpack.c.h.b16 %v1698
    %v1756 = vunpack.c.l.b16 %v1699
    %v1757 = vunpack.c.h.b16 %v1699
    %v1758 = vunpack.c.l.b16 %v1700
    %v1759 = vunpack.c.h.b16 %v1700
    %v1760 = vunpack.c.l.b16 %v1701
    %v1761 = vunpack.c.h.b16 %v1701
    %v1762 = vpack.c.b16 %v1732, %v1730
    %v1763 = vpack.c.b16 %v1733, %v1731
    %v1764 = vpack.c.b16 %v1736, %v1734
    %v1765 = vpack.c.b16 %v1737, %v1735
    %v1766 = vpack.c.b16 %v1740, %v1738
    %v1767 = vpack.c.b16 %v1741, %v1739
    %v1768 = vpack.c.b16 %v1744, %v1742
    %v1769 = vpack.c.b16 %v1745, %v1743
    %v1770 = vpack.c.b16 %v1748, %v1746
    %v1771 = vpack.c.b16 %v1749, %v1747
    %v1772 = vpack.c.b16 %v1752, %v1750
    %v1773 = vpack.c.b16 %v1753, %v1751
    %v1774 = vpack.c.b16 %v1756, %v1754
    %v1775 = vpack.c.b16 %v1757, %v1755
    %v1776 = vpack.c.b16 %v1760, %v1758
    %v1777 = vpack.c.b16 %v1761, %v1759
    %1794 = vmatprep.subr.bf16.mxu0 %v1777
    %1795 = vmatpush1.bf16.msra.mxu0 %v1776
    %1796 = vmatprep.subr.bf16.mxu0 %v1775
    %1797 = vmatpush1.bf16.msra.mxu0 %v1774
    %1798 = vmatprep.subr.bf16.mxu0 %v1773
    %1799 = vmatpush1.bf16.msra.mxu0 %v1772
    %1800 = vmatprep.subr.bf16.mxu0 %v1771
    %1801 = vmatpush1.bf16.msra.mxu0 %v1770
    %1802 = vmatprep.subr.bf16.mxu0 %v1769
    %1803 = vmatpush1.bf16.msra.mxu0 %v1768
    %1804 = vmatprep.subr.bf16.mxu0 %v1767
    %1805 = vmatpush1.bf16.msra.mxu0 %v1766
    %1806 = vmatprep.subr.bf16.mxu0 %v1765
    %1807 = vmatpush1.bf16.msra.mxu0 %v1764
    %1808 = vmatprep.subr.bf16.mxu0 %v1763
    %1809 = vmatpush1.bf16.msra.mxu0 %v1762
    %1810 = vmatprep.subr.bf16.mxu0 0
    %1811 = vmatpush2.bf16.msra.mxu0 0
    %1812 = vmatprep.subr.bf16.mxu0 0
    %1813 = vmatpush2.bf16.msra.mxu0 0
    %1814 = vmatprep.subr.bf16.mxu0 0
    %1815 = vmatpush2.bf16.msra.mxu0 0
    %1816 = vmatprep.subr.bf16.mxu0 0
    %1817 = vmatpush2.bf16.msra.mxu0 0
    %1818 = vmatprep.subr.bf16.mxu0 0
    %1819 = vmatpush2.bf16.msra.mxu0 0
    %1820 = vmatprep.subr.bf16.mxu0 0
    %1821 = vmatpush2.bf16.msra.mxu0 0
    %1822 = vmatprep.subr.bf16.mxu0 0
    %1823 = vmatpush2.bf16.msra.mxu0 0
    %1824 = vmatprep.subr.bf16.mxu0 0
    %1825 = vmatpush2.bf16.msra.mxu0 0
    %1826 = vmatprep.mubr.bf16.mxu0 0
    %1827 = vmatmul.mubr.bf16.gmra.mxu0 %v1702
    %v1828 = vpop.f32.mrf.mxu0
    %v1829 = vadd.f32 %v1707, %v1828
    %v1830 = vpop.f32.mrf.mxu0
    %v1831 = vadd.f32 %v1711, %v1830
    %v1832 = vpop.f32.mrf.mxu0
    %v1833 = vpop.f32.mrf.mxu0
    %1834 = vdwg.mxu0
    %v1835 = vmul.f32 %v1831, 1.442695
    %v1836 = vpow.pop %v1835
    %v1837 = vld [vmem:[%s1] sm:$0xff]
    %v1838 = vmul.f32 %v1836, %v1837
    %v1839 = vadd.f32 %v1829, %v1838
    %s1840 = smul.u32 4, 16
    %s1841 = smul.u32 %s1840, 1
    %s1842 = sshll.u32 %s1841, 4
    %1843 = dma.done [#allocation5], %s1842
    %v1844 = vld [vmem:[#allocation2] sm:$0xf]
    %v1845 = vld [vmem:[#allocation2 + $0x4] sm:$0xf]
    %v1846 = vld [vmem:[#allocation2 + $0x8] sm:$0xf]
    %v1847 = vld [vmem:[#allocation2 + $0xc] sm:$0xf]
    %v1848 = vld [vmem:[#allocation2 + $0x10] sm:$0xf]
    %v1849 = vld [vmem:[#allocation2 + $0x14] sm:$0xf]
    %v1850 = vld [vmem:[#allocation2 + $0x18] sm:$0xf]
    %v1851 = vld [vmem:[#allocation2 + $0x1c] sm:$0xf]
    %v1852 = vld [vmem:[#allocation2 + $0x20] sm:$0xf]
    %v1853 = vld [vmem:[#allocation2 + $0x24] sm:$0xf]
    %v1854 = vld [vmem:[#allocation2 + $0x28] sm:$0xf]
    %v1855 = vld [vmem:[#allocation2 + $0x2c] sm:$0xf]
    %v1856 = vld [vmem:[#allocation2 + $0x30] sm:$0xf]
    %v1857 = vld [vmem:[#allocation2 + $0x34] sm:$0xf]
    %v1858 = vld [vmem:[#allocation2 + $0x38] sm:$0xf]
    %v1859 = vld [vmem:[#allocation2 + $0x3c] sm:$0xf]
    %v1860 = vpack.c.bf16 %v1839, %v1839
    %v1877 = vunpack.c.l.b16 %v1844
    %v1878 = vunpack.c.l.b16 %v1845
    %v1879 = vunpack.c.l.b16 %v1846
    %v1880 = vunpack.c.l.b16 %v1847
    %v1881 = vunpack.c.l.b16 %v1848
    %v1882 = vunpack.c.l.b16 %v1849
    %v1883 = vunpack.c.l.b16 %v1850
    %v1884 = vunpack.c.l.b16 %v1851
    %v1885 = vunpack.c.l.b16 %v1852
    %v1886 = vunpack.c.l.b16 %v1853
    %v1887 = vunpack.c.l.b16 %v1854
    %v1888 = vunpack.c.l.b16 %v1855
    %v1889 = vunpack.c.l.b16 %v1856
    %v1890 = vunpack.c.l.b16 %v1857
    %v1891 = vunpack.c.l.b16 %v1858
    %v1892 = vunpack.c.l.b16 %v1859
    %v1893 = vpack.c.b16 %v1878, %v1877
    %v1894 = vpack.c.b16 %v1880, %v1879
    %v1895 = vpack.c.b16 %v1882, %v1881
    %v1896 = vpack.c.b16 %v1884, %v1883
    %v1897 = vpack.c.b16 %v1886, %v1885
    %v1898 = vpack.c.b16 %v1888, %v1887
    %v1899 = vpack.c.b16 %v1890, %v1889
    %v1900 = vpack.c.b16 %v1892, %v1891
    %1909 = vmatprep.subr.bf16.mxu0 0
    %1910 = vmatpush1.bf16.msra.mxu0 %v1900
    %1911 = vmatprep.subr.bf16.mxu0 0
    %1912 = vmatpush1.bf16.msra.mxu0 %v1899
    %1913 = vmatprep.subr.bf16.mxu0 0
    %1914 = vmatpush1.bf16.msra.mxu0 %v1898
    %1915 = vmatprep.subr.bf16.mxu0 0
    %1916 = vmatpush1.bf16.msra.mxu0 %v1897
    %1917 = vmatprep.subr.bf16.mxu0 0
    %1918 = vmatpush1.bf16.msra.mxu0 %v1896
    %1919 = vmatprep.subr.bf16.mxu0 0
    %1920 = vmatpush1.bf16.msra.mxu0 %v1895
    %1921 = vmatprep.subr.bf16.mxu0 0
    %1922 = vmatpush1.bf16.msra.mxu0 %v1894
    %1923 = vmatprep.subr.bf16.mxu0 0
    %1924 = vmatpush1.bf16.msra.mxu0 %v1893
    %1925 = vmatprep.subr.bf16.mxu0 0
    %1926 = vmatpush2.bf16.msra.mxu0 0
    %1927 = vmatprep.subr.bf16.mxu0 0
    %1928 = vmatpush2.bf16.msra.mxu0 0
    %1929 = vmatprep.subr.bf16.mxu0 0
    %1930 = vmatpush2.bf16.msra.mxu0 0
    %1931 = vmatprep.subr.bf16.mxu0 0
    %1932 = vmatpush2.bf16.msra.mxu0 0
    %1933 = vmatprep.subr.bf16.mxu0 0
    %1934 = vmatpush2.bf16.msra.mxu0 0
    %1935 = vmatprep.subr.bf16.mxu0 0
    %1936 = vmatpush2.bf16.msra.mxu0 0
    %1937 = vmatprep.subr.bf16.mxu0 0
    %1938 = vmatpush2.bf16.msra.mxu0 0
    %1939 = vmatprep.subr.bf16.mxu0 0
    %1940 = vmatpush2.bf16.msra.mxu0 0
    %1941 = vmatprep.mubr.bf16.mxu0 0
    %1942 = vmatmul.mubr.bf16.gmra.mxu0 %v1860
    %v1943 = vpop.f32.mrf.mxu0
    %v1944 = vadd.f32 0.0, %v1943
    %v1945 = vpop.f32.mrf.mxu0
    %v1946 = vpop.f32.mrf.mxu0
    %v1947 = vpop.f32.mrf.mxu0
    %1948 = vdwg.mxu0
    %v1949 = vrot.slane %v1944, 4
    %v1950 = vadd.f32 %v1944, %v1949
    %v1951 = vrot.slane %v1950, 2
    %v1952 = vadd.f32 %v1950, %v1951
    %v1953 = vrot.slane %v1952, 1
    %v1954 = vadd.f32 %v1952, %v1953
    %v1955 = vmul.f32 %v1944, %v1944
    %v1956 = vrot.slane %v1955, 4
    %v1957 = vadd.f32 %v1955, %v1956
    %v1958 = vrot.slane %v1957, 2
    %v1959 = vadd.f32 %v1957, %v1958
    %v1960 = vrot.slane %v1959, 1
    %v1961 = vadd.f32 %v1959, %v1960
    %v1962 = vmul.f32 %v1954, 0.125
    %v1963 = vmul.f32 %v1961, 0.125
    %v1964 = vmul.f32 %v1962, %v1962
    %v1965 = vsub.f32 %v1963, %v1964
    %v1966 = vsub.f32 %v1944, %v1962
    %v1967 = vadd.f32 %v1965, 1e-05
    %v1968 = vrsqrt.pop %v1967
    %v1969 = vmul.f32 %v1966, %v1968
    %v1970 = vmul.f32 %v1969, %v134
    %v1971 = vadd.f32 %v1970, %v136
    %vm1972 = vcmp.gt.f32.partialorder %v1971, 0.0
    %v1973 = vmul.f32 %v1971, 0.2
    %v1974 = vsel %vm1972, %v1971, %v1973
    %s1975 = smul.u32 %s1840, 8
    %s1976 = sshll.u32 %s1975, 4
    %1977 = dma.done %s94, %s1976
    %v1978 = vld [vmem:[#allocation3] sm:$0xff]
    %v1979 = vld [vmem:[#allocation3 + $0x8] sm:$0xff]
    %v1980 = vld [vmem:[#allocation3 + $0x10] sm:$0xff]
    %v1981 = vld [vmem:[#allocation3 + $0x18] sm:$0xff]
    %v1982 = vld [vmem:[#allocation3 + $0x20] sm:$0xff]
    %v1983 = vld [vmem:[#allocation3 + $0x28] sm:$0xff]
    %v1984 = vld [vmem:[#allocation3 + $0x30] sm:$0xff]
    %v1985 = vld [vmem:[#allocation3 + $0x38] sm:$0xff]
    %v1986 = vld [vmem:[#allocation3 + $0x40] sm:$0xff]
    %v1987 = vld [vmem:[#allocation3 + $0x48] sm:$0xff]
    %v1988 = vld [vmem:[#allocation3 + $0x50] sm:$0xff]
    %v1989 = vld [vmem:[#allocation3 + $0x58] sm:$0xff]
    %v1990 = vld [vmem:[#allocation3 + $0x60] sm:$0xff]
    %v1991 = vld [vmem:[#allocation3 + $0x68] sm:$0xff]
    %v1992 = vld [vmem:[#allocation3 + $0x70] sm:$0xff]
    %v1993 = vld [vmem:[#allocation3 + $0x78] sm:$0xff]
    %v1994 = vld [vmem:[#allocation3 + $0x80] sm:$0xff]
    %v1995 = vld [vmem:[#allocation3 + $0x88] sm:$0xff]
    %v1996 = vld [vmem:[#allocation3 + $0x90] sm:$0xff]
    %v1997 = vld [vmem:[#allocation3 + $0x98] sm:$0xff]
    %v1998 = vld [vmem:[#allocation3 + $0xa0] sm:$0xff]
    %v1999 = vld [vmem:[#allocation3 + $0xa8] sm:$0xff]
    %v2000 = vld [vmem:[#allocation3 + $0xb0] sm:$0xff]
    %v2001 = vld [vmem:[#allocation3 + $0xb8] sm:$0xff]
    %v2002 = vld [vmem:[#allocation3 + $0xc0] sm:$0xff]
    %v2003 = vld [vmem:[#allocation3 + $0xc8] sm:$0xff]
    %v2004 = vld [vmem:[#allocation3 + $0xd0] sm:$0xff]
    %v2005 = vld [vmem:[#allocation3 + $0xd8] sm:$0xff]
    %v2006 = vld [vmem:[#allocation3 + $0xe0] sm:$0xff]
    %v2007 = vld [vmem:[#allocation3 + $0xe8] sm:$0xff]
    %v2008 = vld [vmem:[#allocation3 + $0xf0] sm:$0xff]
    %v2009 = vld [vmem:[#allocation3 + $0xf8] sm:$0xff]
    %v2010 = vld [vmem:[#allocation3 + $0x100] sm:$0xff]
    %v2011 = vld [vmem:[#allocation3 + $0x108] sm:$0xff]
    %v2012 = vld [vmem:[#allocation3 + $0x110] sm:$0xff]
    %v2013 = vld [vmem:[#allocation3 + $0x118] sm:$0xff]
    %v2014 = vld [vmem:[#allocation3 + $0x120] sm:$0xff]
    %v2015 = vld [vmem:[#allocation3 + $0x128] sm:$0xff]
    %v2016 = vld [vmem:[#allocation3 + $0x130] sm:$0xff]
    %v2017 = vld [vmem:[#allocation3 + $0x138] sm:$0xff]
    %v2018 = vld [vmem:[#allocation3 + $0x140] sm:$0xff]
    %v2019 = vld [vmem:[#allocation3 + $0x148] sm:$0xff]
    %v2020 = vld [vmem:[#allocation3 + $0x150] sm:$0xff]
    %v2021 = vld [vmem:[#allocation3 + $0x158] sm:$0xff]
    %v2022 = vld [vmem:[#allocation3 + $0x160] sm:$0xff]
    %v2023 = vld [vmem:[#allocation3 + $0x168] sm:$0xff]
    %v2024 = vld [vmem:[#allocation3 + $0x170] sm:$0xff]
    %v2025 = vld [vmem:[#allocation3 + $0x178] sm:$0xff]
    %v2026 = vld [vmem:[#allocation3 + $0x180] sm:$0xff]
    %v2027 = vld [vmem:[#allocation3 + $0x188] sm:$0xff]
    %v2028 = vld [vmem:[#allocation3 + $0x190] sm:$0xff]
    %v2029 = vld [vmem:[#allocation3 + $0x198] sm:$0xff]
    %v2030 = vld [vmem:[#allocation3 + $0x1a0] sm:$0xff]
    %v2031 = vld [vmem:[#allocation3 + $0x1a8] sm:$0xff]
    %v2032 = vld [vmem:[#allocation3 + $0x1b0] sm:$0xff]
    %v2033 = vld [vmem:[#allocation3 + $0x1b8] sm:$0xff]
    %v2034 = vld [vmem:[#allocation3 + $0x1c0] sm:$0xff]
    %v2035 = vld [vmem:[#allocation3 + $0x1c8] sm:$0xff]
    %v2036 = vld [vmem:[#allocation3 + $0x1d0] sm:$0xff]
    %v2037 = vld [vmem:[#allocation3 + $0x1d8] sm:$0xff]
    %v2038 = vld [vmem:[#allocation3 + $0x1e0] sm:$0xff]
    %v2039 = vld [vmem:[#allocation3 + $0x1e8] sm:$0xff]
    %v2040 = vld [vmem:[#allocation3 + $0x1f0] sm:$0xff]
    %v2041 = vld [vmem:[#allocation3 + $0x1f8] sm:$0xff]
    %v2042 = vpack.c.bf16 %v1974, %v1974
    %v2107 = vunpack.c.l.b16 %v1978
    %v2108 = vunpack.c.h.b16 %v1978
    %v2109 = vunpack.c.l.b16 %v1979
    %v2110 = vunpack.c.h.b16 %v1979
    %v2111 = vunpack.c.l.b16 %v1980
    %v2112 = vunpack.c.h.b16 %v1980
    %v2113 = vunpack.c.l.b16 %v1981
    %v2114 = vunpack.c.h.b16 %v1981
    %v2115 = vunpack.c.l.b16 %v1982
    %v2116 = vunpack.c.h.b16 %v1982
    %v2117 = vunpack.c.l.b16 %v1983
    %v2118 = vunpack.c.h.b16 %v1983
    %v2119 = vunpack.c.l.b16 %v1984
    %v2120 = vunpack.c.h.b16 %v1984
    %v2121 = vunpack.c.l.b16 %v1985
    %v2122 = vunpack.c.h.b16 %v1985
    %v2123 = vunpack.c.l.b16 %v1986
    %v2124 = vunpack.c.h.b16 %v1986
    %v2125 = vunpack.c.l.b16 %v1987
    %v2126 = vunpack.c.h.b16 %v1987
    %v2127 = vunpack.c.l.b16 %v1988
    %v2128 = vunpack.c.h.b16 %v1988
    %v2129 = vunpack.c.l.b16 %v1989
    %v2130 = vunpack.c.h.b16 %v1989
    %v2131 = vunpack.c.l.b16 %v1990
    %v2132 = vunpack.c.h.b16 %v1990
    %v2133 = vunpack.c.l.b16 %v1991
    %v2134 = vunpack.c.h.b16 %v1991
    %v2135 = vunpack.c.l.b16 %v1992
    %v2136 = vunpack.c.h.b16 %v1992
    %v2137 = vunpack.c.l.b16 %v1993
    %v2138 = vunpack.c.h.b16 %v1993
    %v2139 = vunpack.c.l.b16 %v1994
    %v2140 = vunpack.c.h.b16 %v1994
    %v2141 = vunpack.c.l.b16 %v1995
    %v2142 = vunpack.c.h.b16 %v1995
    %v2143 = vunpack.c.l.b16 %v1996
    %v2144 = vunpack.c.h.b16 %v1996
    %v2145 = vunpack.c.l.b16 %v1997
    %v2146 = vunpack.c.h.b16 %v1997
    %v2147 = vunpack.c.l.b16 %v1998
    %v2148 = vunpack.c.h.b16 %v1998
    %v2149 = vunpack.c.l.b16 %v1999
    %v2150 = vunpack.c.h.b16 %v1999
    %v2151 = vunpack.c.l.b16 %v2000
    %v2152 = vunpack.c.h.b16 %v2000
    %v2153 = vunpack.c.l.b16 %v2001
    %v2154 = vunpack.c.h.b16 %v2001
    %v2155 = vunpack.c.l.b16 %v2002
    %v2156 = vunpack.c.h.b16 %v2002
    %v2157 = vunpack.c.l.b16 %v2003
    %v2158 = vunpack.c.h.b16 %v2003
    %v2159 = vunpack.c.l.b16 %v2004
    %v2160 = vunpack.c.h.b16 %v2004
    %v2161 = vunpack.c.l.b16 %v2005
    %v2162 = vunpack.c.h.b16 %v2005
    %v2163 = vunpack.c.l.b16 %v2006
    %v2164 = vunpack.c.h.b16 %v2006
    %v2165 = vunpack.c.l.b16 %v2007
    %v2166 = vunpack.c.h.b16 %v2007
    %v2167 = vunpack.c.l.b16 %v2008
    %v2168 = vunpack.c.h.b16 %v2008
    %v2169 = vunpack.c.l.b16 %v2009
    %v2170 = vunpack.c.h.b16 %v2009
    %v2171 = vunpack.c.l.b16 %v2010
    %v2172 = vunpack.c.h.b16 %v2010
    %v2173 = vunpack.c.l.b16 %v2011
    %v2174 = vunpack.c.h.b16 %v2011
    %v2175 = vunpack.c.l.b16 %v2012
    %v2176 = vunpack.c.h.b16 %v2012
    %v2177 = vunpack.c.l.b16 %v2013
    %v2178 = vunpack.c.h.b16 %v2013
    %v2179 = vunpack.c.l.b16 %v2014
    %v2180 = vunpack.c.h.b16 %v2014
    %v2181 = vunpack.c.l.b16 %v2015
    %v2182 = vunpack.c.h.b16 %v2015
    %v2183 = vunpack.c.l.b16 %v2016
    %v2184 = vunpack.c.h.b16 %v2016
    %v2185 = vunpack.c.l.b16 %v2017
    %v2186 = vunpack.c.h.b16 %v2017
    %v2187 = vunpack.c.l.b16 %v2018
    %v2188 = vunpack.c.h.b16 %v2018
    %v2189 = vunpack.c.l.b16 %v2019
    %v2190 = vunpack.c.h.b16 %v2019
    %v2191 = vunpack.c.l.b16 %v2020
    %v2192 = vunpack.c.h.b16 %v2020
    %v2193 = vunpack.c.l.b16 %v2021
    %v2194 = vunpack.c.h.b16 %v2021
    %v2195 = vunpack.c.l.b16 %v2022
    %v2196 = vunpack.c.h.b16 %v2022
    %v2197 = vunpack.c.l.b16 %v2023
    %v2198 = vunpack.c.h.b16 %v2023
    %v2199 = vunpack.c.l.b16 %v2024
    %v2200 = vunpack.c.h.b16 %v2024
    %v2201 = vunpack.c.l.b16 %v2025
    %v2202 = vunpack.c.h.b16 %v2025
    %v2203 = vunpack.c.l.b16 %v2026
    %v2204 = vunpack.c.h.b16 %v2026
    %v2205 = vunpack.c.l.b16 %v2027
    %v2206 = vunpack.c.h.b16 %v2027
    %v2207 = vunpack.c.l.b16 %v2028
    %v2208 = vunpack.c.h.b16 %v2028
    %v2209 = vunpack.c.l.b16 %v2029
    %v2210 = vunpack.c.h.b16 %v2029
    %v2211 = vunpack.c.l.b16 %v2030
    %v2212 = vunpack.c.h.b16 %v2030
    %v2213 = vunpack.c.l.b16 %v2031
    %v2214 = vunpack.c.h.b16 %v2031
    %v2215 = vunpack.c.l.b16 %v2032
    %v2216 = vunpack.c.h.b16 %v2032
    %v2217 = vunpack.c.l.b16 %v2033
    %v2218 = vunpack.c.h.b16 %v2033
    %v2219 = vunpack.c.l.b16 %v2034
    %v2220 = vunpack.c.h.b16 %v2034
    %v2221 = vunpack.c.l.b16 %v2035
    %v2222 = vunpack.c.h.b16 %v2035
    %v2223 = vunpack.c.l.b16 %v2036
    %v2224 = vunpack.c.h.b16 %v2036
    %v2225 = vunpack.c.l.b16 %v2037
    %v2226 = vunpack.c.h.b16 %v2037
    %v2227 = vunpack.c.l.b16 %v2038
    %v2228 = vunpack.c.h.b16 %v2038
    %v2229 = vunpack.c.l.b16 %v2039
    %v2230 = vunpack.c.h.b16 %v2039
    %v2231 = vunpack.c.l.b16 %v2040
    %v2232 = vunpack.c.h.b16 %v2040
    %v2233 = vunpack.c.l.b16 %v2041
    %v2234 = vunpack.c.h.b16 %v2041
    %v2235 = vpack.c.b16 %v2115, %v2107
    %v2236 = vpack.c.b16 %v2116, %v2108
    %v2237 = vpack.c.b16 %v2117, %v2109
    %v2238 = vpack.c.b16 %v2118, %v2110
    %v2239 = vpack.c.b16 %v2119, %v2111
    %v2240 = vpack.c.b16 %v2120, %v2112
    %v2241 = vpack.c.b16 %v2121, %v2113
    %v2242 = vpack.c.b16 %v2122, %v2114
    %v2243 = vpack.c.b16 %v2131, %v2123
    %v2244 = vpack.c.b16 %v2132, %v2124
    %v2245 = vpack.c.b16 %v2133, %v2125
    %v2246 = vpack.c.b16 %v2134, %v2126
    %v2247 = vpack.c.b16 %v2135, %v2127
    %v2248 = vpack.c.b16 %v2136, %v2128
    %v2249 = vpack.c.b16 %v2137, %v2129
    %v2250 = vpack.c.b16 %v2138, %v2130
    %v2251 = vpack.c.b16 %v2147, %v2139
    %v2252 = vpack.c.b16 %v2148, %v2140
    %v2253 = vpack.c.b16 %v2149, %v2141
    %v2254 = vpack.c.b16 %v2150, %v2142
    %v2255 = vpack.c.b16 %v2151, %v2143
    %v2256 = vpack.c.b16 %v2152, %v2144
    %v2257 = vpack.c.b16 %v2153, %v2145
    %v2258 = vpack.c.b16 %v2154, %v2146
    %v2259 = vpack.c.b16 %v2163, %v2155
    %v2260 = vpack.c.b16 %v2164, %v2156
    %v2261 = vpack.c.b16 %v2165, %v2157
    %v2262 = vpack.c.b16 %v2166, %v2158
    %v2263 = vpack.c.b16 %v2167, %v2159
    %v2264 = vpack.c.b16 %v2168, %v2160
    %v2265 = vpack.c.b16 %v2169, %v2161
    %v2266 = vpack.c.b16 %v2170, %v2162
    %v2267 = vpack.c.b16 %v2179, %v2171
    %v2268 = vpack.c.b16 %v2180, %v2172
    %v2269 = vpack.c.b16 %v2181, %v2173
    %v2270 = vpack.c.b16 %v2182, %v2174
    %v2271 = vpack.c.b16 %v2183, %v2175
    %v2272 = vpack.c.b16 %v2184, %v2176
    %v2273 = vpack.c.b16 %v2185, %v2177
    %v2274 = vpack.c.b16 %v2186, %v2178
    %v2275 = vpack.c.b16 %v2195, %v2187
    %v2276 = vpack.c.b16 %v2196, %v2188
    %v2277 = vpack.c.b16 %v2197, %v2189
    %v2278 = vpack.c.b16 %v2198, %v2190
    %v2279 = vpack.c.b16 %v2199, %v2191
    %v2280 = vpack.c.b16 %v2200, %v2192
    %v2281 = vpack.c.b16 %v2201, %v2193
    %v2282 = vpack.c.b16 %v2202, %v2194
    %v2283 = vpack.c.b16 %v2211, %v2203
    %v2284 = vpack.c.b16 %v2212, %v2204
    %v2285 = vpack.c.b16 %v2213, %v2205
    %v2286 = vpack.c.b16 %v2214, %v2206
    %v2287 = vpack.c.b16 %v2215, %v2207
    %v2288 = vpack.c.b16 %v2216, %v2208
    %v2289 = vpack.c.b16 %v2217, %v2209
    %v2290 = vpack.c.b16 %v2218, %v2210
    %v2291 = vpack.c.b16 %v2227, %v2219
    %v2292 = vpack.c.b16 %v2228, %v2220
    %v2293 = vpack.c.b16 %v2229, %v2221
    %v2294 = vpack.c.b16 %v2230, %v2222
    %v2295 = vpack.c.b16 %v2231, %v2223
    %v2296 = vpack.c.b16 %v2232, %v2224
    %v2297 = vpack.c.b16 %v2233, %v2225
    %v2298 = vpack.c.b16 %v2234, %v2226
    %2363 = vmatprep.subr.bf16.mxu0 %v2292
    %2364 = vmatpush1.bf16.msra.mxu0 %v2291
    %2365 = vmatprep.subr.bf16.mxu0 %v2284
    %2366 = vmatpush1.bf16.msra.mxu0 %v2283
    %2367 = vmatprep.subr.bf16.mxu0 %v2276
    %2368 = vmatpush1.bf16.msra.mxu0 %v2275
    %2369 = vmatprep.subr.bf16.mxu0 %v2268
    %2370 = vmatpush1.bf16.msra.mxu0 %v2267
    %2371 = vmatprep.subr.bf16.mxu0 %v2260
    %2372 = vmatpush1.bf16.msra.mxu0 %v2259
    %2373 = vmatprep.subr.bf16.mxu0 %v2252
    %2374 = vmatpush1.bf16.msra.mxu0 %v2251
    %2375 = vmatprep.subr.bf16.mxu0 %v2244
    %2376 = vmatpush1.bf16.msra.mxu0 %v2243
    %2377 = vmatprep.subr.bf16.mxu0 %v2236
    %2378 = vmatpush1.bf16.msra.mxu0 %v2235
    %2379 = vmatprep.subr.bf16.mxu0 0
    %2380 = vmatpush2.bf16.msra.mxu0 0
    %2381 = vmatprep.subr.bf16.mxu0 0
    %2382 = vmatpush2.bf16.msra.mxu0 0
    %2383 = vmatprep.subr.bf16.mxu0 0
    %2384 = vmatpush2.bf16.msra.mxu0 0
    %2385 = vmatprep.subr.bf16.mxu0 0
    %2386 = vmatpush2.bf16.msra.mxu0 0
    %2387 = vmatprep.subr.bf16.mxu0 0
    %2388 = vmatpush2.bf16.msra.mxu0 0
    %2389 = vmatprep.subr.bf16.mxu0 0
    %2390 = vmatpush2.bf16.msra.mxu0 0
    %2391 = vmatprep.subr.bf16.mxu0 0
    %2392 = vmatpush2.bf16.msra.mxu0 0
    %2393 = vmatprep.subr.bf16.mxu0 0
    %2394 = vmatpush2.bf16.msra.mxu0 0
    %2395 = vmatprep.mubr.bf16.mxu0 0
    %2396 = vmatmul.mubr.bf16.gmra.mxu0 %v2042
    %v2397 = vpop.f32.mrf.mxu0
    %v2398 = vadd.f32 0.0, %v2397
    %v2399 = vpop.f32.mrf.mxu0
    %v2400 = vadd.f32 0.0, %v2399
    %v2401 = vpop.f32.mrf.mxu0
    %v2402 = vpop.f32.mrf.mxu0
    %2403 = vdwg.mxu0
    %2404 = vmatprep.subr.bf16.mxu0 %v2294
    %2405 = vmatpush1.bf16.msra.mxu0 %v2293
    %2406 = vmatprep.subr.bf16.mxu0 %v2286
    %2407 = vmatpush1.bf16.msra.mxu0 %v2285
    %2408 = vmatprep.subr.bf16.mxu0 %v2278
    %2409 = vmatpush1.bf16.msra.mxu0 %v2277
    %2410 = vmatprep.subr.bf16.mxu0 %v2270
    %2411 = vmatpush1.bf16.msra.mxu0 %v2269
    %2412 = vmatprep.subr.bf16.mxu0 %v2262
    %2413 = vmatpush1.bf16.msra.mxu0 %v2261
    %2414 = vmatprep.subr.bf16.mxu0 %v2254
    %2415 = vmatpush1.bf16.msra.mxu0 %v2253
    %2416 = vmatprep.subr.bf16.mxu0 %v2246
    %2417 = vmatpush1.bf16.msra.mxu0 %v2245
    %2418 = vmatprep.subr.bf16.mxu0 %v2238
    %2419 = vmatpush1.bf16.msra.mxu0 %v2237
    %2420 = vmatprep.subr.bf16.mxu0 0
    %2421 = vmatpush2.bf16.msra.mxu0 0
    %2422 = vmatprep.subr.bf16.mxu0 0
    %2423 = vmatpush2.bf16.msra.mxu0 0
    %2424 = vmatprep.subr.bf16.mxu0 0
    %2425 = vmatpush2.bf16.msra.mxu0 0
    %2426 = vmatprep.subr.bf16.mxu0 0
    %2427 = vmatpush2.bf16.msra.mxu0 0
    %2428 = vmatprep.subr.bf16.mxu0 0
    %2429 = vmatpush2.bf16.msra.mxu0 0
    %2430 = vmatprep.subr.bf16.mxu0 0
    %2431 = vmatpush2.bf16.msra.mxu0 0
    %2432 = vmatprep.subr.bf16.mxu0 0
    %2433 = vmatpush2.bf16.msra.mxu0 0
    %2434 = vmatprep.subr.bf16.mxu0 0
    %2435 = vmatpush2.bf16.msra.mxu0 0
    %2436 = vmatprep.mubr.bf16.mxu0 0
    %2437 = vmatmul.mubr.bf16.gmra.mxu0 %v2042
    %v2438 = vpop.f32.mrf.mxu0
    %v2439 = vadd.f32 0.0, %v2438
    %v2440 = vpop.f32.mrf.mxu0
    %v2441 = vadd.f32 0.0, %v2440
    %v2442 = vpop.f32.mrf.mxu0
    %v2443 = vpop.f32.mrf.mxu0
    %2444 = vdwg.mxu0
    %2445 = vmatprep.subr.bf16.mxu0 %v2296
    %2446 = vmatpush1.bf16.msra.mxu0 %v2295
    %2447 = vmatprep.subr.bf16.mxu0 %v2288
    %2448 = vmatpush1.bf16.msra.mxu0 %v2287
    %2449 = vmatprep.subr.bf16.mxu0 %v2280
    %2450 = vmatpush1.bf16.msra.mxu0 %v2279
    %2451 = vmatprep.subr.bf16.mxu0 %v2272
    %2452 = vmatpush1.bf16.msra.mxu0 %v2271
    %2453 = vmatprep.subr.bf16.mxu0 %v2264
    %2454 = vmatpush1.bf16.msra.mxu0 %v2263
    %2455 = vmatprep.subr.bf16.mxu0 %v2256
    %2456 = vmatpush1.bf16.msra.mxu0 %v2255
    %2457 = vmatprep.subr.bf16.mxu0 %v2248
    %2458 = vmatpush1.bf16.msra.mxu0 %v2247
    %2459 = vmatprep.subr.bf16.mxu0 %v2240
    %2460 = vmatpush1.bf16.msra.mxu0 %v2239
    %2461 = vmatprep.subr.bf16.mxu0 0
    %2462 = vmatpush2.bf16.msra.mxu0 0
    %2463 = vmatprep.subr.bf16.mxu0 0
    %2464 = vmatpush2.bf16.msra.mxu0 0
    %2465 = vmatprep.subr.bf16.mxu0 0
    %2466 = vmatpush2.bf16.msra.mxu0 0
    %2467 = vmatprep.subr.bf16.mxu0 0
    %2468 = vmatpush2.bf16.msra.mxu0 0
    %2469 = vmatprep.subr.bf16.mxu0 0
    %2470 = vmatpush2.bf16.msra.mxu0 0
    %2471 = vmatprep.subr.bf16.mxu0 0
    %2472 = vmatpush2.bf16.msra.mxu0 0
    %2473 = vmatprep.subr.bf16.mxu0 0
    %2474 = vmatpush2.bf16.msra.mxu0 0
    %2475 = vmatprep.subr.bf16.mxu0 0
    %2476 = vmatpush2.bf16.msra.mxu0 0
    %2477 = vmatprep.mubr.bf16.mxu0 0
    %2478 = vmatmul.mubr.bf16.gmra.mxu0 %v2042
    %v2479 = vpop.f32.mrf.mxu0
    %v2480 = vadd.f32 0.0, %v2479
    %v2481 = vpop.f32.mrf.mxu0
    %v2482 = vadd.f32 0.0, %v2481
    %v2483 = vpop.f32.mrf.mxu0
    %v2484 = vpop.f32.mrf.mxu0
    %2485 = vdwg.mxu0
    %2486 = vmatprep.subr.bf16.mxu0 %v2298
    %2487 = vmatpush1.bf16.msra.mxu0 %v2297
    %2488 = vmatprep.subr.bf16.mxu0 %v2290
    %2489 = vmatpush1.bf16.msra.mxu0 %v2289
    %2490 = vmatprep.subr.bf16.mxu0 %v2282
    %2491 = vmatpush1.bf16.msra.mxu0 %v2281
    %2492 = vmatprep.subr.bf16.mxu0 %v2274
    %2493 = vmatpush1.bf16.msra.mxu0 %v2273
    %2494 = vmatprep.subr.bf16.mxu0 %v2266
    %2495 = vmatpush1.bf16.msra.mxu0 %v2265
    %2496 = vmatprep.subr.bf16.mxu0 %v2258
    %2497 = vmatpush1.bf16.msra.mxu0 %v2257
    %2498 = vmatprep.subr.bf16.mxu0 %v2250
    %2499 = vmatpush1.bf16.msra.mxu0 %v2249
    %2500 = vmatprep.subr.bf16.mxu0 %v2242
    %2501 = vmatpush1.bf16.msra.mxu0 %v2241
    %2502 = vmatprep.subr.bf16.mxu0 0
    %2503 = vmatpush2.bf16.msra.mxu0 0
    %2504 = vmatprep.subr.bf16.mxu0 0
    %2505 = vmatpush2.bf16.msra.mxu0 0
    %2506 = vmatprep.subr.bf16.mxu0 0
    %2507 = vmatpush2.bf16.msra.mxu0 0
    %2508 = vmatprep.subr.bf16.mxu0 0
    %2509 = vmatpush2.bf16.msra.mxu0 0
    %2510 = vmatprep.subr.bf16.mxu0 0
    %2511 = vmatpush2.bf16.msra.mxu0 0
    %2512 = vmatprep.subr.bf16.mxu0 0
    %2513 = vmatpush2.bf16.msra.mxu0 0
    %2514 = vmatprep.subr.bf16.mxu0 0
    %2515 = vmatpush2.bf16.msra.mxu0 0
    %2516 = vmatprep.subr.bf16.mxu0 0
    %2517 = vmatpush2.bf16.msra.mxu0 0
    %2518 = vmatprep.mubr.bf16.mxu0 0
    %2519 = vmatmul.mubr.bf16.gmra.mxu0 %v2042
    %v2520 = vpop.f32.mrf.mxu0
    %v2521 = vadd.f32 0.0, %v2520
    %v2522 = vpop.f32.mrf.mxu0
    %v2523 = vadd.f32 0.0, %v2522
    %v2524 = vpop.f32.mrf.mxu0
    %v2525 = vpop.f32.mrf.mxu0
    %2526 = vdwg.mxu0
    %v2527 = vrot.slane %v2398, 4
    %v2528 = vadd.f32 %v2398, %v2527
    %v2529 = vrot.slane %v2528, 2
    %v2530 = vadd.f32 %v2528, %v2529
    %v2531 = vrot.slane %v2530, 1
    %v2532 = vadd.f32 %v2530, %v2531
    %v2533 = vrot.slane %v2400, 4
    %v2534 = vadd.f32 %v2400, %v2533
    %v2535 = vrot.slane %v2534, 2
    %v2536 = vadd.f32 %v2534, %v2535
    %v2537 = vrot.slane %v2536, 1
    %v2538 = vadd.f32 %v2536, %v2537
    %v2539 = vrot.slane %v2439, 4
    %v2540 = vadd.f32 %v2439, %v2539
    %v2541 = vrot.slane %v2540, 2
    %v2542 = vadd.f32 %v2540, %v2541
    %v2543 = vrot.slane %v2542, 1
    %v2544 = vadd.f32 %v2542, %v2543
    %v2545 = vrot.slane %v2441, 4
    %v2546 = vadd.f32 %v2441, %v2545
    %v2547 = vrot.slane %v2546, 2
    %v2548 = vadd.f32 %v2546, %v2547
    %v2549 = vrot.slane %v2548, 1
    %v2550 = vadd.f32 %v2548, %v2549
    %v2551 = vrot.slane %v2480, 4
    %v2552 = vadd.f32 %v2480, %v2551
    %v2553 = vrot.slane %v2552, 2
    %v2554 = vadd.f32 %v2552, %v2553
    %v2555 = vrot.slane %v2554, 1
    %v2556 = vadd.f32 %v2554, %v2555
    %v2557 = vrot.slane %v2482, 4
    %v2558 = vadd.f32 %v2482, %v2557
    %v2559 = vrot.slane %v2558, 2
    %v2560 = vadd.f32 %v2558, %v2559
    %v2561 = vrot.slane %v2560, 1
    %v2562 = vadd.f32 %v2560, %v2561
    %v2563 = vrot.slane %v2521, 4
    %v2564 = vadd.f32 %v2521, %v2563
    %v2565 = vrot.slane %v2564, 2
    %v2566 = vadd.f32 %v2564, %v2565
    %v2567 = vrot.slane %v2566, 1
    %v2568 = vadd.f32 %v2566, %v2567
    %v2569 = vrot.slane %v2523, 4
    %v2570 = vadd.f32 %v2523, %v2569
    %v2571 = vrot.slane %v2570, 2
    %v2572 = vadd.f32 %v2570, %v2571
    %v2573 = vrot.slane %v2572, 1
    %v2574 = vadd.f32 %v2572, %v2573
    %v2575 = vmul.f32 %v2398, %v2398
    %v2576 = vmul.f32 %v2400, %v2400
    %v2577 = vmul.f32 %v2439, %v2439
    %v2578 = vmul.f32 %v2441, %v2441
    %v2579 = vmul.f32 %v2480, %v2480
    %v2580 = vmul.f32 %v2482, %v2482
    %v2581 = vmul.f32 %v2521, %v2521
    %v2582 = vmul.f32 %v2523, %v2523
    %v2583 = vrot.slane %v2575, 4
    %v2584 = vadd.f32 %v2575, %v2583
    %v2585 = vrot.slane %v2584, 2
    %v2586 = vadd.f32 %v2584, %v2585
    %v2587 = vrot.slane %v2586, 1
    %v2588 = vadd.f32 %v2586, %v2587
    %v2589 = vrot.slane %v2576, 4
    %v2590 = vadd.f32 %v2576, %v2589
    %v2591 = vrot.slane %v2590, 2
    %v2592 = vadd.f32 %v2590, %v2591
    %v2593 = vrot.slane %v2592, 1
    %v2594 = vadd.f32 %v2592, %v2593
    %v2595 = vrot.slane %v2577, 4
    %v2596 = vadd.f32 %v2577, %v2595
    %v2597 = vrot.slane %v2596, 2
    %v2598 = vadd.f32 %v2596, %v2597
    %v2599 = vrot.slane %v2598, 1
    %v2600 = vadd.f32 %v2598, %v2599
    %v2601 = vrot.slane %v2578, 4
    %v2602 = vadd.f32 %v2578, %v2601
    %v2603 = vrot.slane %v2602, 2
    %v2604 = vadd.f32 %v2602, %v2603
    %v2605 = vrot.slane %v2604, 1
    %v2606 = vadd.f32 %v2604, %v2605
    %v2607 = vrot.slane %v2579, 4
    %v2608 = vadd.f32 %v2579, %v2607
    %v2609 = vrot.slane %v2608, 2
    %v2610 = vadd.f32 %v2608, %v2609
    %v2611 = vrot.slane %v2610, 1
    %v2612 = vadd.f32 %v2610, %v2611
    %v2613 = vrot.slane %v2580, 4
    %v2614 = vadd.f32 %v2580, %v2613
    %v2615 = vrot.slane %v2614, 2
    %v2616 = vadd.f32 %v2614, %v2615
    %v2617 = vrot.slane %v2616, 1
    %v2618 = vadd.f32 %v2616, %v2617
    %v2619 = vrot.slane %v2581, 4
    %v2620 = vadd.f32 %v2581, %v2619
    %v2621 = vrot.slane %v2620, 2
    %v2622 = vadd.f32 %v2620, %v2621
    %v2623 = vrot.slane %v2622, 1
    %v2624 = vadd.f32 %v2622, %v2623
    %v2625 = vrot.slane %v2582, 4
    %v2626 = vadd.f32 %v2582, %v2625
    %v2627 = vrot.slane %v2626, 2
    %v2628 = vadd.f32 %v2626, %v2627
    %v2629 = vrot.slane %v2628, 1
    %v2630 = vadd.f32 %v2628, %v2629
    %v2631 = vmul.f32 %v2532, 0.125
    %v2632 = vmul.f32 %v2538, 0.125
    %v2633 = vmul.f32 %v2544, 0.125
    %v2634 = vmul.f32 %v2550, 0.125
    %v2635 = vmul.f32 %v2556, 0.125
    %v2636 = vmul.f32 %v2562, 0.125
    %v2637 = vmul.f32 %v2568, 0.125
    %v2638 = vmul.f32 %v2574, 0.125
    %v2639 = vmul.f32 %v2588, 0.125
    %v2640 = vmul.f32 %v2594, 0.125
    %v2641 = vmul.f32 %v2600, 0.125
    %v2642 = vmul.f32 %v2606, 0.125
    %v2643 = vmul.f32 %v2612, 0.125
    %v2644 = vmul.f32 %v2618, 0.125
    %v2645 = vmul.f32 %v2624, 0.125
    %v2646 = vmul.f32 %v2630, 0.125
    %v2647 = vmul.f32 %v2631, %v2631
    %v2648 = vmul.f32 %v2632, %v2632
    %v2649 = vmul.f32 %v2633, %v2633
    %v2650 = vmul.f32 %v2634, %v2634
    %v2651 = vmul.f32 %v2635, %v2635
    %v2652 = vmul.f32 %v2636, %v2636
    %v2653 = vmul.f32 %v2637, %v2637
    %v2654 = vmul.f32 %v2638, %v2638
    %v2655 = vsub.f32 %v2639, %v2647
    %v2656 = vsub.f32 %v2640, %v2648
    %v2657 = vsub.f32 %v2641, %v2649
    %v2658 = vsub.f32 %v2642, %v2650
    %v2659 = vsub.f32 %v2643, %v2651
    %v2660 = vsub.f32 %v2644, %v2652
    %v2661 = vsub.f32 %v2645, %v2653
    %v2662 = vsub.f32 %v2646, %v2654
    %v2663 = vsub.f32 %v2398, %v2631
    %v2664 = vsub.f32 %v2400, %v2632
    %v2665 = vsub.f32 %v2439, %v2633
    %v2666 = vsub.f32 %v2441, %v2634
    %v2667 = vsub.f32 %v2480, %v2635
    %v2668 = vsub.f32 %v2482, %v2636
    %v2669 = vsub.f32 %v2521, %v2637
    %v2670 = vsub.f32 %v2523, %v2638
    %v2671 = vadd.f32 %v2655, 1e-05
    %v2672 = vadd.f32 %v2656, 1e-05
    %v2673 = vadd.f32 %v2657, 1e-05
    %v2674 = vadd.f32 %v2658, 1e-05
    %v2675 = vadd.f32 %v2659, 1e-05
    %v2676 = vadd.f32 %v2660, 1e-05
    %v2677 = vadd.f32 %v2661, 1e-05
    %v2678 = vadd.f32 %v2662, 1e-05
    %v2679 = vrsqrt.pop %v2671
    %v2680 = vrsqrt.pop %v2672
    %v2681 = vrsqrt.pop %v2673
    %v2682 = vrsqrt.pop %v2674
    %v2683 = vrsqrt.pop %v2675
    %v2684 = vrsqrt.pop %v2676
    %v2685 = vrsqrt.pop %v2677
    %v2686 = vrsqrt.pop %v2678
    %v2687 = vmul.f32 %v2663, %v2679
    %v2688 = vmul.f32 %v2664, %v2680
    %v2689 = vmul.f32 %v2665, %v2681
    %v2690 = vmul.f32 %v2666, %v2682
    %v2691 = vmul.f32 %v2667, %v2683
    %v2692 = vmul.f32 %v2668, %v2684
    %v2693 = vmul.f32 %v2669, %v2685
    %v2694 = vmul.f32 %v2670, %v2686
    %v2696 = vlaneseq
    %v2697 = vshrl.u32 %v2696, 7
    %v2698 = vsub.s32 0, %v2697
    %v2699 = vrot.slane %v128, %v2698
    %v2700 = vlaneseq
    %v2701 = vshrl.u32 %v2700, 7
    %v2702 = vsub.s32 1, %v2701
    %v2703 = vrot.slane %v128, %v2702
    %v2704 = vlaneseq
    %v2705 = vshrl.u32 %v2704, 7
    %v2706 = vsub.s32 2, %v2705
    %v2707 = vrot.slane %v128, %v2706
    %v2708 = vlaneseq
    %v2709 = vshrl.u32 %v2708, 7
    %v2710 = vsub.s32 3, %v2709
    %v2711 = vrot.slane %v128, %v2710
    %v2712 = vlaneseq
    %v2713 = vshrl.u32 %v2712, 7
    %v2714 = vsub.s32 4, %v2713
    %v2715 = vrot.slane %v128, %v2714
    %v2716 = vlaneseq
    %v2717 = vshrl.u32 %v2716, 7
    %v2718 = vsub.s32 5, %v2717
    %v2719 = vrot.slane %v128, %v2718
    %v2720 = vlaneseq
    %v2721 = vshrl.u32 %v2720, 7
    %v2722 = vsub.s32 6, %v2721
    %v2723 = vrot.slane %v128, %v2722
    %v2724 = vlaneseq
    %v2725 = vshrl.u32 %v2724, 7
    %v2726 = vsub.s32 7, %v2725
    %v2727 = vrot.slane %v128, %v2726
    %v2736 = vmul.f32 %v2687, %v2699
    %v2737 = vmul.f32 %v2688, %v2703
    %v2738 = vmul.f32 %v2689, %v2707
    %v2739 = vmul.f32 %v2690, %v2711
    %v2740 = vmul.f32 %v2691, %v2715
    %v2741 = vmul.f32 %v2692, %v2719
    %v2742 = vmul.f32 %v2693, %v2723
    %v2743 = vmul.f32 %v2694, %v2727
    %v2745 = vlaneseq
    %v2746 = vshrl.u32 %v2745, 7
    %v2747 = vsub.s32 0, %v2746
    %v2748 = vrot.slane %v132, %v2747
    %v2749 = vlaneseq
    %v2750 = vshrl.u32 %v2749, 7
    %v2751 = vsub.s32 1, %v2750
    %v2752 = vrot.slane %v132, %v2751
    %v2753 = vlaneseq
    %v2754 = vshrl.u32 %v2753, 7
    %v2755 = vsub.s32 2, %v2754
    %v2756 = vrot.slane %v132, %v2755
    %v2757 = vlaneseq
    %v2758 = vshrl.u32 %v2757, 7
    %v2759 = vsub.s32 3, %v2758
    %v2760 = vrot.slane %v132, %v2759
    %v2761 = vlaneseq
    %v2762 = vshrl.u32 %v2761, 7
    %v2763 = vsub.s32 4, %v2762
    %v2764 = vrot.slane %v132, %v2763
    %v2765 = vlaneseq
    %v2766 = vshrl.u32 %v2765, 7
    %v2767 = vsub.s32 5, %v2766
    %v2768 = vrot.slane %v132, %v2767
    %v2769 = vlaneseq
    %v2770 = vshrl.u32 %v2769, 7
    %v2771 = vsub.s32 6, %v2770
    %v2772 = vrot.slane %v132, %v2771
    %v2773 = vlaneseq
    %v2774 = vshrl.u32 %v2773, 7
    %v2775 = vsub.s32 7, %v2774
    %v2776 = vrot.slane %v132, %v2775
    %v2785 = vadd.f32 %v2736, %v2748
    %v2786 = vadd.f32 %v2737, %v2752
    %v2787 = vadd.f32 %v2738, %v2756
    %v2788 = vadd.f32 %v2739, %v2760
    %v2789 = vadd.f32 %v2740, %v2764
    %v2790 = vadd.f32 %v2741, %v2768
    %v2791 = vadd.f32 %v2742, %v2772
    %v2792 = vadd.f32 %v2743, %v2776
    %vm2793 = vcmp.gt.f32.partialorder %v2785, 0.0
    %vm2794 = vcmp.gt.f32.partialorder %v2786, 0.0
    %vm2795 = vcmp.gt.f32.partialorder %v2787, 0.0
    %vm2796 = vcmp.gt.f32.partialorder %v2788, 0.0
    %vm2797 = vcmp.gt.f32.partialorder %v2789, 0.0
    %vm2798 = vcmp.gt.f32.partialorder %v2790, 0.0
    %vm2799 = vcmp.gt.f32.partialorder %v2791, 0.0
    %vm2800 = vcmp.gt.f32.partialorder %v2792, 0.0
    %v2801 = vmul.f32 %v2785, 0.2
    %v2802 = vmul.f32 %v2786, 0.2
    %v2803 = vmul.f32 %v2787, 0.2
    %v2804 = vmul.f32 %v2788, 0.2
    %v2805 = vmul.f32 %v2789, 0.2
    %v2806 = vmul.f32 %v2790, 0.2
    %v2807 = vmul.f32 %v2791, 0.2
    %v2808 = vmul.f32 %v2792, 0.2
    %v2809 = vsel %vm2793, %v2785, %v2801
    %v2810 = vsel %vm2794, %v2786, %v2802
    %v2811 = vsel %vm2795, %v2787, %v2803
    %v2812 = vsel %vm2796, %v2788, %v2804
    %v2813 = vsel %vm2797, %v2789, %v2805
    %v2814 = vsel %vm2798, %v2790, %v2806
    %v2815 = vsel %vm2799, %v2791, %v2807
    %v2816 = vsel %vm2800, %v2792, %v2808
    %s2817 = smul.u32 4, 128
    %s2818 = smul.u32 %s2817, 1
    %s2819 = sshll.u32 %s2818, 4
    %2820 = dma.done %s106, %s2819
    %v2821 = vld [vmem:[#allocation4] sm:$0xf]
    %v2822 = vld [vmem:[#allocation4 + $0x4] sm:$0xf]
    %v2823 = vld [vmem:[#allocation4 + $0x8] sm:$0xf]
    %v2824 = vld [vmem:[#allocation4 + $0xc] sm:$0xf]
    %v2825 = vld [vmem:[#allocation4 + $0x10] sm:$0xf]
    %v2826 = vld [vmem:[#allocation4 + $0x14] sm:$0xf]
    %v2827 = vld [vmem:[#allocation4 + $0x18] sm:$0xf]
    %v2828 = vld [vmem:[#allocation4 + $0x1c] sm:$0xf]
    %v2829 = vld [vmem:[#allocation4 + $0x20] sm:$0xf]
    %v2830 = vld [vmem:[#allocation4 + $0x24] sm:$0xf]
    %v2831 = vld [vmem:[#allocation4 + $0x28] sm:$0xf]
    %v2832 = vld [vmem:[#allocation4 + $0x2c] sm:$0xf]
    %v2833 = vld [vmem:[#allocation4 + $0x30] sm:$0xf]
    %v2834 = vld [vmem:[#allocation4 + $0x34] sm:$0xf]
    %v2835 = vld [vmem:[#allocation4 + $0x38] sm:$0xf]
    %v2836 = vld [vmem:[#allocation4 + $0x3c] sm:$0xf]
    %v2837 = vld [vmem:[#allocation4 + $0x40] sm:$0xf]
    %v2838 = vld [vmem:[#allocation4 + $0x44] sm:$0xf]
    %v2839 = vld [vmem:[#allocation4 + $0x48] sm:$0xf]
    %v2840 = vld [vmem:[#allocation4 + $0x4c] sm:$0xf]
    %v2841 = vld [vmem:[#allocation4 + $0x50] sm:$0xf]
    %v2842 = vld [vmem:[#allocation4 + $0x54] sm:$0xf]
    %v2843 = vld [vmem:[#allocation4 + $0x58] sm:$0xf]
    %v2844 = vld [vmem:[#allocation4 + $0x5c] sm:$0xf]
    %v2845 = vld [vmem:[#allocation4 + $0x60] sm:$0xf]
    %v2846 = vld [vmem:[#allocation4 + $0x64] sm:$0xf]
    %v2847 = vld [vmem:[#allocation4 + $0x68] sm:$0xf]
    %v2848 = vld [vmem:[#allocation4 + $0x6c] sm:$0xf]
    %v2849 = vld [vmem:[#allocation4 + $0x70] sm:$0xf]
    %v2850 = vld [vmem:[#allocation4 + $0x74] sm:$0xf]
    %v2851 = vld [vmem:[#allocation4 + $0x78] sm:$0xf]
    %v2852 = vld [vmem:[#allocation4 + $0x7c] sm:$0xf]
    %v2853 = vld [vmem:[#allocation4 + $0x80] sm:$0xf]
    %v2854 = vld [vmem:[#allocation4 + $0x84] sm:$0xf]
    %v2855 = vld [vmem:[#allocation4 + $0x88] sm:$0xf]
    %v2856 = vld [vmem:[#allocation4 + $0x8c] sm:$0xf]
    %v2857 = vld [vmem:[#allocation4 + $0x90] sm:$0xf]
    %v2858 = vld [vmem:[#allocation4 + $0x94] sm:$0xf]
    %v2859 = vld [vmem:[#allocation4 + $0x98] sm:$0xf]
    %v2860 = vld [vmem:[#allocation4 + $0x9c] sm:$0xf]
    %v2861 = vld [vmem:[#allocation4 + $0xa0] sm:$0xf]
    %v2862 = vld [vmem:[#allocation4 + $0xa4] sm:$0xf]
    %v2863 = vld [vmem:[#allocation4 + $0xa8] sm:$0xf]
    %v2864 = vld [vmem:[#allocation4 + $0xac] sm:$0xf]
    %v2865 = vld [vmem:[#allocation4 + $0xb0] sm:$0xf]
    %v2866 = vld [vmem:[#allocation4 + $0xb4] sm:$0xf]
    %v2867 = vld [vmem:[#allocation4 + $0xb8] sm:$0xf]
    %v2868 = vld [vmem:[#allocation4 + $0xbc] sm:$0xf]
    %v2869 = vld [vmem:[#allocation4 + $0xc0] sm:$0xf]
    %v2870 = vld [vmem:[#allocation4 + $0xc4] sm:$0xf]
    %v2871 = vld [vmem:[#allocation4 + $0xc8] sm:$0xf]
    %v2872 = vld [vmem:[#allocation4 + $0xcc] sm:$0xf]
    %v2873 = vld [vmem:[#allocation4 + $0xd0] sm:$0xf]
    %v2874 = vld [vmem:[#allocation4 + $0xd4] sm:$0xf]
    %v2875 = vld [vmem:[#allocation4 + $0xd8] sm:$0xf]
    %v2876 = vld [vmem:[#allocation4 + $0xdc] sm:$0xf]
    %v2877 = vld [vmem:[#allocation4 + $0xe0] sm:$0xf]
    %v2878 = vld [vmem:[#allocation4 + $0xe4] sm:$0xf]
    %v2879 = vld [vmem:[#allocation4 + $0xe8] sm:$0xf]
    %v2880 = vld [vmem:[#allocation4 + $0xec] sm:$0xf]
    %v2881 = vld [vmem:[#allocation4 + $0xf0] sm:$0xf]
    %v2882 = vld [vmem:[#allocation4 + $0xf4] sm:$0xf]
    %v2883 = vld [vmem:[#allocation4 + $0xf8] sm:$0xf]
    %v2884 = vld [vmem:[#allocation4 + $0xfc] sm:$0xf]
    %v2885 = vld [vmem:[#allocation4 + $0x100] sm:$0xf]
    %v2886 = vld [vmem:[#allocation4 + $0x104] sm:$0xf]
    %v2887 = vld [vmem:[#allocation4 + $0x108] sm:$0xf]
    %v2888 = vld [vmem:[#allocation4 + $0x10c] sm:$0xf]
    %v2889 = vld [vmem:[#allocation4 + $0x110] sm:$0xf]
    %v2890 = vld [vmem:[#allocation4 + $0x114] sm:$0xf]
    %v2891 = vld [vmem:[#allocation4 + $0x118] sm:$0xf]
    %v2892 = vld [vmem:[#allocation4 + $0x11c] sm:$0xf]
    %v2893 = vld [vmem:[#allocation4 + $0x120] sm:$0xf]
    %v2894 = vld [vmem:[#allocation4 + $0x124] sm:$0xf]
    %v2895 = vld [vmem:[#allocation4 + $0x128] sm:$0xf]
    %v2896 = vld [vmem:[#allocation4 + $0x12c] sm:$0xf]
    %v2897 = vld [vmem:[#allocation4 + $0x130] sm:$0xf]
    %v2898 = vld [vmem:[#allocation4 + $0x134] sm:$0xf]
    %v2899 = vld [vmem:[#allocation4 + $0x138] sm:$0xf]
    %v2900 = vld [vmem:[#allocation4 + $0x13c] sm:$0xf]
    %v2901 = vld [vmem:[#allocation4 + $0x140] sm:$0xf]
    %v2902 = vld [vmem:[#allocation4 + $0x144] sm:$0xf]
    %v2903 = vld [vmem:[#allocation4 + $0x148] sm:$0xf]
    %v2904 = vld [vmem:[#allocation4 + $0x14c] sm:$0xf]
    %v2905 = vld [vmem:[#allocation4 + $0x150] sm:$0xf]
    %v2906 = vld [vmem:[#allocation4 + $0x154] sm:$0xf]
    %v2907 = vld [vmem:[#allocation4 + $0x158] sm:$0xf]
    %v2908 = vld [vmem:[#allocation4 + $0x15c] sm:$0xf]
    %v2909 = vld [vmem:[#allocation4 + $0x160] sm:$0xf]
    %v2910 = vld [vmem:[#allocation4 + $0x164] sm:$0xf]
    %v2911 = vld [vmem:[#allocation4 + $0x168] sm:$0xf]
    %v2912 = vld [vmem:[#allocation4 + $0x16c] sm:$0xf]
    %v2913 = vld [vmem:[#allocation4 + $0x170] sm:$0xf]
    %v2914 = vld [vmem:[#allocation4 + $0x174] sm:$0xf]
    %v2915 = vld [vmem:[#allocation4 + $0x178] sm:$0xf]
    %v2916 = vld [vmem:[#allocation4 + $0x17c] sm:$0xf]
    %v2917 = vld [vmem:[#allocation4 + $0x180] sm:$0xf]
    %v2918 = vld [vmem:[#allocation4 + $0x184] sm:$0xf]
    %v2919 = vld [vmem:[#allocation4 + $0x188] sm:$0xf]
    %v2920 = vld [vmem:[#allocation4 + $0x18c] sm:$0xf]
    %v2921 = vld [vmem:[#allocation4 + $0x190] sm:$0xf]
    %v2922 = vld [vmem:[#allocation4 + $0x194] sm:$0xf]
    %v2923 = vld [vmem:[#allocation4 + $0x198] sm:$0xf]
    %v2924 = vld [vmem:[#allocation4 + $0x19c] sm:$0xf]
    %v2925 = vld [vmem:[#allocation4 + $0x1a0] sm:$0xf]
    %v2926 = vld [vmem:[#allocation4 + $0x1a4] sm:$0xf]
    %v2927 = vld [vmem:[#allocation4 + $0x1a8] sm:$0xf]
    %v2928 = vld [vmem:[#allocation4 + $0x1ac] sm:$0xf]
    %v2929 = vld [vmem:[#allocation4 + $0x1b0] sm:$0xf]
    %v2930 = vld [vmem:[#allocation4 + $0x1b4] sm:$0xf]
    %v2931 = vld [vmem:[#allocation4 + $0x1b8] sm:$0xf]
    %v2932 = vld [vmem:[#allocation4 + $0x1bc] sm:$0xf]
    %v2933 = vld [vmem:[#allocation4 + $0x1c0] sm:$0xf]
    %v2934 = vld [vmem:[#allocation4 + $0x1c4] sm:$0xf]
    %v2935 = vld [vmem:[#allocation4 + $0x1c8] sm:$0xf]
    %v2936 = vld [vmem:[#allocation4 + $0x1cc] sm:$0xf]
    %v2937 = vld [vmem:[#allocation4 + $0x1d0] sm:$0xf]
    %v2938 = vld [vmem:[#allocation4 + $0x1d4] sm:$0xf]
    %v2939 = vld [vmem:[#allocation4 + $0x1d8] sm:$0xf]
    %v2940 = vld [vmem:[#allocation4 + $0x1dc] sm:$0xf]
    %v2941 = vld [vmem:[#allocation4 + $0x1e0] sm:$0xf]
    %v2942 = vld [vmem:[#allocation4 + $0x1e4] sm:$0xf]
    %v2943 = vld [vmem:[#allocation4 + $0x1e8] sm:$0xf]
    %v2944 = vld [vmem:[#allocation4 + $0x1ec] sm:$0xf]
    %v2945 = vld [vmem:[#allocation4 + $0x1f0] sm:$0xf]
    %v2946 = vld [vmem:[#allocation4 + $0x1f4] sm:$0xf]
    %v2947 = vld [vmem:[#allocation4 + $0x1f8] sm:$0xf]
    %v2948 = vld [vmem:[#allocation4 + $0x1fc] sm:$0xf]
    %v2949 = vpack.c.bf16 %v2809, %v2809
    %v2950 = vpack.c.bf16 %v2810, %v2810
    %v2951 = vpack.c.bf16 %v2811, %v2811
    %v2952 = vpack.c.bf16 %v2812, %v2812
    %v2953 = vpack.c.bf16 %v2813, %v2813
    %v2954 = vpack.c.bf16 %v2814, %v2814
    %v2955 = vpack.c.bf16 %v2815, %v2815
    %v2956 = vpack.c.bf16 %v2816, %v2816
    %v3085 = vunpack.c.l.b16 %v2821
    %v3086 = vunpack.c.l.b16 %v2822
    %v3087 = vunpack.c.l.b16 %v2823
    %v3088 = vunpack.c.l.b16 %v2824
    %v3089 = vunpack.c.l.b16 %v2825
    %v3090 = vunpack.c.l.b16 %v2826
    %v3091 = vunpack.c.l.b16 %v2827
    %v3092 = vunpack.c.l.b16 %v2828
    %v3093 = vunpack.c.l.b16 %v2829
    %v3094 = vunpack.c.l.b16 %v2830
    %v3095 = vunpack.c.l.b16 %v2831
    %v3096 = vunpack.c.l.b16 %v2832
    %v3097 = vunpack.c.l.b16 %v2833
    %v3098 = vunpack.c.l.b16 %v2834
    %v3099 = vunpack.c.l.b16 %v2835
    %v3100 = vunpack.c.l.b16 %v2836
    %v3101 = vunpack.c.l.b16 %v2837
    %v3102 = vunpack.c.l.b16 %v2838
    %v3103 = vunpack.c.l.b16 %v2839
    %v3104 = vunpack.c.l.b16 %v2840
    %v3105 = vunpack.c.l.b16 %v2841
    %v3106 = vunpack.c.l.b16 %v2842
    %v3107 = vunpack.c.l.b16 %v2843
    %v3108 = vunpack.c.l.b16 %v2844
    %v3109 = vunpack.c.l.b16 %v2845
    %v3110 = vunpack.c.l.b16 %v2846
    %v3111 = vunpack.c.l.b16 %v2847
    %v3112 = vunpack.c.l.b16 %v2848
    %v3113 = vunpack.c.l.b16 %v2849
    %v3114 = vunpack.c.l.b16 %v2850
    %v3115 = vunpack.c.l.b16 %v2851
    %v3116 = vunpack.c.l.b16 %v2852
    %v3117 = vunpack.c.l.b16 %v2853
    %v3118 = vunpack.c.l.b16 %v2854
    %v3119 = vunpack.c.l.b16 %v2855
    %v3120 = vunpack.c.l.b16 %v2856
    %v3121 = vunpack.c.l.b16 %v2857
    %v3122 = vunpack.c.l.b16 %v2858
    %v3123 = vunpack.c.l.b16 %v2859
    %v3124 = vunpack.c.l.b16 %v2860
    %v3125 = vunpack.c.l.b16 %v2861
    %v3126 = vunpack.c.l.b16 %v2862
    %v3127 = vunpack.c.l.b16 %v2863
    %v3128 = vunpack.c.l.b16 %v2864
    %v3129 = vunpack.c.l.b16 %v2865
    %v3130 = vunpack.c.l.b16 %v2866
    %v3131 = vunpack.c.l.b16 %v2867
    %v3132 = vunpack.c.l.b16 %v2868
    %v3133 = vunpack.c.l.b16 %v2869
    %v3134 = vunpack.c.l.b16 %v2870
    %v3135 = vunpack.c.l.b16 %v2871
    %v3136 = vunpack.c.l.b16 %v2872
    %v3137 = vunpack.c.l.b16 %v2873
    %v3138 = vunpack.c.l.b16 %v2874
    %v3139 = vunpack.c.l.b16 %v2875
    %v3140 = vunpack.c.l.b16 %v2876
    %v3141 = vunpack.c.l.b16 %v2877
    %v3142 = vunpack.c.l.b16 %v2878
    %v3143 = vunpack.c.l.b16 %v2879
    %v3144 = vunpack.c.l.b16 %v2880
    %v3145 = vunpack.c.l.b16 %v2881
    %v3146 = vunpack.c.l.b16 %v2882
    %v3147 = vunpack.c.l.b16 %v2883
    %v3148 = vunpack.c.l.b16 %v2884
    %v3149 = vunpack.c.l.b16 %v2885
    %v3150 = vunpack.c.l.b16 %v2886
    %v3151 = vunpack.c.l.b16 %v2887
    %v3152 = vunpack.c.l.b16 %v2888
    %v3153 = vunpack.c.l.b16 %v2889
    %v3154 = vunpack.c.l.b16 %v2890
    %v3155 = vunpack.c.l.b16 %v2891
    %v3156 = vunpack.c.l.b16 %v2892
    %v3157 = vunpack.c.l.b16 %v2893
    %v3158 = vunpack.c.l.b16 %v2894
    %v3159 = vunpack.c.l.b16 %v2895
    %v3160 = vunpack.c.l.b16 %v2896
    %v3161 = vunpack.c.l.b16 %v2897
    %v3162 = vunpack.c.l.b16 %v2898
    %v3163 = vunpack.c.l.b16 %v2899
    %v3164 = vunpack.c.l.b16 %v2900
    %v3165 = vunpack.c.l.b16 %v2901
    %v3166 = vunpack.c.l.b16 %v2902
    %v3167 = vunpack.c.l.b16 %v2903
    %v3168 = vunpack.c.l.b16 %v2904
    %v3169 = vunpack.c.l.b16 %v2905
    %v3170 = vunpack.c.l.b16 %v2906
    %v3171 = vunpack.c.l.b16 %v2907
    %v3172 = vunpack.c.l.b16 %v2908
    %v3173 = vunpack.c.l.b16 %v2909
    %v3174 = vunpack.c.l.b16 %v2910
    %v3175 = vunpack.c.l.b16 %v2911
    %v3176 = vunpack.c.l.b16 %v2912
    %v3177 = vunpack.c.l.b16 %v2913
    %v3178 = vunpack.c.l.b16 %v2914
    %v3179 = vunpack.c.l.b16 %v2915
    %v3180 = vunpack.c.l.b16 %v2916
    %v3181 = vunpack.c.l.b16 %v2917
    %v3182 = vunpack.c.l.b16 %v2918
    %v3183 = vunpack.c.l.b16 %v2919
    %v3184 = vunpack.c.l.b16 %v2920
    %v3185 = vunpack.c.l.b16 %v2921
    %v3186 = vunpack.c.l.b16 %v2922
    %v3187 = vunpack.c.l.b16 %v2923
    %v3188 = vunpack.c.l.b16 %v2924
    %v3189 = vunpack.c.l.b16 %v2925
    %v3190 = vunpack.c.l.b16 %v2926
    %v3191 = vunpack.c.l.b16 %v2927
    %v3192 = vunpack.c.l.b16 %v2928
    %v3193 = vunpack.c.l.b16 %v2929
    %v3194 = vunpack.c.l.b16 %v2930
    %v3195 = vunpack.c.l.b16 %v2931
    %v3196 = vunpack.c.l.b16 %v2932
    %v3197 = vunpack.c.l.b16 %v2933
    %v3198 = vunpack.c.l.b16 %v2934
    %v3199 = vunpack.c.l.b16 %v2935
    %v3200 = vunpack.c.l.b16 %v2936
    %v3201 = vunpack.c.l.b16 %v2937
    %v3202 = vunpack.c.l.b16 %v2938
    %v3203 = vunpack.c.l.b16 %v2939
    %v3204 = vunpack.c.l.b16 %v2940
    %v3205 = vunpack.c.l.b16 %v2941
    %v3206 = vunpack.c.l.b16 %v2942
    %v3207 = vunpack.c.l.b16 %v2943
    %v3208 = vunpack.c.l.b16 %v2944
    %v3209 = vunpack.c.l.b16 %v2945
    %v3210 = vunpack.c.l.b16 %v2946
    %v3211 = vunpack.c.l.b16 %v2947
    %v3212 = vunpack.c.l.b16 %v2948
    %v3213 = vpack.c.b16 %v3086, %v3085
    %v3214 = vpack.c.b16 %v3088, %v3087
    %v3215 = vpack.c.b16 %v3090, %v3089
    %v3216 = vpack.c.b16 %v3092, %v3091
    %v3217 = vpack.c.b16 %v3094, %v3093
    %v3218 = vpack.c.b16 %v3096, %v3095
    %v3219 = vpack.c.b16 %v3098, %v3097
    %v3220 = vpack.c.b16 %v3100, %v3099
    %v3221 = vpack.c.b16 %v3102, %v3101
    %v3222 = vpack.c.b16 %v3104, %v3103
    %v3223 = vpack.c.b16 %v3106, %v3105
    %v3224 = vpack.c.b16 %v3108, %v3107
    %v3225 = vpack.c.b16 %v3110, %v3109
    %v3226 = vpack.c.b16 %v3112, %v3111
    %v3227 = vpack.c.b16 %v3114, %v3113
    %v3228 = vpack.c.b16 %v3116, %v3115
    %v3229 = vpack.c.b16 %v3118, %v3117
    %v3230 = vpack.c.b16 %v3120, %v3119
    %v3231 = vpack.c.b16 %v3122, %v3121
    %v3232 = vpack.c.b16 %v3124, %v3123
    %v3233 = vpack.c.b16 %v3126, %v3125
    %v3234 = vpack.c.b16 %v3128, %v3127
    %v3235 = vpack.c.b16 %v3130, %v3129
    %v3236 = vpack.c.b16 %v3132, %v3131
    %v3237 = vpack.c.b16 %v3134, %v3133
    %v3238 = vpack.c.b16 %v3136, %v3135
    %v3239 = vpack.c.b16 %v3138, %v3137
    %v3240 = vpack.c.b16 %v3140, %v3139
    %v3241 = vpack.c.b16 %v3142, %v3141
    %v3242 = vpack.c.b16 %v3144, %v3143
    %v3243 = vpack.c.b16 %v3146, %v3145
    %v3244 = vpack.c.b16 %v3148, %v3147
    %v3245 = vpack.c.b16 %v3150, %v3149
    %v3246 = vpack.c.b16 %v3152, %v3151
    %v3247 = vpack.c.b16 %v3154, %v3153
    %v3248 = vpack.c.b16 %v3156, %v3155
    %v3249 = vpack.c.b16 %v3158, %v3157
    %v3250 = vpack.c.b16 %v3160, %v3159
    %v3251 = vpack.c.b16 %v3162, %v3161
    %v3252 = vpack.c.b16 %v3164, %v3163
    %v3253 = vpack.c.b16 %v3166, %v3165
    %v3254 = vpack.c.b16 %v3168, %v3167
    %v3255 = vpack.c.b16 %v3170, %v3169
    %v3256 = vpack.c.b16 %v3172, %v3171
    %v3257 = vpack.c.b16 %v3174, %v3173
    %v3258 = vpack.c.b16 %v3176, %v3175
    %v3259 = vpack.c.b16 %v3178, %v3177
    %v3260 = vpack.c.b16 %v3180, %v3179
    %v3261 = vpack.c.b16 %v3182, %v3181
    %v3262 = vpack.c.b16 %v3184, %v3183
    %v3263 = vpack.c.b16 %v3186, %v3185
    %v3264 = vpack.c.b16 %v3188, %v3187
    %v3265 = vpack.c.b16 %v3190, %v3189
    %v3266 = vpack.c.b16 %v3192, %v3191
    %v3267 = vpack.c.b16 %v3194, %v3193
    %v3268 = vpack.c.b16 %v3196, %v3195
    %v3269 = vpack.c.b16 %v3198, %v3197
    %v3270 = vpack.c.b16 %v3200, %v3199
    %v3271 = vpack.c.b16 %v3202, %v3201
    %v3272 = vpack.c.b16 %v3204, %v3203
    %v3273 = vpack.c.b16 %v3206, %v3205
    %v3274 = vpack.c.b16 %v3208, %v3207
    %v3275 = vpack.c.b16 %v3210, %v3209
    %v3276 = vpack.c.b16 %v3212, %v3211
    %3341 = vmatprep.subr.bf16.mxu0 0
    %3342 = vmatpush1.bf16.msra.mxu0 %v3220
    %3343 = vmatprep.subr.bf16.mxu0 0
    %3344 = vmatpush1.bf16.msra.mxu0 %v3219
    %3345 = vmatprep.subr.bf16.mxu0 0
    %3346 = vmatpush1.bf16.msra.mxu0 %v3218
    %3347 = vmatprep.subr.bf16.mxu0 0
    %3348 = vmatpush1.bf16.msra.mxu0 %v3217
    %3349 = vmatprep.subr.bf16.mxu0 0
    %3350 = vmatpush1.bf16.msra.mxu0 %v3216
    %3351 = vmatprep.subr.bf16.mxu0 0
    %3352 = vmatpush1.bf16.msra.mxu0 %v3215
    %3353 = vmatprep.subr.bf16.mxu0 0
    %3354 = vmatpush1.bf16.msra.mxu0 %v3214
    %3355 = vmatprep.subr.bf16.mxu0 0
    %3356 = vmatpush1.bf16.msra.mxu0 %v3213
    %3357 = vmatprep.subr.bf16.mxu0 0
    %3358 = vmatpush2.bf16.msra.mxu0 %v3228
    %3359 = vmatprep.subr.bf16.mxu0 0
    %3360 = vmatpush2.bf16.msra.mxu0 %v3227
    %3361 = vmatprep.subr.bf16.mxu0 0
    %3362 = vmatpush2.bf16.msra.mxu0 %v3226
    %3363 = vmatprep.subr.bf16.mxu0 0
    %3364 = vmatpush2.bf16.msra.mxu0 %v3225
    %3365 = vmatprep.subr.bf16.mxu0 0
    %3366 = vmatpush2.bf16.msra.mxu0 %v3224
    %3367 = vmatprep.subr.bf16.mxu0 0
    %3368 = vmatpush2.bf16.msra.mxu0 %v3223
    %3369 = vmatprep.subr.bf16.mxu0 0
    %3370 = vmatpush2.bf16.msra.mxu0 %v3222
    %3371 = vmatprep.subr.bf16.mxu0 0
    %3372 = vmatpush2.bf16.msra.mxu0 %v3221
    %3373 = vmatprep.mubr.bf16.mxu0 %v2950
    %3374 = vmatmul.mubr.bf16.gmra.mxu0 %v2949
    %v3375 = vpop.f32.mrf.mxu0
    %v3376 = vadd.f32 %v139, %v3375
    %v3377 = vpop.f32.mrf.mxu0
    %v3378 = vpop.f32.mrf.mxu0
    %v3379 = vpop.f32.mrf.mxu0
    %3380 = vdwg.mxu0
    %3381 = vmatprep.subr.bf16.mxu0 0
    %3382 = vmatpush1.bf16.msra.mxu0 %v3236
    %3383 = vmatprep.subr.bf16.mxu0 0
    %3384 = vmatpush1.bf16.msra.mxu0 %v3235
    %3385 = vmatprep.subr.bf16.mxu0 0
    %3386 = vmatpush1.bf16.msra.mxu0 %v3234
    %3387 = vmatprep.subr.bf16.mxu0 0
    %3388 = vmatpush1.bf16.msra.mxu0 %v3233
    %3389 = vmatprep.subr.bf16.mxu0 0
    %3390 = vmatpush1.bf16.msra.mxu0 %v3232
    %3391 = vmatprep.subr.bf16.mxu0 0
    %3392 = vmatpush1.bf16.msra.mxu0 %v3231
    %3393 = vmatprep.subr.bf16.mxu0 0
    %3394 = vmatpush1.bf16.msra.mxu0 %v3230
    %3395 = vmatprep.subr.bf16.mxu0 0
    %3396 = vmatpush1.bf16.msra.mxu0 %v3229
    %3397 = vmatprep.subr.bf16.mxu0 0
    %3398 = vmatpush2.bf16.msra.mxu0 %v3244
    %3399 = vmatprep.subr.bf16.mxu0 0
    %3400 = vmatpush2.bf16.msra.mxu0 %v3243
    %3401 = vmatprep.subr.bf16.mxu0 0
    %3402 = vmatpush2.bf16.msra.mxu0 %v3242
    %3403 = vmatprep.subr.bf16.mxu0 0
    %3404 = vmatpush2.bf16.msra.mxu0 %v3241
    %3405 = vmatprep.subr.bf16.mxu0 0
    %3406 = vmatpush2.bf16.msra.mxu0 %v3240
    %3407 = vmatprep.subr.bf16.mxu0 0
    %3408 = vmatpush2.bf16.msra.mxu0 %v3239
    %3409 = vmatprep.subr.bf16.mxu0 0
    %3410 = vmatpush2.bf16.msra.mxu0 %v3238
    %3411 = vmatprep.subr.bf16.mxu0 0
    %3412 = vmatpush2.bf16.msra.mxu0 %v3237
    %3413 = vmatprep.mubr.bf16.mxu0 %v2952
    %3414 = vmatmul.mubr.bf16.gmra.mxu0 %v2951
    %v3415 = vpop.f32.mrf.mxu0
    %v3416 = vadd.f32 %v3376, %v3415
    %v3417 = vpop.f32.mrf.mxu0
    %v3418 = vpop.f32.mrf.mxu0
    %v3419 = vpop.f32.mrf.mxu0
    %3420 = vdwg.mxu0
    %3421 = vmatprep.subr.bf16.mxu0 0
    %3422 = vmatpush1.bf16.msra.mxu0 %v3252
    %3423 = vmatprep.subr.bf16.mxu0 0
    %3424 = vmatpush1.bf16.msra.mxu0 %v3251
    %3425 = vmatprep.subr.bf16.mxu0 0
    %3426 = vmatpush1.bf16.msra.mxu0 %v3250
    %3427 = vmatprep.subr.bf16.mxu0 0
    %3428 = vmatpush1.bf16.msra.mxu0 %v3249
    %3429 = vmatprep.subr.bf16.mxu0 0
    %3430 = vmatpush1.bf16.msra.mxu0 %v3248
    %3431 = vmatprep.subr.bf16.mxu0 0
    %3432 = vmatpush1.bf16.msra.mxu0 %v3247
    %3433 = vmatprep.subr.bf16.mxu0 0
    %3434 = vmatpush1.bf16.msra.mxu0 %v3246
    %3435 = vmatprep.subr.bf16.mxu0 0
    %3436 = vmatpush1.bf16.msra.mxu0 %v3245
    %3437 = vmatprep.subr.bf16.mxu0 0
    %3438 = vmatpush2.bf16.msra.mxu0 %v3260
    %3439 = vmatprep.subr.bf16.mxu0 0
    %3440 = vmatpush2.bf16.msra.mxu0 %v3259
    %3441 = vmatprep.subr.bf16.mxu0 0
    %3442 = vmatpush2.bf16.msra.mxu0 %v3258
    %3443 = vmatprep.subr.bf16.mxu0 0
    %3444 = vmatpush2.bf16.msra.mxu0 %v3257
    %3445 = vmatprep.subr.bf16.mxu0 0
    %3446 = vmatpush2.bf16.msra.mxu0 %v3256
    %3447 = vmatprep.subr.bf16.mxu0 0
    %3448 = vmatpush2.bf16.msra.mxu0 %v3255
    %3449 = vmatprep.subr.bf16.mxu0 0
    %3450 = vmatpush2.bf16.msra.mxu0 %v3254
    %3451 = vmatprep.subr.bf16.mxu0 0
    %3452 = vmatpush2.bf16.msra.mxu0 %v3253
    %3453 = vmatprep.mubr.bf16.mxu0 %v2954
    %3454 = vmatmul.mubr.bf16.gmra.mxu0 %v2953
    %v3455 = vpop.f32.mrf.mxu0
    %v3456 = vadd.f32 %v3416, %v3455
    %v3457 = vpop.f32.mrf.mxu0
    %v3458 = vpop.f32.mrf.mxu0
    %v3459 = vpop.f32.mrf.mxu0
    %3460 = vdwg.mxu0
    %3461 = vmatprep.subr.bf16.mxu0 0
    %3462 = vmatpush1.bf16.msra.mxu0 %v3268
    %3463 = vmatprep.subr.bf16.mxu0 0
    %3464 = vmatpush1.bf16.msra.mxu0 %v3267
    %3465 = vmatprep.subr.bf16.mxu0 0
    %3466 = vmatpush1.bf16.msra.mxu0 %v3266
    %3467 = vmatprep.subr.bf16.mxu0 0
    %3468 = vmatpush1.bf16.msra.mxu0 %v3265
    %3469 = vmatprep.subr.bf16.mxu0 0
    %3470 = vmatpush1.bf16.msra.mxu0 %v3264
    %3471 = vmatprep.subr.bf16.mxu0 0
    %3472 = vmatpush1.bf16.msra.mxu0 %v3263
    %3473 = vmatprep.subr.bf16.mxu0 0
    %3474 = vmatpush1.bf16.msra.mxu0 %v3262
    %3475 = vmatprep.subr.bf16.mxu0 0
    %3476 = vmatpush1.bf16.msra.mxu0 %v3261
    %3477 = vmatprep.subr.bf16.mxu0 0
    %3478 = vmatpush2.bf16.msra.mxu0 %v3276
    %3479 = vmatprep.subr.bf16.mxu0 0
    %3480 = vmatpush2.bf16.msra.mxu0 %v3275
    %3481 = vmatprep.subr.bf16.mxu0 0
    %3482 = vmatpush2.bf16.msra.mxu0 %v3274
    %3483 = vmatprep.subr.bf16.mxu0 0
    %3484 = vmatpush2.bf16.msra.mxu0 %v3273
    %3485 = vmatprep.subr.bf16.mxu0 0
    %3486 = vmatpush2.bf16.msra.mxu0 %v3272
    %3487 = vmatprep.subr.bf16.mxu0 0
    %3488 = vmatpush2.bf16.msra.mxu0 %v3271
    %3489 = vmatprep.subr.bf16.mxu0 0
    %3490 = vmatpush2.bf16.msra.mxu0 %v3270
    %3491 = vmatprep.subr.bf16.mxu0 0
    %3492 = vmatpush2.bf16.msra.mxu0 %v3269
    %3493 = vmatprep.mubr.bf16.mxu0 %v2956
    %3494 = vmatmul.mubr.bf16.gmra.mxu0 %v2955
    %v3495 = vpop.f32.mrf.mxu0
    %v3496 = vadd.f32 %v3456, %v3495
    %v3497 = vpop.f32.mrf.mxu0
    %v3498 = vpop.f32.mrf.mxu0
    %v3499 = vpop.f32.mrf.mxu0
    %3500 = vdwg.mxu0
    %3501 = vst [vmem:[%s9] sm:$0xff] %v1829
    %3502 = vst [vmem:[%s9 + $0x8] sm:$0xff] %v1831
    %3503 = vst [vmem:[%s9 + $0x10] sm:$0xff] %v1839
    %3504 = vst [vmem:[#allocation14] sm:$0xff] %v3496
    // Predicated region
    $region54: #{vae_forward.1} parent=1 // pred_check
      _
    $region55: #{vae_forward.1} parent=1 // pred_check_branch
      %3506 = sbr.rel (0) target = $region57
    $region56: #{vae_forward.1} parent=1 // pred_region
      _
    $region57: #{vae_forward.1} parent=1 // pred_fallthru
      _
    // Predicated region
    $region58: #{vae_forward.1} parent=1 // pred_check
      _
    $region59: #{vae_forward.1} parent=1 // pred_check_branch
      %3508 = sbr.rel (0) target = $region61
    $region60: #{vae_forward.1} parent=1 // pred_region
      %s3510 = ssub.s32 128, 128
      %3511 = vsyncadd [#allocation8], %s3510
      %s3513 = sshll.u32 [#allocation14], 4
      %s3514 = int_to_ptr.vmem [resolvable:$true] %s3513
      %3516 = dma.vmem_to_hbm [thread:$0]  %s3514, 128, %s10, [#allocation8]
    $region61: #{vae_forward.1} parent=1 // pred_fallthru
      _
    // Predicated region
    $region62: #{vae_forward.1} parent=1 // pred_check
      _
    $region63: #{vae_forward.1} parent=1 // pred_check_branch
      %3518 = sbr.rel (0) target = $region65
    $region64: #{vae_forward.1} parent=1 // pred_region
      _
    $region65: #{vae_forward.1} parent=1 // pred_fallthru
      _
    // Predicated region
    $region66: #{vae_forward.1} parent=1 // pred_check
      _
    $region67: #{vae_forward.1} parent=1 // pred_check_branch
      %3520 = sbr.rel (0) target = $region69
    $region68: #{vae_forward.1} parent=1 // pred_region
      %3521 = dma.done [#allocation8], 128
    $region69: #{vae_forward.1} parent=1 // pred_fallthru
      _
    %3522 = vsyncpa [#allocation7], 1
    %3523 = vsyncpa [#allocation10], 1
    %3524 = vsyncpa [#allocation13], 1
    %3525 = vsyncpa [#allocation8], 1
  %3526 = vsyncmov [#allocation5]
  %s3527 = vpop.sfrf %3526
  %p3528 = scmp.eq.s32.totalorder %s3527, 0
  %p3529 = pneg %p3528
  %3531 = shalt.err (%p3529)
  %s3532 = scalar_lea.sflag [#allocation5], 1
  %3533 = vsyncmov %s3532
  %s3534 = vpop.sfrf %3533
  %p3535 = scmp.eq.s32.totalorder %s3534, 0
  %p3536 = pneg %p3535
  %3538 = shalt.err (%p3536)
  %s3539 = scalar_lea.sflag [#allocation5], 2
  %3540 = vsyncmov %s3539
  %s3541 = vpop.sfrf %3540
  %p3542 = scmp.eq.s32.totalorder %s3541, 0
  %p3543 = pneg %p3542
  %3545 = shalt.err (%p3543)

</llo_original>
